<compile_context>
chip_gen: v5e
topology: v5e:2x2
jax: 0.10.0
libtpu: 0.0.40
codegen_flags: <defaults>
</compile_context>

<pallas_src>
import jax
import jax.numpy as jnp
from jax import lax
from jax.experimental import pallas as pl
from jax.experimental.pallas import tpu as pltpu

LAYER_CFG = [  # (C_in, C_out, kernel_size, pool_window)  -- static architecture constants
    (4, 64, 11, 2),
    (64, 128, 4, 4),
    (128, 256, 4, 5),
    (256, 512, 3, 7),
]
KERNEL_SIZES = tuple(k for (_, _, k, _) in LAYER_CFG)
BN_EPS = 1e-5


# ----------------------------------------------------------------------------
# Fused kernel: conv1..conv4 (+BN+ReLU+AvgPool) + FC head, one batch element per grid step
# ----------------------------------------------------------------------------
def _cnet_fused_kernel(
    xcol_ref,
    w1_ref, s1_ref, t1_ref, p1_ref,
    w2_ref, s2_ref, t2_ref, p2_ref,
    w3_ref, s3_ref, t3_ref, p3_ref,
    w4_ref, s4_ref, t4_ref, p4_ref,
    fw1_ref, fs1_ref, ft1_ref, fw2_ref, fb2_ref,
    o_ref,
):
    """Activations are kept in lane-dense (L, C) layout and never leave VMEM."""

    def conv_bn_relu_pool(h, w_ref, s_ref, t_ref, p_ref, ksize):
        # h: (L_prev, C_prev).  Flatten the K taps into the contraction dim (im2col).
        l_conv = h.shape[0] - ksize + 1
        if ksize > 1:
            h = jnp.concatenate([h[k:k + l_conv, :] for k in range(ksize)], axis=1)
        y = jnp.dot(h, w_ref[...], preferred_element_type=jnp.float32)      # (l_conv, C_out)
        y = jnp.maximum(y * s_ref[...] + t_ref[...], 0.0)                   # folded BN + ReLU
        return jnp.dot(p_ref[...], y, preferred_element_type=jnp.float32)   # (l_pool, C_out)

    # Layer 1: im2col was already built in the wrapper -> treat as kernel_size 1.
    h = conv_bn_relu_pool(xcol_ref[0], w1_ref, s1_ref, t1_ref, p1_ref, 1)         # (195, 64)
    h = conv_bn_relu_pool(h, w2_ref, s2_ref, t2_ref, p2_ref, KERNEL_SIZES[1])     # (48, 128)
    h = conv_bn_relu_pool(h, w3_ref, s3_ref, t3_ref, p3_ref, KERNEL_SIZES[2])     # (9, 256)
    h = conv_bn_relu_pool(h, w4_ref, s4_ref, t4_ref, p4_ref, KERNEL_SIZES[3])     # (1, 512)

    # FC head: relu(BN(fc1(h))) -> fc2   (Dropout = identity at inference).
    f = jnp.dot(h, fw1_ref[...], preferred_element_type=jnp.float32)              # (1, 256)
    f = jnp.maximum(f * fs1_ref[...] + ft1_ref[...], 0.0)
    out = jnp.dot(f, fw2_ref[...], preferred_element_type=jnp.float32) + fb2_ref[...]
    o_ref[0] = out.astype(o_ref.dtype)                                            # (1, out_dim)


def _const_spec(arr):
    ndim = arr.ndim
    return pl.BlockSpec(arr.shape, lambda b, _n=ndim: (0,) * _n)


def cnet_fused_pallas(xcol, const_arrays, out_dim):
    """xcol: (B, L1_conv, K1*C_in) layer-1 im2col; const_arrays: ordered weight list."""
    B = xcol.shape[0]
    in_specs = [pl.BlockSpec((1,) + xcol.shape[1:], lambda b: (b, 0, 0))]
    in_specs += [_const_spec(a) for a in const_arrays]
    return pl.pallas_call(
        _cnet_fused_kernel,
        out_shape=jax.ShapeDtypeStruct((B, 1, out_dim), jnp.float32),
        grid=(B,),
        in_specs=in_specs,
        out_specs=pl.BlockSpec((1, 1, out_dim), lambda b: (b, 0, 0)),
        compiler_params=pltpu.CompilerParams(dimension_semantics=("parallel",)),
    )(xcol, *const_arrays)


# ----------------------------------------------------------------------------
# Static preprocessing (done once, OUTSIDE the jitted per-call path)
# ----------------------------------------------------------------------------
def fold_bn(gamma, beta, mean, var, bias):
    s = gamma / jnp.sqrt(var + BN_EPS)
    t = s * (bias - mean) + beta
    return s, t


def make_pool_matrix(l_conv, window):
    """(l_pool, l_conv) left-multiplied average-pool matrix (truncating, like AvgPool1d)."""
    l_pool = l_conv // window
    p = jnp.kron(jnp.eye(l_pool, dtype=jnp.float32),
                 jnp.ones((1, window), jnp.float32)) / float(window)
    if l_pool * window < l_conv:
        p = jnp.pad(p, ((0, 0), (0, l_conv - l_pool * window)))
    return p


def make_params(key, output_dim=1):
    """Deterministic synthetic parameters in PyTorch layout (arrays only)."""
    params = {"conv": []}
    for (c_in, c_out, k, _) in LAYER_CFG:
        key, k1, k2, k3, k4, k5, k6 = jax.random.split(key, 7)
        params["conv"].append(dict(
            weight=0.05 * jax.random.normal(k1, (c_out, c_in, k), jnp.float32),
            bias=0.05 * jax.random.normal(k2, (c_out,), jnp.float32),
            gamma=1.0 + 0.1 * jax.random.normal(k3, (c_out,), jnp.float32),
            beta=0.05 * jax.random.normal(k4, (c_out,), jnp.float32),
            mean=0.05 * jax.random.normal(k5, (c_out,), jnp.float32),
            var=jax.random.uniform(k6, (c_out,), jnp.float32, 0.5, 1.5),
        ))
    key, k1, k2, k3, k4, k5, k6, k7, k8 = jax.random.split(key, 9)
    params["fc1_w"] = 0.05 * jax.random.normal(k1, (256, 512), jnp.float32)
    params["fc1_b"] = 0.05 * jax.random.normal(k2, (256,), jnp.float32)
    params["bnf1_gamma"] = 1.0 + 0.1 * jax.random.normal(k3, (256,), jnp.float32)
    params["bnf1_beta"] = 0.05 * jax.random.normal(k4, (256,), jnp.float32)
    params["bnf1_mean"] = 0.05 * jax.random.normal(k5, (256,), jnp.float32)
    params["bnf1_var"] = jax.random.uniform(k6, (256,), jnp.float32, 0.5, 1.5)
    params["fc2_w"] = 0.05 * jax.random.normal(k7, (output_dim, 256), jnp.float32)
    params["fc2_b"] = 0.05 * jax.random.normal(k8, (output_dim,), jnp.float32)
    return params


def prepare_inference(params, l_in):
    """Fold BN, reshape conv weights to (K*C_in, C_out), build pool matrices.

    Returns the ordered flat list of constant arrays consumed by the fused kernel."""
    const = []
    l = l_in
    for (c_in, c_out, k, w), layer in zip(LAYER_CFG, params["conv"]):
        w2 = jnp.transpose(layer["weight"], (2, 1, 0)).reshape(k * c_in, c_out)
        s, t = fold_bn(layer["gamma"], layer["beta"], layer["mean"],
                       layer["var"], layer["bias"])
        l_conv = l - k + 1
        assert l_conv >= w, "input length too short for this architecture"
        const += [w2, s.reshape(1, c_out), t.reshape(1, c_out),
                  make_pool_matrix(l_conv, w)]
        l = l_conv // w
    assert l == 1, ("CNet_v5_2's x.view(-1, 512) assumes the last pool emits length 1; "
                    f"got length {l} -- use input length 400.")
    s1, t1 = fold_bn(params["bnf1_gamma"], params["bnf1_beta"],
                     params["bnf1_mean"], params["bnf1_var"], params["fc1_b"])
    const += [params["fc1_w"].T, s1.reshape(1, -1), t1.reshape(1, -1),
              params["fc2_w"].T, params["fc2_b"].reshape(1, -1)]
    return const


# ----------------------------------------------------------------------------
# Forward pass
# ----------------------------------------------------------------------------
@jax.jit
def cnet_v5_2_forward(x, const):
    """x: (B, 4, L) NCW (same as the PyTorch module) -> (B, output_dim)."""
    B = x.shape[0]
    k1 = KERNEL_SIZES[0]
    l_conv1 = x.shape[2] - k1 + 1
    xT = jnp.transpose(x, (0, 2, 1))                                  # (B, L, C_in)
    # Layer-1 im2col built in the (tiny) XLA wrapper: (B, L1_conv, K1*C_in) = (B, 390, 44).
    xcol = jnp.concatenate([xT[:, k:k + l_conv1, :] for k in range(k1)], axis=2)
    out_dim = const[-1].shape[-1]
    out = cnet_fused_pallas(xcol, const, out_dim)                     # (B, 1, out_dim)
    return out.reshape(B, out_dim)   # softmax is defined in the module but never applied


# ----------------------------------------------------------------------------
# Pure-JAX reference (independent math path) for verification
# ----------------------------------------------------------------------------
def reference_forward(x, params):
    for (c_in, c_out, k, w), layer in zip(LAYER_CFG, params["conv"]):
        y = lax.conv_general_dilated(
            x, layer["weight"], window_strides=(1,), padding="VALID",
            dimension_numbers=("NCH", "OIH", "NCH"))
        y = y + layer["bias"][None, :, None]
        s = layer["gamma"] / jnp.sqrt(layer["var"] + BN_EPS)
        y = s[None, :, None] * (y - layer["mean"][None, :, None]) + layer["beta"][None, :, None]
        y = jnp.maximum(y, 0.0)
        B, C, L = y.shape
        x = y[:, :, : (L // w) * w].reshape(B, C, L // w, w).mean(-1)
    x = x.reshape(-1, 512)
    h = x @ params["fc1_w"].T + params["fc1_b"]
    s1 = params["bnf1_gamma"] / jnp.sqrt(params["bnf1_var"] + BN_EPS)
    h = s1 * (h - params["bnf1_mean"]) + params["bnf1_beta"]
    h = jnp.maximum(h, 0.0)
    return h @ params["fc2_w"].T + params["fc2_b"]


# ----------------------------------------------------------------------------
if __name__ == "__main__":
    key = jax.random.PRNGKey(0)
    key, pkey, xkey = jax.random.split(key, 3)

    B, C_IN, L_IN = 2, 4, 400   # L=400 is the smallest length surviving the 4 conv/pool stages
    OUT_DIM = 1

    params = make_params(pkey, output_dim=OUT_DIM)
    const = prepare_inference(params, L_IN)     # static prep, once, outside the hot path
    x = jax.random.normal(xkey, (B, C_IN, L_IN), jnp.float32)

    out = cnet_v5_2_forward(x, const)
    out = jax.block_until_ready(out)

    ref = reference_forward(x, params)
    assert out.shape == (B, OUT_DIM), out.shape
    assert jnp.allclose(out, ref, rtol=1e-3, atol=1e-3), (out, ref)

    # TODO(synk): Dropout layers are identity (inference) and BatchNorm uses synthetic
    # running statistics (eval mode), not train-mode batch statistics.
    print("KERNEL_OK")
</pallas_src>

<mosaic_0001>
module attributes {stable_mosaic.version = 11 : i64} {
  func.func @_cnet_fused_kernel(%arg0: i32, %arg1: memref<1x390x44xf32, #tpu.memory_space<vmem>>, %arg2: memref<44x64xf32, #tpu.memory_space<vmem>>, %arg3: memref<1x64xf32, #tpu.memory_space<vmem>>, %arg4: memref<1x64xf32, #tpu.memory_space<vmem>>, %arg5: memref<195x390xf32, #tpu.memory_space<vmem>>, %arg6: memref<256x128xf32, #tpu.memory_space<vmem>>, %arg7: memref<1x128xf32, #tpu.memory_space<vmem>>, %arg8: memref<1x128xf32, #tpu.memory_space<vmem>>, %arg9: memref<48x192xf32, #tpu.memory_space<vmem>>, %arg10: memref<512x256xf32, #tpu.memory_space<vmem>>, %arg11: memref<1x256xf32, #tpu.memory_space<vmem>>, %arg12: memref<1x256xf32, #tpu.memory_space<vmem>>, %arg13: memref<9x45xf32, #tpu.memory_space<vmem>>, %arg14: memref<768x512xf32, #tpu.memory_space<vmem>>, %arg15: memref<1x512xf32, #tpu.memory_space<vmem>>, %arg16: memref<1x512xf32, #tpu.memory_space<vmem>>, %arg17: memref<1x7xf32, #tpu.memory_space<vmem>>, %arg18: memref<512x256xf32, #tpu.memory_space<vmem>>, %arg19: memref<1x256xf32, #tpu.memory_space<vmem>>, %arg20: memref<1x256xf32, #tpu.memory_space<vmem>>, %arg21: memref<256x1xf32, #tpu.memory_space<vmem>>, %arg22: memref<1x1xf32, #tpu.memory_space<vmem>>, %arg23: memref<1x1x1xf32, #tpu.memory_space<vmem>>) attributes {dimension_semantics = [#tpu.dimension_semantics<parallel>], iteration_bounds = array<i64: 2>, scalar_prefetch = 0 : i64, scratch_operands = 0 : i64, tpu.core_type = #tpu.core_type<tc>, window_params = [{transform_indices = @transform_0, window_bounds = array<i64: 1, 390, 44>}, {pipeline_mode = #tpu.pipeline_mode<synchronous>, transform_indices = @transform_1, window_bounds = array<i64: 44, 64>}, {pipeline_mode = #tpu.pipeline_mode<synchronous>, transform_indices = @transform_2, window_bounds = array<i64: 1, 64>}, {pipeline_mode = #tpu.pipeline_mode<synchronous>, transform_indices = @transform_3, window_bounds = array<i64: 1, 64>}, {pipeline_mode = #tpu.pipeline_mode<synchronous>, transform_indices = @transform_4, window_bounds = array<i64: 195, 390>}, {pipeline_mode = #tpu.pipeline_mode<synchronous>, transform_indices = @transform_5, window_bounds = array<i64: 256, 128>}, {pipeline_mode = #tpu.pipeline_mode<synchronous>, transform_indices = @transform_6, window_bounds = array<i64: 1, 128>}, {pipeline_mode = #tpu.pipeline_mode<synchronous>, transform_indices = @transform_7, window_bounds = array<i64: 1, 128>}, {pipeline_mode = #tpu.pipeline_mode<synchronous>, transform_indices = @transform_8, window_bounds = array<i64: 48, 192>}, {pipeline_mode = #tpu.pipeline_mode<synchronous>, transform_indices = @transform_9, window_bounds = array<i64: 512, 256>}, {pipeline_mode = #tpu.pipeline_mode<synchronous>, transform_indices = @transform_10, window_bounds = array<i64: 1, 256>}, {pipeline_mode = #tpu.pipeline_mode<synchronous>, transform_indices = @transform_11, window_bounds = array<i64: 1, 256>}, {pipeline_mode = #tpu.pipeline_mode<synchronous>, transform_indices = @transform_12, window_bounds = array<i64: 9, 45>}, {pipeline_mode = #tpu.pipeline_mode<synchronous>, transform_indices = @transform_13, window_bounds = array<i64: 768, 512>}, {pipeline_mode = #tpu.pipeline_mode<synchronous>, transform_indices = @transform_14, window_bounds = array<i64: 1, 512>}, {pipeline_mode = #tpu.pipeline_mode<synchronous>, transform_indices = @transform_15, window_bounds = array<i64: 1, 512>}, {pipeline_mode = #tpu.pipeline_mode<synchronous>, transform_indices = @transform_16, window_bounds = array<i64: 1, 7>}, {pipeline_mode = #tpu.pipeline_mode<synchronous>, transform_indices = @transform_17, window_bounds = array<i64: 512, 256>}, {pipeline_mode = #tpu.pipeline_mode<synchronous>, transform_indices = @transform_18, window_bounds = array<i64: 1, 256>}, {pipeline_mode = #tpu.pipeline_mode<synchronous>, transform_indices = @transform_19, window_bounds = array<i64: 1, 256>}, {pipeline_mode = #tpu.pipeline_mode<synchronous>, transform_indices = @transform_20, window_bounds = array<i64: 256, 1>}, {pipeline_mode = #tpu.pipeline_mode<synchronous>, transform_indices = @transform_21, window_bounds = array<i64: 1, 1>}, {transform_indices = @transform_22, window_bounds = array<i64: 1, 1, 1>}]} {
    %c0 = arith.constant 0 : index
    %c0_0 = arith.constant 0 : index
    %c0_1 = arith.constant 0 : index
    %0 = vector.load %arg1[%c0, %c0_0, %c0_1] : memref<1x390x44xf32, #tpu.memory_space<vmem>>, vector<1x390x44xf32>
    %1 = vector.shape_cast %0 : vector<1x390x44xf32> to vector<390x44xf32>
    %c0_2 = arith.constant 0 : index
    %c0_3 = arith.constant 0 : index
    %2 = vector.load %arg2[%c0_2, %c0_3] : memref<44x64xf32, #tpu.memory_space<vmem>>, vector<44x64xf32>
    %cst = arith.constant dense<0.000000e+00> : vector<390x64xf32>
    %3 = tpu.matmul %1, %2, %cst {dimension_numbers = #tpu.dot_dimension_numbers<[1], [0], [0], [1], [0, 0, 1, 1], [], []>} : vector<390x44xf32>, vector<44x64xf32>, vector<390x64xf32> -> vector<390x64xf32>
    %c0_4 = arith.constant 0 : index
    %c0_5 = arith.constant 0 : index
    %4 = vector.load %arg3[%c0_4, %c0_5] : memref<1x64xf32, #tpu.memory_space<vmem>>, vector<1x64xf32>
    %5 = vector.broadcast %4 : vector<1x64xf32> to vector<390x64xf32>
    %6 = arith.mulf %3, %5 : vector<390x64xf32>
    %c0_6 = arith.constant 0 : index
    %c0_7 = arith.constant 0 : index
    %7 = vector.load %arg4[%c0_6, %c0_7] : memref<1x64xf32, #tpu.memory_space<vmem>>, vector<1x64xf32>
    %8 = vector.broadcast %7 : vector<1x64xf32> to vector<390x64xf32>
    %9 = arith.addf %6, %8 : vector<390x64xf32>
    %cst_8 = arith.constant 0.000000e+00 : f32
    %10 = vector.broadcast %cst_8 : f32 to vector<390x64xf32>
    %11 = arith.maximumf %9, %10 : vector<390x64xf32>
    %c0_9 = arith.constant 0 : index
    %c0_10 = arith.constant 0 : index
    %12 = vector.load %arg5[%c0_9, %c0_10] : memref<195x390xf32, #tpu.memory_space<vmem>>, vector<195x390xf32>
    %cst_11 = arith.constant dense<0.000000e+00> : vector<195x64xf32>
    %13 = tpu.matmul %12, %11, %cst_11 {dimension_numbers = #tpu.dot_dimension_numbers<[1], [0], [0], [1], [0, 0, 1, 1], [], []>} : vector<195x390xf32>, vector<390x64xf32>, vector<195x64xf32> -> vector<195x64xf32>
    %14 = vector.extract_strided_slice %13 {offsets = [0, 0], sizes = [192, 64], strides = [1, 1]} : vector<195x64xf32> to vector<192x64xf32>
    %15 = vector.extract_strided_slice %13 {offsets = [1, 0], sizes = [192, 64], strides = [1, 1]} : vector<195x64xf32> to vector<192x64xf32>
    %16 = vector.extract_strided_slice %13 {offsets = [2, 0], sizes = [192, 64], strides = [1, 1]} : vector<195x64xf32> to vector<192x64xf32>
    %17 = vector.extract_strided_slice %13 {offsets = [3, 0], sizes = [192, 64], strides = [1, 1]} : vector<195x64xf32> to vector<192x64xf32>
    %18 = tpu.concatenate %14, %15, %16, %17 in 1 : vector<192x64xf32>, vector<192x64xf32>, vector<192x64xf32>, vector<192x64xf32> -> vector<192x256xf32>
    %c0_12 = arith.constant 0 : index
    %c0_13 = arith.constant 0 : index
    %19 = vector.load %arg6[%c0_12, %c0_13] : memref<256x128xf32, #tpu.memory_space<vmem>>, vector<256x128xf32>
    %cst_14 = arith.constant dense<0.000000e+00> : vector<192x128xf32>
    %20 = tpu.matmul %18, %19, %cst_14 {dimension_numbers = #tpu.dot_dimension_numbers<[1], [0], [0], [1], [0, 0, 1, 1], [], []>} : vector<192x256xf32>, vector<256x128xf32>, vector<192x128xf32> -> vector<192x128xf32>
    %c0_15 = arith.constant 0 : index
    %c0_16 = arith.constant 0 : index
    %21 = vector.load %arg7[%c0_15, %c0_16] : memref<1x128xf32, #tpu.memory_space<vmem>>, vector<1x128xf32>
    %22 = vector.broadcast %21 : vector<1x128xf32> to vector<192x128xf32>
    %23 = arith.mulf %20, %22 : vector<192x128xf32>
    %c0_17 = arith.constant 0 : index
    %c0_18 = arith.constant 0 : index
    %24 = vector.load %arg8[%c0_17, %c0_18] : memref<1x128xf32, #tpu.memory_space<vmem>>, vector<1x128xf32>
    %25 = vector.broadcast %24 : vector<1x128xf32> to vector<192x128xf32>
    %26 = arith.addf %23, %25 : vector<192x128xf32>
    %cst_19 = arith.constant 0.000000e+00 : f32
    %27 = vector.broadcast %cst_19 : f32 to vector<192x128xf32>
    %28 = arith.maximumf %26, %27 : vector<192x128xf32>
    %c0_20 = arith.constant 0 : index
    %c0_21 = arith.constant 0 : index
    %29 = vector.load %arg9[%c0_20, %c0_21] : memref<48x192xf32, #tpu.memory_space<vmem>>, vector<48x192xf32>
    %cst_22 = arith.constant dense<0.000000e+00> : vector<48x128xf32>
    %30 = tpu.matmul %29, %28, %cst_22 {dimension_numbers = #tpu.dot_dimension_numbers<[1], [0], [0], [1], [0, 0, 1, 1], [], []>} : vector<48x192xf32>, vector<192x128xf32>, vector<48x128xf32> -> vector<48x128xf32>
    %31 = vector.extract_strided_slice %30 {offsets = [0, 0], sizes = [45, 128], strides = [1, 1]} : vector<48x128xf32> to vector<45x128xf32>
    %32 = vector.extract_strided_slice %30 {offsets = [1, 0], sizes = [45, 128], strides = [1, 1]} : vector<48x128xf32> to vector<45x128xf32>
    %33 = vector.extract_strided_slice %30 {offsets = [2, 0], sizes = [45, 128], strides = [1, 1]} : vector<48x128xf32> to vector<45x128xf32>
    %34 = vector.extract_strided_slice %30 {offsets = [3, 0], sizes = [45, 128], strides = [1, 1]} : vector<48x128xf32> to vector<45x128xf32>
    %35 = tpu.concatenate %31, %32, %33, %34 in 1 : vector<45x128xf32>, vector<45x128xf32>, vector<45x128xf32>, vector<45x128xf32> -> vector<45x512xf32>
    %c0_23 = arith.constant 0 : index
    %c0_24 = arith.constant 0 : index
    %36 = vector.load %arg10[%c0_23, %c0_24] : memref<512x256xf32, #tpu.memory_space<vmem>>, vector<512x256xf32>
    %cst_25 = arith.constant dense<0.000000e+00> : vector<45x256xf32>
    %37 = tpu.matmul %35, %36, %cst_25 {dimension_numbers = #tpu.dot_dimension_numbers<[1], [0], [0], [1], [0, 0, 1, 1], [], []>} : vector<45x512xf32>, vector<512x256xf32>, vector<45x256xf32> -> vector<45x256xf32>
    %c0_26 = arith.constant 0 : index
    %c0_27 = arith.constant 0 : index
    %38 = vector.load %arg11[%c0_26, %c0_27] : memref<1x256xf32, #tpu.memory_space<vmem>>, vector<1x256xf32>
    %39 = vector.broadcast %38 : vector<1x256xf32> to vector<45x256xf32>
    %40 = arith.mulf %37, %39 : vector<45x256xf32>
    %c0_28 = arith.constant 0 : index
    %c0_29 = arith.constant 0 : index
    %41 = vector.load %arg12[%c0_28, %c0_29] : memref<1x256xf32, #tpu.memory_space<vmem>>, vector<1x256xf32>
    %42 = vector.broadcast %41 : vector<1x256xf32> to vector<45x256xf32>
    %43 = arith.addf %40, %42 : vector<45x256xf32>
    %cst_30 = arith.constant 0.000000e+00 : f32
    %44 = vector.broadcast %cst_30 : f32 to vector<45x256xf32>
    %45 = arith.maximumf %43, %44 : vector<45x256xf32>
    %c0_31 = arith.constant 0 : index
    %c0_32 = arith.constant 0 : index
    %46 = vector.load %arg13[%c0_31, %c0_32] : memref<9x45xf32, #tpu.memory_space<vmem>>, vector<9x45xf32>
    %cst_33 = arith.constant dense<0.000000e+00> : vector<9x256xf32>
    %47 = tpu.matmul %46, %45, %cst_33 {dimension_numbers = #tpu.dot_dimension_numbers<[1], [0], [0], [1], [0, 0, 1, 1], [], []>} : vector<9x45xf32>, vector<45x256xf32>, vector<9x256xf32> -> vector<9x256xf32>
    %48 = vector.extract_strided_slice %47 {offsets = [0, 0], sizes = [7, 256], strides = [1, 1]} : vector<9x256xf32> to vector<7x256xf32>
    %49 = vector.extract_strided_slice %47 {offsets = [1, 0], sizes = [7, 256], strides = [1, 1]} : vector<9x256xf32> to vector<7x256xf32>
    %50 = vector.extract_strided_slice %47 {offsets = [2, 0], sizes = [7, 256], strides = [1, 1]} : vector<9x256xf32> to vector<7x256xf32>
    %51 = tpu.concatenate %48, %49, %50 in 1 : vector<7x256xf32>, vector<7x256xf32>, vector<7x256xf32> -> vector<7x768xf32>
    %c0_34 = arith.constant 0 : index
    %c0_35 = arith.constant 0 : index
    %52 = vector.load %arg14[%c0_34, %c0_35] : memref<768x512xf32, #tpu.memory_space<vmem>>, vector<768x512xf32>
    %cst_36 = arith.constant dense<0.000000e+00> : vector<7x512xf32>
    %53 = tpu.matmul %51, %52, %cst_36 {dimension_numbers = #tpu.dot_dimension_numbers<[1], [0], [0], [1], [0, 0, 1, 1], [], []>} : vector<7x768xf32>, vector<768x512xf32>, vector<7x512xf32> -> vector<7x512xf32>
    %c0_37 = arith.constant 0 : index
    %c0_38 = arith.constant 0 : index
    %54 = vector.load %arg15[%c0_37, %c0_38] : memref<1x512xf32, #tpu.memory_space<vmem>>, vector<1x512xf32>
    %55 = vector.broadcast %54 : vector<1x512xf32> to vector<7x512xf32>
    %56 = arith.mulf %53, %55 : vector<7x512xf32>
    %c0_39 = arith.constant 0 : index
    %c0_40 = arith.constant 0 : index
    %57 = vector.load %arg16[%c0_39, %c0_40] : memref<1x512xf32, #tpu.memory_space<vmem>>, vector<1x512xf32>
    %58 = vector.broadcast %57 : vector<1x512xf32> to vector<7x512xf32>
    %59 = arith.addf %56, %58 : vector<7x512xf32>
    %cst_41 = arith.constant 0.000000e+00 : f32
    %60 = vector.broadcast %cst_41 : f32 to vector<7x512xf32>
    %61 = arith.maximumf %59, %60 : vector<7x512xf32>
    %c0_42 = arith.constant 0 : index
    %c0_43 = arith.constant 0 : index
    %62 = vector.load %arg17[%c0_42, %c0_43] : memref<1x7xf32, #tpu.memory_space<vmem>>, vector<1x7xf32>
    %cst_44 = arith.constant dense<0.000000e+00> : vector<1x512xf32>
    %63 = tpu.matmul %62, %61, %cst_44 {dimension_numbers = #tpu.dot_dimension_numbers<[1], [0], [0], [1], [0, 0, 1, 1], [], []>} : vector<1x7xf32>, vector<7x512xf32>, vector<1x512xf32> -> vector<1x512xf32>
    %c0_45 = arith.constant 0 : index
    %c0_46 = arith.constant 0 : index
    %64 = vector.load %arg18[%c0_45, %c0_46] : memref<512x256xf32, #tpu.memory_space<vmem>>, vector<512x256xf32>
    %cst_47 = arith.constant dense<0.000000e+00> : vector<1x256xf32>
    %65 = tpu.matmul %63, %64, %cst_47 {dimension_numbers = #tpu.dot_dimension_numbers<[1], [0], [0], [1], [0, 0, 1, 1], [], []>} : vector<1x512xf32>, vector<512x256xf32>, vector<1x256xf32> -> vector<1x256xf32>
    %c0_48 = arith.constant 0 : index
    %c0_49 = arith.constant 0 : index
    %66 = vector.load %arg19[%c0_48, %c0_49] : memref<1x256xf32, #tpu.memory_space<vmem>>, vector<1x256xf32>
    %67 = arith.mulf %65, %66 : vector<1x256xf32>
    %c0_50 = arith.constant 0 : index
    %c0_51 = arith.constant 0 : index
    %68 = vector.load %arg20[%c0_50, %c0_51] : memref<1x256xf32, #tpu.memory_space<vmem>>, vector<1x256xf32>
    %69 = arith.addf %67, %68 : vector<1x256xf32>
    %cst_52 = arith.constant 0.000000e+00 : f32
    %70 = vector.broadcast %cst_52 : f32 to vector<1x256xf32>
    %71 = arith.maximumf %69, %70 : vector<1x256xf32>
    %c0_53 = arith.constant 0 : index
    %c0_54 = arith.constant 0 : index
    %72 = vector.load %arg21[%c0_53, %c0_54] : memref<256x1xf32, #tpu.memory_space<vmem>>, vector<256x1xf32>
    %cst_55 = arith.constant dense<0.000000e+00> : vector<1x1xf32>
    %73 = tpu.matmul %71, %72, %cst_55 {dimension_numbers = #tpu.dot_dimension_numbers<[1], [0], [0], [1], [0, 0, 1, 1], [], []>} : vector<1x256xf32>, vector<256x1xf32>, vector<1x1xf32> -> vector<1x1xf32>
    %c0_56 = arith.constant 0 : index
    %c0_57 = arith.constant 0 : index
    %74 = vector.load %arg22[%c0_56, %c0_57] : memref<1x1xf32, #tpu.memory_space<vmem>>, vector<1x1xf32>
    %75 = arith.addf %73, %74 : vector<1x1xf32>
    %c0_58 = arith.constant 0 : index
    %c0_59 = arith.constant 0 : index
    %c0_60 = arith.constant 0 : index
    %76 = vector.load %arg23[%c0_58, %c0_59, %c0_60] : memref<1x1x1xf32, #tpu.memory_space<vmem>>, vector<1x1x1xf32>
    %77 = vector.shape_cast %76 : vector<1x1x1xf32> to vector<1x1xf32>
    %78 = vector.shape_cast %75 : vector<1x1xf32> to vector<1x1x1xf32>
    tpu.vector_store %arg23[%c0_58, %c0_59, %c0_60], %78 {strides = array<i32>} : memref<1x1x1xf32, #tpu.memory_space<vmem>>, vector<1x1x1xf32>,
    return
  }
  func.func @transform_0(%arg0: i32) -> (i32, i32, i32) {
    %c0_i32 = arith.constant 0 : i32
    %c0_i32_0 = arith.constant 0 : i32
    %c0_i32_1 = arith.constant 0 : i32
    return %arg0, %c0_i32, %c0_i32_0 : i32, i32, i32
  }
  func.func @transform_1(%arg0: i32) -> (i32, i32) {
    %c0_i32 = arith.constant 0 : i32
    %c0_i32_0 = arith.constant 0 : i32
    %c0_i32_1 = arith.constant 0 : i32
    return %c0_i32, %c0_i32_0 : i32, i32
  }
  func.func @transform_2(%arg0: i32) -> (i32, i32) {
    %c0_i32 = arith.constant 0 : i32
    %c0_i32_0 = arith.constant 0 : i32
    %c0_i32_1 = arith.constant 0 : i32
    return %c0_i32, %c0_i32_0 : i32, i32
  }
  func.func @transform_3(%arg0: i32) -> (i32, i32) {
    %c0_i32 = arith.constant 0 : i32
    %c0_i32_0 = arith.constant 0 : i32
    %c0_i32_1 = arith.constant 0 : i32
    return %c0_i32, %c0_i32_0 : i32, i32
  }
  func.func @transform_4(%arg0: i32) -> (i32, i32) {
    %c0_i32 = arith.constant 0 : i32
    %c0_i32_0 = arith.constant 0 : i32
    %c0_i32_1 = arith.constant 0 : i32
    return %c0_i32, %c0_i32_0 : i32, i32
  }
  func.func @transform_5(%arg0: i32) -> (i32, i32) {
    %c0_i32 = arith.constant 0 : i32
    %c0_i32_0 = arith.constant 0 : i32
    %c0_i32_1 = arith.constant 0 : i32
    return %c0_i32, %c0_i32_0 : i32, i32
  }
  func.func @transform_6(%arg0: i32) -> (i32, i32) {
    %c0_i32 = arith.constant 0 : i32
    %c0_i32_0 = arith.constant 0 : i32
    %c0_i32_1 = arith.constant 0 : i32
    return %c0_i32, %c0_i32_0 : i32, i32
  }
  func.func @transform_7(%arg0: i32) -> (i32, i32) {
    %c0_i32 = arith.constant 0 : i32
    %c0_i32_0 = arith.constant 0 : i32
    %c0_i32_1 = arith.constant 0 : i32
    return %c0_i32, %c0_i32_0 : i32, i32
  }
  func.func @transform_8(%arg0: i32) -> (i32, i32) {
    %c0_i32 = arith.constant 0 : i32
    %c0_i32_0 = arith.constant 0 : i32
    %c0_i32_1 = arith.constant 0 : i32
    return %c0_i32, %c0_i32_0 : i32, i32
  }
  func.func @transform_9(%arg0: i32) -> (i32, i32) {
    %c0_i32 = arith.constant 0 : i32
    %c0_i32_0 = arith.constant 0 : i32
    %c0_i32_1 = arith.constant 0 : i32
    return %c0_i32, %c0_i32_0 : i32, i32
  }
  func.func @transform_10(%arg0: i32) -> (i32, i32) {
    %c0_i32 = arith.constant 0 : i32
    %c0_i32_0 = arith.constant 0 : i32
    %c0_i32_1 = arith.constant 0 : i32
    return %c0_i32, %c0_i32_0 : i32, i32
  }
  func.func @transform_11(%arg0: i32) -> (i32, i32) {
    %c0_i32 = arith.constant 0 : i32
    %c0_i32_0 = arith.constant 0 : i32
    %c0_i32_1 = arith.constant 0 : i32
    return %c0_i32, %c0_i32_0 : i32, i32
  }
  func.func @transform_12(%arg0: i32) -> (i32, i32) {
    %c0_i32 = arith.constant 0 : i32
    %c0_i32_0 = arith.constant 0 : i32
    %c0_i32_1 = arith.constant 0 : i32
    return %c0_i32, %c0_i32_0 : i32, i32
  }
  func.func @transform_13(%arg0: i32) -> (i32, i32) {
    %c0_i32 = arith.constant 0 : i32
    %c0_i32_0 = arith.constant 0 : i32
    %c0_i32_1 = arith.constant 0 : i32
    return %c0_i32, %c0_i32_0 : i32, i32
  }
  func.func @transform_14(%arg0: i32) -> (i32, i32) {
    %c0_i32 = arith.constant 0 : i32
    %c0_i32_0 = arith.constant 0 : i32
    %c0_i32_1 = arith.constant 0 : i32
    return %c0_i32, %c0_i32_0 : i32, i32
  }
  func.func @transform_15(%arg0: i32) -> (i32, i32) {
    %c0_i32 = arith.constant 0 : i32
    %c0_i32_0 = arith.constant 0 : i32
    %c0_i32_1 = arith.constant 0 : i32
    return %c0_i32, %c0_i32_0 : i32, i32
  }
  func.func @transform_16(%arg0: i32) -> (i32, i32) {
    %c0_i32 = arith.constant 0 : i32
    %c0_i32_0 = arith.constant 0 : i32
    %c0_i32_1 = arith.constant 0 : i32
    return %c0_i32, %c0_i32_0 : i32, i32
  }
  func.func @transform_17(%arg0: i32) -> (i32, i32) {
    %c0_i32 = arith.constant 0 : i32
    %c0_i32_0 = arith.constant 0 : i32
    %c0_i32_1 = arith.constant 0 : i32
    return %c0_i32, %c0_i32_0 : i32, i32
  }
  func.func @transform_18(%arg0: i32) -> (i32, i32) {
    %c0_i32 = arith.constant 0 : i32
    %c0_i32_0 = arith.constant 0 : i32
    %c0_i32_1 = arith.constant 0 : i32
    return %c0_i32, %c0_i32_0 : i32, i32
  }
  func.func @transform_19(%arg0: i32) -> (i32, i32) {
    %c0_i32 = arith.constant 0 : i32
    %c0_i32_0 = arith.constant 0 : i32
    %c0_i32_1 = arith.constant 0 : i32
    return %c0_i32, %c0_i32_0 : i32, i32
  }
  func.func @transform_20(%arg0: i32) -> (i32, i32) {
    %c0_i32 = arith.constant 0 : i32
    %c0_i32_0 = arith.constant 0 : i32
    %c0_i32_1 = arith.constant 0 : i32
    return %c0_i32, %c0_i32_0 : i32, i32
  }
  func.func @transform_21(%arg0: i32) -> (i32, i32) {
    %c0_i32 = arith.constant 0 : i32
    %c0_i32_0 = arith.constant 0 : i32
    %c0_i32_1 = arith.constant 0 : i32
    return %c0_i32, %c0_i32_0 : i32, i32
  }
  func.func @transform_22(%arg0: i32) -> (i32, i32, i32) {
    %c0_i32 = arith.constant 0 : i32
    %c0_i32_0 = arith.constant 0 : i32
    %c0_i32_1 = arith.constant 0 : i32
    return %arg0, %c0_i32, %c0_i32_0 : i32, i32, i32
  }
}

</mosaic_0001>

<llo_original>
// kernel: cnet_v5_2_forward.1
$region0: #{cnet_v5_2_forward.1}
  #allocation0 [shape = 'u32[]', space=smem, size = 0x4, offset = 0x4, fixed_abs, tag = 'smem constant byte address 0x4 - core index']
  #allocation1 [shape = 'u32[72,128]{1,0:T(1,128)}', space=vmem, size = 0x9000, scoped, tag = 'internal scratch']
  #allocation2 [shape = 'f32[1,1]{1,0:T(1,128)S(1)}', space=vmem, size = 0x200, scoped, tag = 'scoped memory for cnet_v5_2_forward.1']
  %s0 = inlined_call_operand.vmem [shape: f32[2,390,44], index: 0, kind: input, shape index: {}]
  %s1 = inlined_call_operand.vmem [shape: f32[44,64], index: 1, kind: input, shape index: {}]
  %s2 = inlined_call_operand.vmem [shape: f32[1,64], index: 2, kind: input, shape index: {}]
  %s3 = inlined_call_operand.vmem [shape: f32[1,64], index: 3, kind: input, shape index: {}]
  %s4 = inlined_call_operand.vmem [shape: f32[195,390], index: 4, kind: input, shape index: {}]
  %s5 = inlined_call_operand.vmem [shape: f32[256,128], index: 5, kind: input, shape index: {}]
  %s6 = inlined_call_operand.vmem [shape: f32[1,128], index: 6, kind: input, shape index: {}]
  %s7 = inlined_call_operand.vmem [shape: f32[1,128], index: 7, kind: input, shape index: {}]
  %s8 = inlined_call_operand.vmem [shape: f32[48,192], index: 8, kind: input, shape index: {}]
  %s9 = inlined_call_operand.hbm [shape: f32[512,256], index: 9, kind: input, shape index: {}]
  %s10 = inlined_call_operand.vmem [shape: f32[1,256], index: 10, kind: input, shape index: {}]
  %s11 = inlined_call_operand.vmem [shape: f32[1,256], index: 11, kind: input, shape index: {}]
  %s12 = inlined_call_operand.vmem [shape: f32[9,45], index: 12, kind: input, shape index: {}]
  %s13 = inlined_call_operand.vmem [shape: f32[768,512], index: 13, kind: input, shape index: {}]
  %s14 = inlined_call_operand.vmem [shape: f32[1,512], index: 14, kind: input, shape index: {}]
  %s15 = inlined_call_operand.vmem [shape: f32[1,512], index: 15, kind: input, shape index: {}]
  %s16 = inlined_call_operand.vmem [shape: f32[1,7], index: 16, kind: input, shape index: {}]
  %s17 = inlined_call_operand.hbm [shape: f32[512,256], index: 17, kind: input, shape index: {}]
  %s18 = inlined_call_operand.vmem [shape: f32[1,256], index: 18, kind: input, shape index: {}]
  %s19 = inlined_call_operand.vmem [shape: f32[1,256], index: 19, kind: input, shape index: {}]
  %s20 = inlined_call_operand.vmem [shape: f32[256,1], index: 20, kind: input, shape index: {}]
  %s21 = inlined_call_operand.<no memory space> [shape: f32[1,1], index: 21, kind: input, shape index: {}]
  %s22 = inlined_call_operand.vmem [shape: f32[2,1,1], index: 22, kind: output, shape index: {}]
  %s23 = sld [smem:[#allocation0]]
  $region129: #{cnet_v5_2_forward.1} parent=0
    _
  %s25 = ssub.s32 1, %s23
  %s26 = scalar_select 0, %s25, %s23
  %v27 = vstv %s21
  %28 = vst [vmem:[#allocation2] sm:$0x1] %v27
  $region1: #{cnet_v5_2_forward.1} parent=0
    #allocation3 [shape = 'u8[524288]{0}', space=vmem, size = 0x80000, scoped, tag = 'input window, operand 9, single buffered']
    #allocation4 [shape = 's32[2]{0}', space=sflag, size = 0x8, scoped, tag = 'scoped memory for cnet_v5_2_forward.1']
    #allocation5 [shape = 'u8[524288]{0}', space=vmem, size = 0x80000, scoped, tag = 'input window, operand 17, single buffered']
    #allocation6 [shape = 's32[1]{0}', space=sflag, size = 0x4, scoped, tag = 'scoped memory for cnet_v5_2_forward.1']
    %29 = vsyncpa [#allocation4], 0
    %30 = vsyncpa [#allocation6], 0
    loop: start=0, step=1, limit=4
    $region2: #{cnet_v5_2_forward.1} parent=1 // loop_pre_header
      _
    $region3: #{cnet_v5_2_forward.1} parent=1 // loop_header
      %s32 = sphi 0, %s36
      %p33 = scmp.ge.s32.totalorder %s32, 4
      %s42 = sphi 0, %s44
      %s45 = sphi 0, %s42
      %s46 = sphi 0, %s45
      %s62 = sphi 0, %s46
      %s66 = sphi 0, %s66
      %s68 = sphi 0, %s66
      %s69 = sphi 0, %s68
      %s83 = sphi 0, %s69
      %s87 = sphi 0, %s87
      %s89 = sphi 0, %s87
      %s90 = sphi 0, %s89
      %s104 = sphi 0, %s90
      %s108 = sphi 0, %s108
      %s110 = sphi 0, %s108
      %s111 = sphi 0, %s110
      %s125 = sphi 0, %s111
      %s129 = sphi 0, %s129
      %s131 = sphi 0, %s129
      %s132 = sphi 0, %s131
      %s146 = sphi 0, %s132
      %s150 = sphi 0, %s150
      %s152 = sphi 0, %s150
      %s153 = sphi 0, %s152
      %s167 = sphi 0, %s153
      %s171 = sphi 0, %s171
      %s173 = sphi 0, %s171
      %s174 = sphi 0, %s173
      %s188 = sphi 0, %s174
      %s192 = sphi 0, %s192
      %s194 = sphi 0, %s192
      %s195 = sphi 0, %s194
      %s209 = sphi 0, %s195
      %s213 = sphi 0, %s213
      %s215 = sphi 0, %s213
      %s216 = sphi 0, %s215
      %s230 = sphi 0, %s216
      %s234 = sphi 0, %s234
      %s236 = sphi 0, %s234
      %s237 = sphi 0, %s236
      %s251 = sphi 0, %s237
      %s255 = sphi 0, %s255
      %s257 = sphi 0, %s255
      %s258 = sphi 0, %s257
      %s272 = sphi 0, %s258
      %s276 = sphi 0, %s276
      %s278 = sphi 0, %s276
      %s279 = sphi 0, %s278
      %s293 = sphi 0, %s279
      %s297 = sphi 0, %s297
      %s299 = sphi 0, %s297
      %s300 = sphi 0, %s299
      %s314 = sphi 0, %s300
      %s318 = sphi 0, %s318
      %s320 = sphi 0, %s318
      %s321 = sphi 0, %s320
      %s335 = sphi 0, %s321
      %s339 = sphi 0, %s339
      %s341 = sphi 0, %s339
      %s342 = sphi 0, %s341
      %s356 = sphi 0, %s342
      %s360 = sphi 0, %s360
      %s362 = sphi 0, %s360
      %s363 = sphi 0, %s362
      %s377 = sphi 0, %s363
      %s381 = sphi 0, %s381
      %s383 = sphi 0, %s381
      %s384 = sphi 0, %s383
      %s398 = sphi 0, %s384
      %s402 = sphi 0, %s402
      %s404 = sphi 0, %s402
      %s405 = sphi 0, %s404
      %s419 = sphi 0, %s405
      %s423 = sphi 0, %s423
      %s425 = sphi 0, %s423
      %s426 = sphi 0, %s425
      %s440 = sphi 0, %s426
      %s444 = sphi 0, %s444
      %s446 = sphi 0, %s444
      %s447 = sphi 0, %s446
      %s461 = sphi 0, %s447
      %s465 = sphi 0, %s465
      %s467 = sphi 0, %s465
      %s468 = sphi 0, %s467
      %s482 = sphi 0, %s468
      %s486 = sphi 0, %s486
      %s488 = sphi 0, %s486
      %s489 = sphi 0, %s488
      %s503 = sphi 0, %s489
      %s509 = sphi 0, %s511
      %s512 = sphi 0, %s509
      %s513 = sphi 0, %s512
      %s529 = sphi 0, %s513
    $region4: #{cnet_v5_2_forward.1} parent=1 // loop_header_branch
      %35 = sbr.rel (%p33) target = $region8
    $region5: #{cnet_v5_2_forward.1} parent=1 // loop_body
      %s37 = ssub.s32 %s32, 1
      %s38 = ssub.s32 %s32, 2
      %s39 = sadd.s32 %s32, 1
      %s40 = ssub.s32 %s32, %s39
      %p41 = scmp.eq.s32.totalorder %s40, 0
      %s43 = sadd.s32 %s42, 1
      %s44 = scalar_select %p41, %s42, %s43
      %p47 = pneg %p41
      %p48 = scmp.eq.s32.totalorder %s32, 1
      %p49 = por %p47, %p48
      %p50 = scmp.ne.s32.totalorder %s42, %s45
      %p51 = scmp.eq.s32.totalorder %s32, 0
      %p52 = por %p50, %p51
      %p53 = scmp.ne.s32.totalorder %s42, %s45
      %p54 = scmp.eq.s32.totalorder %s37, 1
      %p55 = por %p53, %p54
      %p56 = scmp.ne.s32.totalorder %s45, %s46
      %p57 = scmp.eq.s32.totalorder %s37, 0
      %p58 = por %p56, %p57
      %p59 = scmp.ne.s32.totalorder %s45, %s46
      %p60 = scmp.eq.s32.totalorder %s38, 1
      %p61 = por %p59, %p60
      %p63 = scmp.ne.s32.totalorder %s46, %s62
      %p64 = scmp.eq.s32.totalorder %s38, 0
      %p65 = por %p63, %p64
      %s67 = sadd.s32 %s66, 1
      %p70 = scmp.eq.s32.totalorder %s32, 1
      %p71 = scmp.ne.s32.totalorder %s66, %s68
      %p72 = scmp.eq.s32.totalorder %s32, 0
      %p73 = por %p71, %p72
      %p74 = scmp.ne.s32.totalorder %s66, %s68
      %p75 = scmp.eq.s32.totalorder %s37, 1
      %p76 = por %p74, %p75
      %p77 = scmp.ne.s32.totalorder %s68, %s69
      %p78 = scmp.eq.s32.totalorder %s37, 0
      %p79 = por %p77, %p78
      %p80 = scmp.ne.s32.totalorder %s68, %s69
      %p81 = scmp.eq.s32.totalorder %s38, 1
      %p82 = por %p80, %p81
      %p84 = scmp.ne.s32.totalorder %s69, %s83
      %p85 = scmp.eq.s32.totalorder %s38, 0
      %p86 = por %p84, %p85
      %s88 = sadd.s32 %s87, 1
      %p91 = scmp.eq.s32.totalorder %s32, 1
      %p92 = scmp.ne.s32.totalorder %s87, %s89
      %p93 = scmp.eq.s32.totalorder %s32, 0
      %p94 = por %p92, %p93
      %p95 = scmp.ne.s32.totalorder %s87, %s89
      %p96 = scmp.eq.s32.totalorder %s37, 1
      %p97 = por %p95, %p96
      %p98 = scmp.ne.s32.totalorder %s89, %s90
      %p99 = scmp.eq.s32.totalorder %s37, 0
      %p100 = por %p98, %p99
      %p101 = scmp.ne.s32.totalorder %s89, %s90
      %p102 = scmp.eq.s32.totalorder %s38, 1
      %p103 = por %p101, %p102
      %p105 = scmp.ne.s32.totalorder %s90, %s104
      %p106 = scmp.eq.s32.totalorder %s38, 0
      %p107 = por %p105, %p106
      %s109 = sadd.s32 %s108, 1
      %p112 = scmp.eq.s32.totalorder %s32, 1
      %p113 = scmp.ne.s32.totalorder %s108, %s110
      %p114 = scmp.eq.s32.totalorder %s32, 0
      %p115 = por %p113, %p114
      %p116 = scmp.ne.s32.totalorder %s108, %s110
      %p117 = scmp.eq.s32.totalorder %s37, 1
      %p118 = por %p116, %p117
      %p119 = scmp.ne.s32.totalorder %s110, %s111
      %p120 = scmp.eq.s32.totalorder %s37, 0
      %p121 = por %p119, %p120
      %p122 = scmp.ne.s32.totalorder %s110, %s111
      %p123 = scmp.eq.s32.totalorder %s38, 1
      %p124 = por %p122, %p123
      %p126 = scmp.ne.s32.totalorder %s111, %s125
      %p127 = scmp.eq.s32.totalorder %s38, 0
      %p128 = por %p126, %p127
      %s130 = sadd.s32 %s129, 1
      %p133 = scmp.eq.s32.totalorder %s32, 1
      %p134 = scmp.ne.s32.totalorder %s129, %s131
      %p135 = scmp.eq.s32.totalorder %s32, 0
      %p136 = por %p134, %p135
      %p137 = scmp.ne.s32.totalorder %s129, %s131
      %p138 = scmp.eq.s32.totalorder %s37, 1
      %p139 = por %p137, %p138
      %p140 = scmp.ne.s32.totalorder %s131, %s132
      %p141 = scmp.eq.s32.totalorder %s37, 0
      %p142 = por %p140, %p141
      %p143 = scmp.ne.s32.totalorder %s131, %s132
      %p144 = scmp.eq.s32.totalorder %s38, 1
      %p145 = por %p143, %p144
      %p147 = scmp.ne.s32.totalorder %s132, %s146
      %p148 = scmp.eq.s32.totalorder %s38, 0
      %p149 = por %p147, %p148
      %s151 = sadd.s32 %s150, 1
      %p154 = scmp.eq.s32.totalorder %s32, 1
      %p155 = scmp.ne.s32.totalorder %s150, %s152
      %p156 = scmp.eq.s32.totalorder %s32, 0
      %p157 = por %p155, %p156
      %p158 = scmp.ne.s32.totalorder %s150, %s152
      %p159 = scmp.eq.s32.totalorder %s37, 1
      %p160 = por %p158, %p159
      %p161 = scmp.ne.s32.totalorder %s152, %s153
      %p162 = scmp.eq.s32.totalorder %s37, 0
      %p163 = por %p161, %p162
      %p164 = scmp.ne.s32.totalorder %s152, %s153
      %p165 = scmp.eq.s32.totalorder %s38, 1
      %p166 = por %p164, %p165
      %p168 = scmp.ne.s32.totalorder %s153, %s167
      %p169 = scmp.eq.s32.totalorder %s38, 0
      %p170 = por %p168, %p169
      %s172 = sadd.s32 %s171, 1
      %p175 = scmp.eq.s32.totalorder %s32, 1
      %p176 = scmp.ne.s32.totalorder %s171, %s173
      %p177 = scmp.eq.s32.totalorder %s32, 0
      %p178 = por %p176, %p177
      %p179 = scmp.ne.s32.totalorder %s171, %s173
      %p180 = scmp.eq.s32.totalorder %s37, 1
      %p181 = por %p179, %p180
      %p182 = scmp.ne.s32.totalorder %s173, %s174
      %p183 = scmp.eq.s32.totalorder %s37, 0
      %p184 = por %p182, %p183
      %p185 = scmp.ne.s32.totalorder %s173, %s174
      %p186 = scmp.eq.s32.totalorder %s38, 1
      %p187 = por %p185, %p186
      %p189 = scmp.ne.s32.totalorder %s174, %s188
      %p190 = scmp.eq.s32.totalorder %s38, 0
      %p191 = por %p189, %p190
      %s193 = sadd.s32 %s192, 1
      %p196 = scmp.eq.s32.totalorder %s32, 1
      %p197 = scmp.ne.s32.totalorder %s192, %s194
      %p198 = scmp.eq.s32.totalorder %s32, 0
      %p199 = por %p197, %p198
      %p200 = scmp.ne.s32.totalorder %s192, %s194
      %p201 = scmp.eq.s32.totalorder %s37, 1
      %p202 = por %p200, %p201
      %p203 = scmp.ne.s32.totalorder %s194, %s195
      %p204 = scmp.eq.s32.totalorder %s37, 0
      %p205 = por %p203, %p204
      %p206 = scmp.ne.s32.totalorder %s194, %s195
      %p207 = scmp.eq.s32.totalorder %s38, 1
      %p208 = por %p206, %p207
      %p210 = scmp.ne.s32.totalorder %s195, %s209
      %p211 = scmp.eq.s32.totalorder %s38, 0
      %p212 = por %p210, %p211
      %s214 = sadd.s32 %s213, 1
      %p217 = scmp.eq.s32.totalorder %s32, 1
      %p218 = scmp.ne.s32.totalorder %s213, %s215
      %p219 = scmp.eq.s32.totalorder %s32, 0
      %p220 = por %p218, %p219
      %p221 = scmp.ne.s32.totalorder %s213, %s215
      %p222 = scmp.eq.s32.totalorder %s37, 1
      %p223 = por %p221, %p222
      %p224 = scmp.ne.s32.totalorder %s215, %s216
      %p225 = scmp.eq.s32.totalorder %s37, 0
      %p226 = por %p224, %p225
      %p227 = scmp.ne.s32.totalorder %s215, %s216
      %p228 = scmp.eq.s32.totalorder %s38, 1
      %p229 = por %p227, %p228
      %p231 = scmp.ne.s32.totalorder %s216, %s230
      %p232 = scmp.eq.s32.totalorder %s38, 0
      %p233 = por %p231, %p232
      %s235 = sadd.s32 %s234, 1
      %p238 = scmp.eq.s32.totalorder %s32, 1
      %p239 = scmp.ne.s32.totalorder %s234, %s236
      %p240 = scmp.eq.s32.totalorder %s32, 0
      %p241 = por %p239, %p240
      %p242 = scmp.ne.s32.totalorder %s234, %s236
      %p243 = scmp.eq.s32.totalorder %s37, 1
      %p244 = por %p242, %p243
      %p245 = scmp.ne.s32.totalorder %s236, %s237
      %p246 = scmp.eq.s32.totalorder %s37, 0
      %p247 = por %p245, %p246
      %p248 = scmp.ne.s32.totalorder %s236, %s237
      %p249 = scmp.eq.s32.totalorder %s38, 1
      %p250 = por %p248, %p249
      %p252 = scmp.ne.s32.totalorder %s237, %s251
      %p253 = scmp.eq.s32.totalorder %s38, 0
      %p254 = por %p252, %p253
      %s256 = sadd.s32 %s255, 1
      %p259 = scmp.eq.s32.totalorder %s32, 1
      %p260 = scmp.ne.s32.totalorder %s255, %s257
      %p261 = scmp.eq.s32.totalorder %s32, 0
      %p262 = por %p260, %p261
      %p263 = scmp.ne.s32.totalorder %s255, %s257
      %p264 = scmp.eq.s32.totalorder %s37, 1
      %p265 = por %p263, %p264
      %p266 = scmp.ne.s32.totalorder %s257, %s258
      %p267 = scmp.eq.s32.totalorder %s37, 0
      %p268 = por %p266, %p267
      %p269 = scmp.ne.s32.totalorder %s257, %s258
      %p270 = scmp.eq.s32.totalorder %s38, 1
      %p271 = por %p269, %p270
      %p273 = scmp.ne.s32.totalorder %s258, %s272
      %p274 = scmp.eq.s32.totalorder %s38, 0
      %p275 = por %p273, %p274
      %s277 = sadd.s32 %s276, 1
      %p280 = scmp.eq.s32.totalorder %s32, 1
      %p281 = scmp.ne.s32.totalorder %s276, %s278
      %p282 = scmp.eq.s32.totalorder %s32, 0
      %p283 = por %p281, %p282
      %p284 = scmp.ne.s32.totalorder %s276, %s278
      %p285 = scmp.eq.s32.totalorder %s37, 1
      %p286 = por %p284, %p285
      %p287 = scmp.ne.s32.totalorder %s278, %s279
      %p288 = scmp.eq.s32.totalorder %s37, 0
      %p289 = por %p287, %p288
      %p290 = scmp.ne.s32.totalorder %s278, %s279
      %p291 = scmp.eq.s32.totalorder %s38, 1
      %p292 = por %p290, %p291
      %p294 = scmp.ne.s32.totalorder %s279, %s293
      %p295 = scmp.eq.s32.totalorder %s38, 0
      %p296 = por %p294, %p295
      %s298 = sadd.s32 %s297, 1
      %p301 = scmp.eq.s32.totalorder %s32, 1
      %p302 = scmp.ne.s32.totalorder %s297, %s299
      %p303 = scmp.eq.s32.totalorder %s32, 0
      %p304 = por %p302, %p303
      %p305 = scmp.ne.s32.totalorder %s297, %s299
      %p306 = scmp.eq.s32.totalorder %s37, 1
      %p307 = por %p305, %p306
      %p308 = scmp.ne.s32.totalorder %s299, %s300
      %p309 = scmp.eq.s32.totalorder %s37, 0
      %p310 = por %p308, %p309
      %p311 = scmp.ne.s32.totalorder %s299, %s300
      %p312 = scmp.eq.s32.totalorder %s38, 1
      %p313 = por %p311, %p312
      %p315 = scmp.ne.s32.totalorder %s300, %s314
      %p316 = scmp.eq.s32.totalorder %s38, 0
      %p317 = por %p315, %p316
      %s319 = sadd.s32 %s318, 1
      %p322 = scmp.eq.s32.totalorder %s32, 1
      %p323 = scmp.ne.s32.totalorder %s318, %s320
      %p324 = scmp.eq.s32.totalorder %s32, 0
      %p325 = por %p323, %p324
      %p326 = scmp.ne.s32.totalorder %s318, %s320
      %p327 = scmp.eq.s32.totalorder %s37, 1
      %p328 = por %p326, %p327
      %p329 = scmp.ne.s32.totalorder %s320, %s321
      %p330 = scmp.eq.s32.totalorder %s37, 0
      %p331 = por %p329, %p330
      %p332 = scmp.ne.s32.totalorder %s320, %s321
      %p333 = scmp.eq.s32.totalorder %s38, 1
      %p334 = por %p332, %p333
      %p336 = scmp.ne.s32.totalorder %s321, %s335
      %p337 = scmp.eq.s32.totalorder %s38, 0
      %p338 = por %p336, %p337
      %s340 = sadd.s32 %s339, 1
      %p343 = scmp.eq.s32.totalorder %s32, 1
      %p344 = scmp.ne.s32.totalorder %s339, %s341
      %p345 = scmp.eq.s32.totalorder %s32, 0
      %p346 = por %p344, %p345
      %p347 = scmp.ne.s32.totalorder %s339, %s341
      %p348 = scmp.eq.s32.totalorder %s37, 1
      %p349 = por %p347, %p348
      %p350 = scmp.ne.s32.totalorder %s341, %s342
      %p351 = scmp.eq.s32.totalorder %s37, 0
      %p352 = por %p350, %p351
      %p353 = scmp.ne.s32.totalorder %s341, %s342
      %p354 = scmp.eq.s32.totalorder %s38, 1
      %p355 = por %p353, %p354
      %p357 = scmp.ne.s32.totalorder %s342, %s356
      %p358 = scmp.eq.s32.totalorder %s38, 0
      %p359 = por %p357, %p358
      %s361 = sadd.s32 %s360, 1
      %p364 = scmp.eq.s32.totalorder %s32, 1
      %p365 = scmp.ne.s32.totalorder %s360, %s362
      %p366 = scmp.eq.s32.totalorder %s32, 0
      %p367 = por %p365, %p366
      %p368 = scmp.ne.s32.totalorder %s360, %s362
      %p369 = scmp.eq.s32.totalorder %s37, 1
      %p370 = por %p368, %p369
      %p371 = scmp.ne.s32.totalorder %s362, %s363
      %p372 = scmp.eq.s32.totalorder %s37, 0
      %p373 = por %p371, %p372
      %p374 = scmp.ne.s32.totalorder %s362, %s363
      %p375 = scmp.eq.s32.totalorder %s38, 1
      %p376 = por %p374, %p375
      %p378 = scmp.ne.s32.totalorder %s363, %s377
      %p379 = scmp.eq.s32.totalorder %s38, 0
      %p380 = por %p378, %p379
      %s382 = sadd.s32 %s381, 1
      %p385 = scmp.eq.s32.totalorder %s32, 1
      %p386 = scmp.ne.s32.totalorder %s381, %s383
      %p387 = scmp.eq.s32.totalorder %s32, 0
      %p388 = por %p386, %p387
      %p389 = scmp.ne.s32.totalorder %s381, %s383
      %p390 = scmp.eq.s32.totalorder %s37, 1
      %p391 = por %p389, %p390
      %p392 = scmp.ne.s32.totalorder %s383, %s384
      %p393 = scmp.eq.s32.totalorder %s37, 0
      %p394 = por %p392, %p393
      %p395 = scmp.ne.s32.totalorder %s383, %s384
      %p396 = scmp.eq.s32.totalorder %s38, 1
      %p397 = por %p395, %p396
      %p399 = scmp.ne.s32.totalorder %s384, %s398
      %p400 = scmp.eq.s32.totalorder %s38, 0
      %p401 = por %p399, %p400
      %s403 = sadd.s32 %s402, 1
      %p406 = scmp.eq.s32.totalorder %s32, 1
      %p407 = scmp.ne.s32.totalorder %s402, %s404
      %p408 = scmp.eq.s32.totalorder %s32, 0
      %p409 = por %p407, %p408
      %p410 = scmp.ne.s32.totalorder %s402, %s404
      %p411 = scmp.eq.s32.totalorder %s37, 1
      %p412 = por %p410, %p411
      %p413 = scmp.ne.s32.totalorder %s404, %s405
      %p414 = scmp.eq.s32.totalorder %s37, 0
      %p415 = por %p413, %p414
      %p416 = scmp.ne.s32.totalorder %s404, %s405
      %p417 = scmp.eq.s32.totalorder %s38, 1
      %p418 = por %p416, %p417
      %p420 = scmp.ne.s32.totalorder %s405, %s419
      %p421 = scmp.eq.s32.totalorder %s38, 0
      %p422 = por %p420, %p421
      %s424 = sadd.s32 %s423, 1
      %p427 = scmp.eq.s32.totalorder %s32, 1
      %p428 = scmp.ne.s32.totalorder %s423, %s425
      %p429 = scmp.eq.s32.totalorder %s32, 0
      %p430 = por %p428, %p429
      %p431 = scmp.ne.s32.totalorder %s423, %s425
      %p432 = scmp.eq.s32.totalorder %s37, 1
      %p433 = por %p431, %p432
      %p434 = scmp.ne.s32.totalorder %s425, %s426
      %p435 = scmp.eq.s32.totalorder %s37, 0
      %p436 = por %p434, %p435
      %p437 = scmp.ne.s32.totalorder %s425, %s426
      %p438 = scmp.eq.s32.totalorder %s38, 1
      %p439 = por %p437, %p438
      %p441 = scmp.ne.s32.totalorder %s426, %s440
      %p442 = scmp.eq.s32.totalorder %s38, 0
      %p443 = por %p441, %p442
      %s445 = sadd.s32 %s444, 1
      %p448 = scmp.eq.s32.totalorder %s32, 1
      %p449 = scmp.ne.s32.totalorder %s444, %s446
      %p450 = scmp.eq.s32.totalorder %s32, 0
      %p451 = por %p449, %p450
      %p452 = scmp.ne.s32.totalorder %s444, %s446
      %p453 = scmp.eq.s32.totalorder %s37, 1
      %p454 = por %p452, %p453
      %p455 = scmp.ne.s32.totalorder %s446, %s447
      %p456 = scmp.eq.s32.totalorder %s37, 0
      %p457 = por %p455, %p456
      %p458 = scmp.ne.s32.totalorder %s446, %s447
      %p459 = scmp.eq.s32.totalorder %s38, 1
      %p460 = por %p458, %p459
      %p462 = scmp.ne.s32.totalorder %s447, %s461
      %p463 = scmp.eq.s32.totalorder %s38, 0
      %p464 = por %p462, %p463
      %s466 = sadd.s32 %s465, 1
      %p469 = scmp.eq.s32.totalorder %s32, 1
      %p470 = scmp.ne.s32.totalorder %s465, %s467
      %p471 = scmp.eq.s32.totalorder %s32, 0
      %p472 = por %p470, %p471
      %p473 = scmp.ne.s32.totalorder %s465, %s467
      %p474 = scmp.eq.s32.totalorder %s37, 1
      %p475 = por %p473, %p474
      %p476 = scmp.ne.s32.totalorder %s467, %s468
      %p477 = scmp.eq.s32.totalorder %s37, 0
      %p478 = por %p476, %p477
      %p479 = scmp.ne.s32.totalorder %s467, %s468
      %p480 = scmp.eq.s32.totalorder %s38, 1
      %p481 = por %p479, %p480
      %p483 = scmp.ne.s32.totalorder %s468, %s482
      %p484 = scmp.eq.s32.totalorder %s38, 0
      %p485 = por %p483, %p484
      %s487 = sadd.s32 %s486, 1
      %p490 = scmp.eq.s32.totalorder %s32, 1
      %p491 = scmp.ne.s32.totalorder %s486, %s488
      %p492 = scmp.eq.s32.totalorder %s32, 0
      %p493 = por %p491, %p492
      %p494 = scmp.ne.s32.totalorder %s486, %s488
      %p495 = scmp.eq.s32.totalorder %s37, 1
      %p496 = por %p494, %p495
      %p497 = scmp.ne.s32.totalorder %s488, %s489
      %p498 = scmp.eq.s32.totalorder %s37, 0
      %p499 = por %p497, %p498
      %p500 = scmp.ne.s32.totalorder %s488, %s489
      %p501 = scmp.eq.s32.totalorder %s38, 1
      %p502 = por %p500, %p501
      %p504 = scmp.ne.s32.totalorder %s489, %s503
      %p505 = scmp.eq.s32.totalorder %s38, 0
      %p506 = por %p504, %p505
      %s507 = ssub.s32 %s32, %s39
      %p508 = scmp.eq.s32.totalorder %s507, 0
      %s510 = sadd.s32 %s509, 1
      %s511 = scalar_select %p508, %s509, %s510
      %p514 = pneg %p508
      %p515 = scmp.eq.s32.totalorder %s32, 1
      %p516 = por %p514, %p515
      %p517 = scmp.ne.s32.totalorder %s509, %s512
      %p518 = scmp.eq.s32.totalorder %s32, 0
      %p519 = por %p517, %p518
      %p520 = scmp.ne.s32.totalorder %s509, %s512
      %p521 = scmp.eq.s32.totalorder %s37, 1
      %p522 = por %p520, %p521
      %p523 = scmp.ne.s32.totalorder %s512, %s513
      %p524 = scmp.eq.s32.totalorder %s37, 0
      %p525 = por %p523, %p524
      %p526 = scmp.ne.s32.totalorder %s512, %s513
      %p527 = scmp.eq.s32.totalorder %s38, 1
      %p528 = por %p526, %p527
      %p530 = scmp.ne.s32.totalorder %s513, %s529
      %p531 = scmp.eq.s32.totalorder %s38, 0
      %p532 = por %p530, %p531
      %p533 = scmp.le.s32.totalorder 1, %s32
      %p534 = scmp.lt.s32.totalorder %s32, 3
      %p535 = pnand %p533, %p534
      %p536 = pneg %p535
      // Predicated region
      $region9: #{cnet_v5_2_forward.1} parent=5 // pred_check
        _
      $region10: #{cnet_v5_2_forward.1} parent=5 // pred_check_branch
        %538 = sbr.rel (%p535) target = $region12
      $region11: #{cnet_v5_2_forward.1} parent=5 // pred_region
        %s539 = ssub.s32 %s32, 1
        // Predicated region
        $region13: #{cnet_v5_2_forward.1} parent=11 // pred_check
          %p540 = pneg %p79
        $region14: #{cnet_v5_2_forward.1} parent=11 // pred_check_branch
          %542 = sbr.rel (%p540) target = $region16
        $region15: #{cnet_v5_2_forward.1} parent=11 // pred_region
          _
        $region16: #{cnet_v5_2_forward.1} parent=11 // pred_fallthru
          _
        // Predicated region
        $region17: #{cnet_v5_2_forward.1} parent=11 // pred_check
          %p543 = pneg %p100
        $region18: #{cnet_v5_2_forward.1} parent=11 // pred_check_branch
          %545 = sbr.rel (%p543) target = $region20
        $region19: #{cnet_v5_2_forward.1} parent=11 // pred_region
          _
        $region20: #{cnet_v5_2_forward.1} parent=11 // pred_fallthru
          _
        // Predicated region
        $region21: #{cnet_v5_2_forward.1} parent=11 // pred_check
          %p546 = pneg %p121
        $region22: #{cnet_v5_2_forward.1} parent=11 // pred_check_branch
          %548 = sbr.rel (%p546) target = $region24
        $region23: #{cnet_v5_2_forward.1} parent=11 // pred_region
          _
        $region24: #{cnet_v5_2_forward.1} parent=11 // pred_fallthru
          _
        // Predicated region
        $region25: #{cnet_v5_2_forward.1} parent=11 // pred_check
          %p549 = pneg %p142
        $region26: #{cnet_v5_2_forward.1} parent=11 // pred_check_branch
          %551 = sbr.rel (%p549) target = $region28
        $region27: #{cnet_v5_2_forward.1} parent=11 // pred_region
          _
        $region28: #{cnet_v5_2_forward.1} parent=11 // pred_fallthru
          _
        // Predicated region
        $region29: #{cnet_v5_2_forward.1} parent=11 // pred_check
          %p552 = pneg %p163
        $region30: #{cnet_v5_2_forward.1} parent=11 // pred_check_branch
          %554 = sbr.rel (%p552) target = $region32
        $region31: #{cnet_v5_2_forward.1} parent=11 // pred_region
          _
        $region32: #{cnet_v5_2_forward.1} parent=11 // pred_fallthru
          _
        // Predicated region
        $region33: #{cnet_v5_2_forward.1} parent=11 // pred_check
          %p555 = pneg %p184
        $region34: #{cnet_v5_2_forward.1} parent=11 // pred_check_branch
          %557 = sbr.rel (%p555) target = $region36
        $region35: #{cnet_v5_2_forward.1} parent=11 // pred_region
          _
        $region36: #{cnet_v5_2_forward.1} parent=11 // pred_fallthru
          _
        // Predicated region
        $region37: #{cnet_v5_2_forward.1} parent=11 // pred_check
          %p558 = pneg %p205
        $region38: #{cnet_v5_2_forward.1} parent=11 // pred_check_branch
          %560 = sbr.rel (%p558) target = $region40
        $region39: #{cnet_v5_2_forward.1} parent=11 // pred_region
          _
        $region40: #{cnet_v5_2_forward.1} parent=11 // pred_fallthru
          _
        // Predicated region
        $region41: #{cnet_v5_2_forward.1} parent=11 // pred_check
          %p561 = pneg %p226
        $region42: #{cnet_v5_2_forward.1} parent=11 // pred_check_branch
          %563 = sbr.rel (%p561) target = $region44
        $region43: #{cnet_v5_2_forward.1} parent=11 // pred_region
          _
        $region44: #{cnet_v5_2_forward.1} parent=11 // pred_fallthru
          _
        // Predicated region
        $region45: #{cnet_v5_2_forward.1} parent=11 // pred_check
          %p564 = pneg %p247
        $region46: #{cnet_v5_2_forward.1} parent=11 // pred_check_branch
          %566 = sbr.rel (%p564) target = $region48
        $region47: #{cnet_v5_2_forward.1} parent=11 // pred_region
          %568 = vsyncadd [#allocation4], 0
          %s569 = sshll.u32 %s9, 4
          %s570 = int_to_ptr.hbm [resolvable:$true] %s569
          %s571 = sshll.u32 [#allocation3], 4
          %s572 = int_to_ptr.vmem [resolvable:$true] %s571
          %577 = dma.hbm_to_vmem [thread:$0]  %s570, 16384, %s572, [#allocation4], 256, 256, 16
        $region48: #{cnet_v5_2_forward.1} parent=11 // pred_fallthru
          _
        // Predicated region
        $region49: #{cnet_v5_2_forward.1} parent=11 // pred_check
          %p578 = pneg %p268
        $region50: #{cnet_v5_2_forward.1} parent=11 // pred_check_branch
          %580 = sbr.rel (%p578) target = $region52
        $region51: #{cnet_v5_2_forward.1} parent=11 // pred_region
          _
        $region52: #{cnet_v5_2_forward.1} parent=11 // pred_fallthru
          _
        // Predicated region
        $region53: #{cnet_v5_2_forward.1} parent=11 // pred_check
          %p581 = pneg %p289
        $region54: #{cnet_v5_2_forward.1} parent=11 // pred_check_branch
          %583 = sbr.rel (%p581) target = $region56
        $region55: #{cnet_v5_2_forward.1} parent=11 // pred_region
          _
        $region56: #{cnet_v5_2_forward.1} parent=11 // pred_fallthru
          _
        // Predicated region
        $region57: #{cnet_v5_2_forward.1} parent=11 // pred_check
          %p584 = pneg %p310
        $region58: #{cnet_v5_2_forward.1} parent=11 // pred_check_branch
          %586 = sbr.rel (%p584) target = $region60
        $region59: #{cnet_v5_2_forward.1} parent=11 // pred_region
          _
        $region60: #{cnet_v5_2_forward.1} parent=11 // pred_fallthru
          _
        // Predicated region
        $region61: #{cnet_v5_2_forward.1} parent=11 // pred_check
          %p587 = pneg %p331
        $region62: #{cnet_v5_2_forward.1} parent=11 // pred_check_branch
          %589 = sbr.rel (%p587) target = $region64
        $region63: #{cnet_v5_2_forward.1} parent=11 // pred_region
          _
        $region64: #{cnet_v5_2_forward.1} parent=11 // pred_fallthru
          _
        // Predicated region
        $region65: #{cnet_v5_2_forward.1} parent=11 // pred_check
          %p590 = pneg %p352
        $region66: #{cnet_v5_2_forward.1} parent=11 // pred_check_branch
          %592 = sbr.rel (%p590) target = $region68
        $region67: #{cnet_v5_2_forward.1} parent=11 // pred_region
          _
        $region68: #{cnet_v5_2_forward.1} parent=11 // pred_fallthru
          _
        // Predicated region
        $region69: #{cnet_v5_2_forward.1} parent=11 // pred_check
          %p593 = pneg %p373
        $region70: #{cnet_v5_2_forward.1} parent=11 // pred_check_branch
          %595 = sbr.rel (%p593) target = $region72
        $region71: #{cnet_v5_2_forward.1} parent=11 // pred_region
          _
        $region72: #{cnet_v5_2_forward.1} parent=11 // pred_fallthru
          _
        // Predicated region
        $region73: #{cnet_v5_2_forward.1} parent=11 // pred_check
          %p596 = pneg %p394
        $region74: #{cnet_v5_2_forward.1} parent=11 // pred_check_branch
          %598 = sbr.rel (%p596) target = $region76
        $region75: #{cnet_v5_2_forward.1} parent=11 // pred_region
          _
        $region76: #{cnet_v5_2_forward.1} parent=11 // pred_fallthru
          _
        // Predicated region
        $region77: #{cnet_v5_2_forward.1} parent=11 // pred_check
          %p599 = pneg %p415
        $region78: #{cnet_v5_2_forward.1} parent=11 // pred_check_branch
          %601 = sbr.rel (%p599) target = $region80
        $region79: #{cnet_v5_2_forward.1} parent=11 // pred_region
          %603 = vsyncadd [#allocation6], 0
          %s604 = sshll.u32 %s17, 4
          %s605 = int_to_ptr.hbm [resolvable:$true] %s604
          %s606 = sshll.u32 [#allocation5], 4
          %s607 = int_to_ptr.vmem [resolvable:$true] %s606
          %612 = dma.hbm_to_vmem [thread:$0]  %s605, 16384, %s607, [#allocation6], 256, 256, 16
        $region80: #{cnet_v5_2_forward.1} parent=11 // pred_fallthru
          _
        // Predicated region
        $region81: #{cnet_v5_2_forward.1} parent=11 // pred_check
          %p613 = pneg %p436
        $region82: #{cnet_v5_2_forward.1} parent=11 // pred_check_branch
          %615 = sbr.rel (%p613) target = $region84
        $region83: #{cnet_v5_2_forward.1} parent=11 // pred_region
          _
        $region84: #{cnet_v5_2_forward.1} parent=11 // pred_fallthru
          _
        // Predicated region
        $region85: #{cnet_v5_2_forward.1} parent=11 // pred_check
          %p616 = pneg %p457
        $region86: #{cnet_v5_2_forward.1} parent=11 // pred_check_branch
          %618 = sbr.rel (%p616) target = $region88
        $region87: #{cnet_v5_2_forward.1} parent=11 // pred_region
          _
        $region88: #{cnet_v5_2_forward.1} parent=11 // pred_fallthru
          _
        // Predicated region
        $region89: #{cnet_v5_2_forward.1} parent=11 // pred_check
          %p619 = pneg %p478
        $region90: #{cnet_v5_2_forward.1} parent=11 // pred_check_branch
          %621 = sbr.rel (%p619) target = $region92
        $region91: #{cnet_v5_2_forward.1} parent=11 // pred_region
          _
        $region92: #{cnet_v5_2_forward.1} parent=11 // pred_fallthru
          _
        // Predicated region
        $region93: #{cnet_v5_2_forward.1} parent=11 // pred_check
          %p622 = pneg %p499
        $region94: #{cnet_v5_2_forward.1} parent=11 // pred_check_branch
          %624 = sbr.rel (%p622) target = $region96
        $region95: #{cnet_v5_2_forward.1} parent=11 // pred_region
          _
        $region96: #{cnet_v5_2_forward.1} parent=11 // pred_fallthru
          _
      $region12: #{cnet_v5_2_forward.1} parent=5 // pred_fallthru
        _
      %p625 = scmp.lt.s32.totalorder %s32, 2
      // Predicated region
      $region97: #{cnet_v5_2_forward.1} parent=5 // pred_check
        %p626 = pneg %p625
      $region98: #{cnet_v5_2_forward.1} parent=5 // pred_check_branch
        %628 = sbr.rel (%p626) target = $region100
      $region99: #{cnet_v5_2_forward.1} parent=5 // pred_region
        // Predicated region
        $region101: #{cnet_v5_2_forward.1} parent=99 // pred_check
          %p629 = pneg %p52
        $region102: #{cnet_v5_2_forward.1} parent=99 // pred_check_branch
          %631 = sbr.rel (%p629) target = $region104
        $region103: #{cnet_v5_2_forward.1} parent=99 // pred_region
          %p632 = scmp.lt.s32.totalorder %s32, 1
          %s633 = scalar_select %p632, %s32, 1
          %s634 = smul.addr %s633, 49
          %s635 = smul.addr %s634, 8
          %s636 = scalar_lea.vmem %s0, %s635
        $region104: #{cnet_v5_2_forward.1} parent=99 // pred_fallthru
          _
      $region100: #{cnet_v5_2_forward.1} parent=5 // pred_fallthru
        _
      %p637 = scmp.le.s32.totalorder 1, %s32
      %p638 = scmp.lt.s32.totalorder %s32, 3
      %p639 = pnand %p637, %p638
      %p640 = pneg %p639
      // Predicated region
      $region105: #{cnet_v5_2_forward.1} parent=5 // pred_check
        _
      $region106: #{cnet_v5_2_forward.1} parent=5 // pred_check_branch
        %642 = sbr.rel (%p639) target = $region108
      $region107: #{cnet_v5_2_forward.1} parent=5 // pred_region
        %s643 = ssub.s32 %s32, 1
        // Predicated region
        $region109: #{cnet_v5_2_forward.1} parent=107 // pred_check
          %p644 = pneg %p247
        $region110: #{cnet_v5_2_forward.1} parent=107 // pred_check_branch
          %646 = sbr.rel (%p644) target = $region112
        $region111: #{cnet_v5_2_forward.1} parent=107 // pred_region
          %648 = dma.done [#allocation4], 16384
        $region112: #{cnet_v5_2_forward.1} parent=107 // pred_fallthru
          _
        // Predicated region
        $region113: #{cnet_v5_2_forward.1} parent=107 // pred_check
          %p649 = pneg %p415
        $region114: #{cnet_v5_2_forward.1} parent=107 // pred_check_branch
          %651 = sbr.rel (%p649) target = $region116
        $region115: #{cnet_v5_2_forward.1} parent=107 // pred_region
          %653 = dma.done [#allocation6], 16384
        $region116: #{cnet_v5_2_forward.1} parent=107 // pred_fallthru
          _
        %p654 = scmp.lt.s32.totalorder %s37, 1
        %s655 = scalar_select %p654, %s37, 1
        %s656 = smul.addr %s655, 49
        %s657 = smul.addr %s656, 8
        %s658 = scalar_lea.vmem %s0, %s657
        %p659 = pneg %p58
        %p660 = pneg %p55
        %p661 = pneg %p79
        %p662 = pneg %p76
        %p663 = pneg %p100
        %p664 = pneg %p97
        %p665 = pneg %p121
        %p666 = pneg %p118
        %p667 = pneg %p142
        %p668 = pneg %p139
        %p669 = pneg %p163
        %p670 = pneg %p160
        %p671 = pneg %p184
        %p672 = pneg %p181
        %p673 = pneg %p205
        %p674 = pneg %p202
        %p675 = pneg %p226
        %p676 = pneg %p223
        %p677 = pneg %p247
        %p678 = pneg %p244
        %p679 = pneg %p268
        %p680 = pneg %p265
        %p681 = pneg %p289
        %p682 = pneg %p286
        %p683 = pneg %p310
        %p684 = pneg %p307
        %p685 = pneg %p331
        %p686 = pneg %p328
        %p687 = pneg %p352
        %p688 = pneg %p349
        %p689 = pneg %p373
        %p690 = pneg %p370
        %p691 = pneg %p394
        %p692 = pneg %p391
        %p693 = pneg %p415
        %p694 = pneg %p412
        %p695 = pneg %p436
        %p696 = pneg %p433
        %p697 = pneg %p457
        %p698 = pneg %p454
        %p699 = pneg %p478
        %p700 = pneg %p475
        %p701 = pneg %p499
        %p702 = pneg %p496
        %p703 = pneg %p525
        %p704 = pneg %p522
        %p705 = scmp.lt.s32.totalorder %s37, 1
        %s706 = scalar_select %p705, %s37, 1
        %s707 = scalar_lea.vmem %s22, %s706
        %p708 = scmp.lt.s32.totalorder %s37, 1
        %s709 = scalar_select %p708, %s37, 1
        %s710 = smul.addr %s709, 49
        %s711 = smul.addr %s710, 8
        %s712 = scalar_lea.vmem %s0, %s711
        %p713 = scmp.lt.s32.totalorder %s37, 1
        %s714 = scalar_select %p713, %s37, 1
        %s715 = scalar_lea.vmem %s22, %s714
        %v716 = vld [vmem:[%s712] sm:$0xff]
        %v717 = vld [vmem:[%s712 + $0x8] sm:$0xff]
        %v718 = vld [vmem:[%s712 + $0x10] sm:$0xff]
        %v719 = vld [vmem:[%s712 + $0x18] sm:$0xff]
        %v720 = vld [vmem:[%s712 + $0x20] sm:$0xff]
        %v721 = vld [vmem:[%s712 + $0x28] sm:$0xff]
        %v722 = vld [vmem:[%s712 + $0x30] sm:$0xff]
        %v723 = vld [vmem:[%s712 + $0x38] sm:$0xff]
        %v724 = vld [vmem:[%s712 + $0x40] sm:$0xff]
        %v725 = vld [vmem:[%s712 + $0x48] sm:$0xff]
        %v726 = vld [vmem:[%s712 + $0x50] sm:$0xff]
        %v727 = vld [vmem:[%s712 + $0x58] sm:$0xff]
        %v728 = vld [vmem:[%s712 + $0x60] sm:$0xff]
        %v729 = vld [vmem:[%s712 + $0x68] sm:$0xff]
        %v730 = vld [vmem:[%s712 + $0x70] sm:$0xff]
        %v731 = vld [vmem:[%s712 + $0x78] sm:$0xff]
        %v732 = vld [vmem:[%s712 + $0x80] sm:$0xff]
        %v733 = vld [vmem:[%s712 + $0x88] sm:$0xff]
        %v734 = vld [vmem:[%s712 + $0x90] sm:$0xff]
        %v735 = vld [vmem:[%s712 + $0x98] sm:$0xff]
        %v736 = vld [vmem:[%s712 + $0xa0] sm:$0xff]
        %v737 = vld [vmem:[%s712 + $0xa8] sm:$0xff]
        %v738 = vld [vmem:[%s712 + $0xb0] sm:$0xff]
        %v739 = vld [vmem:[%s712 + $0xb8] sm:$0xff]
        %v740 = vld [vmem:[%s712 + $0xc0] sm:$0xff]
        %v741 = vld [vmem:[%s712 + $0xc8] sm:$0xff]
        %v742 = vld [vmem:[%s712 + $0xd0] sm:$0xff]
        %v743 = vld [vmem:[%s712 + $0xd8] sm:$0xff]
        %v744 = vld [vmem:[%s712 + $0xe0] sm:$0xff]
        %v745 = vld [vmem:[%s712 + $0xe8] sm:$0xff]
        %v746 = vld [vmem:[%s712 + $0xf0] sm:$0xff]
        %v747 = vld [vmem:[%s712 + $0xf8] sm:$0xff]
        %v748 = vld [vmem:[%s712 + $0x100] sm:$0xff]
        %v749 = vld [vmem:[%s712 + $0x108] sm:$0xff]
        %v750 = vld [vmem:[%s712 + $0x110] sm:$0xff]
        %v751 = vld [vmem:[%s712 + $0x118] sm:$0xff]
        %v752 = vld [vmem:[%s712 + $0x120] sm:$0xff]
        %v753 = vld [vmem:[%s712 + $0x128] sm:$0xff]
        %v754 = vld [vmem:[%s712 + $0x130] sm:$0xff]
        %v755 = vld [vmem:[%s712 + $0x138] sm:$0xff]
        %v756 = vld [vmem:[%s712 + $0x140] sm:$0xff]
        %v757 = vld [vmem:[%s712 + $0x148] sm:$0xff]
        %v758 = vld [vmem:[%s712 + $0x150] sm:$0xff]
        %v759 = vld [vmem:[%s712 + $0x158] sm:$0xff]
        %v760 = vld [vmem:[%s712 + $0x160] sm:$0xff]
        %v761 = vld [vmem:[%s712 + $0x168] sm:$0xff]
        %v762 = vld [vmem:[%s712 + $0x170] sm:$0xff]
        %v763 = vld [vmem:[%s712 + $0x178] sm:$0xff]
        %v764 = vld [vmem:[%s712 + $0x180] sm:$0x3f]
        %v765 = vld [vmem:[%s1] sm:$0xff]
        %v766 = vld [vmem:[%s1 + $0x8] sm:$0xff]
        %v767 = vld [vmem:[%s1 + $0x10] sm:$0xff]
        %v768 = vld [vmem:[%s1 + $0x18] sm:$0xff]
        %v769 = vld [vmem:[%s1 + $0x20] sm:$0xff]
        %v770 = vld [vmem:[%s1 + $0x28] sm:$0xf]
        %vm771 = vcmask 359424
        %v773 = vsel %vm771, %v716, 0
        %v776 = vsel %vm771, %v717, 0
        %v779 = vsel %vm771, %v718, 0
        %v782 = vsel %vm771, %v719, 0
        %v785 = vsel %vm771, %v720, 0
        %v788 = vsel %vm771, %v721, 0
        %v791 = vsel %vm771, %v722, 0
        %v794 = vsel %vm771, %v723, 0
        %v797 = vsel %vm771, %v724, 0
        %v800 = vsel %vm771, %v725, 0
        %v803 = vsel %vm771, %v726, 0
        %v806 = vsel %vm771, %v727, 0
        %v809 = vsel %vm771, %v728, 0
        %v812 = vsel %vm771, %v729, 0
        %v815 = vsel %vm771, %v730, 0
        %v818 = vsel %vm771, %v731, 0
        %v821 = vsel %vm771, %v732, 0
        %v824 = vsel %vm771, %v733, 0
        %v827 = vsel %vm771, %v734, 0
        %v830 = vsel %vm771, %v735, 0
        %v833 = vsel %vm771, %v736, 0
        %v836 = vsel %vm771, %v737, 0
        %v839 = vsel %vm771, %v738, 0
        %v842 = vsel %vm771, %v739, 0
        %v845 = vsel %vm771, %v740, 0
        %v848 = vsel %vm771, %v741, 0
        %v851 = vsel %vm771, %v742, 0
        %v854 = vsel %vm771, %v743, 0
        %v857 = vsel %vm771, %v744, 0
        %v860 = vsel %vm771, %v745, 0
        %v863 = vsel %vm771, %v746, 0
        %v866 = vsel %vm771, %v747, 0
        %v869 = vsel %vm771, %v748, 0
        %v872 = vsel %vm771, %v749, 0
        %v875 = vsel %vm771, %v750, 0
        %v878 = vsel %vm771, %v751, 0
        %v881 = vsel %vm771, %v752, 0
        %v884 = vsel %vm771, %v753, 0
        %v887 = vsel %vm771, %v754, 0
        %v890 = vsel %vm771, %v755, 0
        %v893 = vsel %vm771, %v756, 0
        %v896 = vsel %vm771, %v757, 0
        %v899 = vsel %vm771, %v758, 0
        %v902 = vsel %vm771, %v759, 0
        %v905 = vsel %vm771, %v760, 0
        %v908 = vsel %vm771, %v761, 0
        %v911 = vsel %vm771, %v762, 0
        %v914 = vsel %vm771, %v763, 0
        %v917 = vsel %vm771, %v764, 0
        %vm919 = vcmask 1043456
        %v921 = vsel %vm919, %v770, 0
        %923 = vmatpush.msra.mxu0 0.0
        %924 = vmatpush.msra.mxu0 0.0
        %925 = vmatpush.msra.mxu0 0.0
        %926 = vmatpush.msra.mxu0 0.0
        %927 = vmatpush.msra.mxu0 0.0
        %928 = vmatpush.msra.mxu0 0.0
        %929 = vmatpush.msra.mxu0 0.0
        %930 = vmatpush.msra.mxu0 0.0
        %931 = vmatpush.msra.mxu0 0.0
        %932 = vmatpush.msra.mxu0 0.0
        %933 = vmatpush.msra.mxu0 %v921
        %934 = vmatpush.msra.mxu0 %v769
        %935 = vmatpush.msra.mxu0 %v768
        %936 = vmatpush.msra.mxu0 %v767
        %937 = vmatpush.msra.mxu0 %v766
        %938 = vmatpush.msra.mxu0 %v765
        %939 = vmatmul.f32.gmra.mxu0 %v773
        %v940 = vpop.f32.mrf.mxu0
        %v941 = vadd.f32 0.0, %v940
        %942 = vmatmul.f32.gmra.mxu0 %v776
        %v943 = vpop.f32.mrf.mxu0
        %v944 = vadd.f32 0.0, %v943
        %945 = vmatmul.f32.gmra.mxu0 %v779
        %v946 = vpop.f32.mrf.mxu0
        %v947 = vadd.f32 0.0, %v946
        %948 = vmatmul.f32.gmra.mxu0 %v782
        %v949 = vpop.f32.mrf.mxu0
        %v950 = vadd.f32 0.0, %v949
        %951 = vmatmul.f32.gmra.mxu0 %v785
        %v952 = vpop.f32.mrf.mxu0
        %v953 = vadd.f32 0.0, %v952
        %954 = vmatmul.f32.gmra.mxu0 %v788
        %v955 = vpop.f32.mrf.mxu0
        %v956 = vadd.f32 0.0, %v955
        %957 = vmatmul.f32.gmra.mxu0 %v791
        %v958 = vpop.f32.mrf.mxu0
        %v959 = vadd.f32 0.0, %v958
        %960 = vmatmul.f32.gmra.mxu0 %v794
        %v961 = vpop.f32.mrf.mxu0
        %v962 = vadd.f32 0.0, %v961
        %963 = vmatmul.f32.gmra.mxu0 %v797
        %v964 = vpop.f32.mrf.mxu0
        %v965 = vadd.f32 0.0, %v964
        %966 = vmatmul.f32.gmra.mxu0 %v800
        %v967 = vpop.f32.mrf.mxu0
        %v968 = vadd.f32 0.0, %v967
        %969 = vmatmul.f32.gmra.mxu0 %v803
        %v970 = vpop.f32.mrf.mxu0
        %v971 = vadd.f32 0.0, %v970
        %972 = vmatmul.f32.gmra.mxu0 %v806
        %v973 = vpop.f32.mrf.mxu0
        %v974 = vadd.f32 0.0, %v973
        %975 = vmatmul.f32.gmra.mxu0 %v809
        %v976 = vpop.f32.mrf.mxu0
        %v977 = vadd.f32 0.0, %v976
        %978 = vmatmul.f32.gmra.mxu0 %v812
        %v979 = vpop.f32.mrf.mxu0
        %v980 = vadd.f32 0.0, %v979
        %981 = vmatmul.f32.gmra.mxu0 %v815
        %v982 = vpop.f32.mrf.mxu0
        %v983 = vadd.f32 0.0, %v982
        %984 = vmatmul.f32.gmra.mxu0 %v818
        %v985 = vpop.f32.mrf.mxu0
        %v986 = vadd.f32 0.0, %v985
        %987 = vmatmul.f32.gmra.mxu0 %v821
        %v988 = vpop.f32.mrf.mxu0
        %v989 = vadd.f32 0.0, %v988
        %990 = vmatmul.f32.gmra.mxu0 %v824
        %v991 = vpop.f32.mrf.mxu0
        %v992 = vadd.f32 0.0, %v991
        %993 = vmatmul.f32.gmra.mxu0 %v827
        %v994 = vpop.f32.mrf.mxu0
        %v995 = vadd.f32 0.0, %v994
        %996 = vmatmul.f32.gmra.mxu0 %v830
        %v997 = vpop.f32.mrf.mxu0
        %v998 = vadd.f32 0.0, %v997
        %999 = vmatmul.f32.gmra.mxu0 %v833
        %v1000 = vpop.f32.mrf.mxu0
        %v1001 = vadd.f32 0.0, %v1000
        %1002 = vmatmul.f32.gmra.mxu0 %v836
        %v1003 = vpop.f32.mrf.mxu0
        %v1004 = vadd.f32 0.0, %v1003
        %1005 = vmatmul.f32.gmra.mxu0 %v839
        %v1006 = vpop.f32.mrf.mxu0
        %v1007 = vadd.f32 0.0, %v1006
        %1008 = vmatmul.f32.gmra.mxu0 %v842
        %v1009 = vpop.f32.mrf.mxu0
        %v1010 = vadd.f32 0.0, %v1009
        %1011 = vmatmul.f32.gmra.mxu0 %v845
        %v1012 = vpop.f32.mrf.mxu0
        %v1013 = vadd.f32 0.0, %v1012
        %1014 = vmatmul.f32.gmra.mxu0 %v848
        %v1015 = vpop.f32.mrf.mxu0
        %v1016 = vadd.f32 0.0, %v1015
        %1017 = vmatmul.f32.gmra.mxu0 %v851
        %v1018 = vpop.f32.mrf.mxu0
        %v1019 = vadd.f32 0.0, %v1018
        %1020 = vmatmul.f32.gmra.mxu0 %v854
        %v1021 = vpop.f32.mrf.mxu0
        %v1022 = vadd.f32 0.0, %v1021
        %1023 = vmatmul.f32.gmra.mxu0 %v857
        %v1024 = vpop.f32.mrf.mxu0
        %v1025 = vadd.f32 0.0, %v1024
        %1026 = vmatmul.f32.gmra.mxu0 %v860
        %v1027 = vpop.f32.mrf.mxu0
        %v1028 = vadd.f32 0.0, %v1027
        %1029 = vmatmul.f32.gmra.mxu0 %v863
        %v1030 = vpop.f32.mrf.mxu0
        %v1031 = vadd.f32 0.0, %v1030
        %1032 = vmatmul.f32.gmra.mxu0 %v866
        %v1033 = vpop.f32.mrf.mxu0
        %v1034 = vadd.f32 0.0, %v1033
        %1035 = vmatmul.f32.gmra.mxu0 %v869
        %v1036 = vpop.f32.mrf.mxu0
        %v1037 = vadd.f32 0.0, %v1036
        %1038 = vmatmul.f32.gmra.mxu0 %v872
        %v1039 = vpop.f32.mrf.mxu0
        %v1040 = vadd.f32 0.0, %v1039
        %1041 = vmatmul.f32.gmra.mxu0 %v875
        %v1042 = vpop.f32.mrf.mxu0
        %v1043 = vadd.f32 0.0, %v1042
        %1044 = vmatmul.f32.gmra.mxu0 %v878
        %v1045 = vpop.f32.mrf.mxu0
        %v1046 = vadd.f32 0.0, %v1045
        %1047 = vmatmul.f32.gmra.mxu0 %v881
        %v1048 = vpop.f32.mrf.mxu0
        %v1049 = vadd.f32 0.0, %v1048
        %1050 = vmatmul.f32.gmra.mxu0 %v884
        %v1051 = vpop.f32.mrf.mxu0
        %v1052 = vadd.f32 0.0, %v1051
        %1053 = vmatmul.f32.gmra.mxu0 %v887
        %v1054 = vpop.f32.mrf.mxu0
        %v1055 = vadd.f32 0.0, %v1054
        %1056 = vmatmul.f32.gmra.mxu0 %v890
        %v1057 = vpop.f32.mrf.mxu0
        %v1058 = vadd.f32 0.0, %v1057
        %1059 = vmatmul.f32.gmra.mxu0 %v893
        %v1060 = vpop.f32.mrf.mxu0
        %v1061 = vadd.f32 0.0, %v1060
        %1062 = vmatmul.f32.gmra.mxu0 %v896
        %v1063 = vpop.f32.mrf.mxu0
        %v1064 = vadd.f32 0.0, %v1063
        %1065 = vmatmul.f32.gmra.mxu0 %v899
        %v1066 = vpop.f32.mrf.mxu0
        %v1067 = vadd.f32 0.0, %v1066
        %1068 = vmatmul.f32.gmra.mxu0 %v902
        %v1069 = vpop.f32.mrf.mxu0
        %v1070 = vadd.f32 0.0, %v1069
        %1071 = vmatmul.f32.gmra.mxu0 %v905
        %v1072 = vpop.f32.mrf.mxu0
        %v1073 = vadd.f32 0.0, %v1072
        %1074 = vmatmul.f32.gmra.mxu0 %v908
        %v1075 = vpop.f32.mrf.mxu0
        %v1076 = vadd.f32 0.0, %v1075
        %1077 = vmatmul.f32.gmra.mxu0 %v911
        %v1078 = vpop.f32.mrf.mxu0
        %v1079 = vadd.f32 0.0, %v1078
        %1080 = vmatmul.f32.gmra.mxu0 %v914
        %v1081 = vpop.f32.mrf.mxu0
        %v1082 = vadd.f32 0.0, %v1081
        %1083 = vmatmul.f32.gmra.mxu0 %v917
        %v1084 = vpop.f32.mrf.mxu0
        %v1085 = vadd.f32 0.0, %v1084
        %1086 = vdwg.mxu0
        %v1087 = vld [vmem:[%s2] sm:$0x1]
        %v1089 = vperm.slane %v1087, 0
        %v1091 = vmul.f32 %v941, %v1089
        %v1092 = vmul.f32 %v944, %v1089
        %v1093 = vmul.f32 %v947, %v1089
        %v1094 = vmul.f32 %v950, %v1089
        %v1095 = vmul.f32 %v953, %v1089
        %v1096 = vmul.f32 %v956, %v1089
        %v1097 = vmul.f32 %v959, %v1089
        %v1098 = vmul.f32 %v962, %v1089
        %v1099 = vmul.f32 %v965, %v1089
        %v1100 = vmul.f32 %v968, %v1089
        %v1101 = vmul.f32 %v971, %v1089
        %v1102 = vmul.f32 %v974, %v1089
        %v1103 = vmul.f32 %v977, %v1089
        %v1104 = vmul.f32 %v980, %v1089
        %v1105 = vmul.f32 %v983, %v1089
        %v1106 = vmul.f32 %v986, %v1089
        %v1107 = vmul.f32 %v989, %v1089
        %v1108 = vmul.f32 %v992, %v1089
        %v1109 = vmul.f32 %v995, %v1089
        %v1110 = vmul.f32 %v998, %v1089
        %v1111 = vmul.f32 %v1001, %v1089
        %v1112 = vmul.f32 %v1004, %v1089
        %v1113 = vmul.f32 %v1007, %v1089
        %v1114 = vmul.f32 %v1010, %v1089
        %v1115 = vmul.f32 %v1013, %v1089
        %v1116 = vmul.f32 %v1016, %v1089
        %v1117 = vmul.f32 %v1019, %v1089
        %v1118 = vmul.f32 %v1022, %v1089
        %v1119 = vmul.f32 %v1025, %v1089
        %v1120 = vmul.f32 %v1028, %v1089
        %v1121 = vmul.f32 %v1031, %v1089
        %v1122 = vmul.f32 %v1034, %v1089
        %v1123 = vmul.f32 %v1037, %v1089
        %v1124 = vmul.f32 %v1040, %v1089
        %v1125 = vmul.f32 %v1043, %v1089
        %v1126 = vmul.f32 %v1046, %v1089
        %v1127 = vmul.f32 %v1049, %v1089
        %v1128 = vmul.f32 %v1052, %v1089
        %v1129 = vmul.f32 %v1055, %v1089
        %v1130 = vmul.f32 %v1058, %v1089
        %v1131 = vmul.f32 %v1061, %v1089
        %v1132 = vmul.f32 %v1064, %v1089
        %v1133 = vmul.f32 %v1067, %v1089
        %v1134 = vmul.f32 %v1070, %v1089
        %v1135 = vmul.f32 %v1073, %v1089
        %v1136 = vmul.f32 %v1076, %v1089
        %v1137 = vmul.f32 %v1079, %v1089
        %v1138 = vmul.f32 %v1082, %v1089
        %v1139 = vmul.f32 %v1085, %v1089
        %v1140 = vld [vmem:[%s3] sm:$0x1]
        %v1142 = vperm.slane %v1140, 0
        %v1144 = vadd.f32 %v1091, %v1142
        %v1145 = vadd.f32 %v1092, %v1142
        %v1146 = vadd.f32 %v1093, %v1142
        %v1147 = vadd.f32 %v1094, %v1142
        %v1148 = vadd.f32 %v1095, %v1142
        %v1149 = vadd.f32 %v1096, %v1142
        %v1150 = vadd.f32 %v1097, %v1142
        %v1151 = vadd.f32 %v1098, %v1142
        %v1152 = vadd.f32 %v1099, %v1142
        %v1153 = vadd.f32 %v1100, %v1142
        %v1154 = vadd.f32 %v1101, %v1142
        %v1155 = vadd.f32 %v1102, %v1142
        %v1156 = vadd.f32 %v1103, %v1142
        %v1157 = vadd.f32 %v1104, %v1142
        %v1158 = vadd.f32 %v1105, %v1142
        %v1159 = vadd.f32 %v1106, %v1142
        %v1160 = vadd.f32 %v1107, %v1142
        %v1161 = vadd.f32 %v1108, %v1142
        %v1162 = vadd.f32 %v1109, %v1142
        %v1163 = vadd.f32 %v1110, %v1142
        %v1164 = vadd.f32 %v1111, %v1142
        %v1165 = vadd.f32 %v1112, %v1142
        %v1166 = vadd.f32 %v1113, %v1142
        %v1167 = vadd.f32 %v1114, %v1142
        %v1168 = vadd.f32 %v1115, %v1142
        %v1169 = vadd.f32 %v1116, %v1142
        %v1170 = vadd.f32 %v1117, %v1142
        %v1171 = vadd.f32 %v1118, %v1142
        %v1172 = vadd.f32 %v1119, %v1142
        %v1173 = vadd.f32 %v1120, %v1142
        %v1174 = vadd.f32 %v1121, %v1142
        %v1175 = vadd.f32 %v1122, %v1142
        %v1176 = vadd.f32 %v1123, %v1142
        %v1177 = vadd.f32 %v1124, %v1142
        %v1178 = vadd.f32 %v1125, %v1142
        %v1179 = vadd.f32 %v1126, %v1142
        %v1180 = vadd.f32 %v1127, %v1142
        %v1181 = vadd.f32 %v1128, %v1142
        %v1182 = vadd.f32 %v1129, %v1142
        %v1183 = vadd.f32 %v1130, %v1142
        %v1184 = vadd.f32 %v1131, %v1142
        %v1185 = vadd.f32 %v1132, %v1142
        %v1186 = vadd.f32 %v1133, %v1142
        %v1187 = vadd.f32 %v1134, %v1142
        %v1188 = vadd.f32 %v1135, %v1142
        %v1189 = vadd.f32 %v1136, %v1142
        %v1190 = vadd.f32 %v1137, %v1142
        %v1191 = vadd.f32 %v1138, %v1142
        %v1192 = vadd.f32 %v1139, %v1142
        %v1193 = vmax.f32 %v1144, 0.0
        %v1194 = vmax.f32 %v1145, 0.0
        %v1195 = vmax.f32 %v1146, 0.0
        %v1196 = vmax.f32 %v1147, 0.0
        %v1197 = vmax.f32 %v1148, 0.0
        %v1198 = vmax.f32 %v1149, 0.0
        %v1199 = vmax.f32 %v1150, 0.0
        %v1200 = vmax.f32 %v1151, 0.0
        %v1201 = vmax.f32 %v1152, 0.0
        %v1202 = vmax.f32 %v1153, 0.0
        %v1203 = vmax.f32 %v1154, 0.0
        %v1204 = vmax.f32 %v1155, 0.0
        %v1205 = vmax.f32 %v1156, 0.0
        %v1206 = vmax.f32 %v1157, 0.0
        %v1207 = vmax.f32 %v1158, 0.0
        %v1208 = vmax.f32 %v1159, 0.0
        %v1209 = vmax.f32 %v1160, 0.0
        %v1210 = vmax.f32 %v1161, 0.0
        %v1211 = vmax.f32 %v1162, 0.0
        %v1212 = vmax.f32 %v1163, 0.0
        %v1213 = vmax.f32 %v1164, 0.0
        %v1214 = vmax.f32 %v1165, 0.0
        %v1215 = vmax.f32 %v1166, 0.0
        %v1216 = vmax.f32 %v1167, 0.0
        %v1217 = vmax.f32 %v1168, 0.0
        %v1218 = vmax.f32 %v1169, 0.0
        %v1219 = vmax.f32 %v1170, 0.0
        %v1220 = vmax.f32 %v1171, 0.0
        %v1221 = vmax.f32 %v1172, 0.0
        %v1222 = vmax.f32 %v1173, 0.0
        %v1223 = vmax.f32 %v1174, 0.0
        %v1224 = vmax.f32 %v1175, 0.0
        %v1225 = vmax.f32 %v1176, 0.0
        %v1226 = vmax.f32 %v1177, 0.0
        %v1227 = vmax.f32 %v1178, 0.0
        %v1228 = vmax.f32 %v1179, 0.0
        %v1229 = vmax.f32 %v1180, 0.0
        %v1230 = vmax.f32 %v1181, 0.0
        %v1231 = vmax.f32 %v1182, 0.0
        %v1232 = vmax.f32 %v1183, 0.0
        %v1233 = vmax.f32 %v1184, 0.0
        %v1234 = vmax.f32 %v1185, 0.0
        %v1235 = vmax.f32 %v1186, 0.0
        %v1236 = vmax.f32 %v1187, 0.0
        %v1237 = vmax.f32 %v1188, 0.0
        %v1238 = vmax.f32 %v1189, 0.0
        %v1239 = vmax.f32 %v1190, 0.0
        %v1240 = vmax.f32 %v1191, 0.0
        %v1241 = vmax.f32 %v1192, 0.0
        %v1242 = vld [vmem:[%s4] sm:$0xff]
        %v1243 = vld [vmem:[%s4 + $0x8] sm:$0xff]
        %v1244 = vld [vmem:[%s4 + $0x10] sm:$0xff]
        %v1245 = vld [vmem:[%s4 + $0x18] sm:$0xff]
        %v1246 = vld [vmem:[%s4 + $0x20] sm:$0xff]
        %v1247 = vld [vmem:[%s4 + $0x28] sm:$0xff]
        %v1248 = vld [vmem:[%s4 + $0x30] sm:$0xff]
        %v1249 = vld [vmem:[%s4 + $0x38] sm:$0xff]
        %v1250 = vld [vmem:[%s4 + $0x40] sm:$0xff]
        %v1251 = vld [vmem:[%s4 + $0x48] sm:$0xff]
        %v1252 = vld [vmem:[%s4 + $0x50] sm:$0xff]
        %v1253 = vld [vmem:[%s4 + $0x58] sm:$0xff]
        %v1254 = vld [vmem:[%s4 + $0x60] sm:$0xff]
        %v1255 = vld [vmem:[%s4 + $0x68] sm:$0xff]
        %v1256 = vld [vmem:[%s4 + $0x70] sm:$0xff]
        %v1257 = vld [vmem:[%s4 + $0x78] sm:$0xff]
        %v1258 = vld [vmem:[%s4 + $0x80] sm:$0xff]
        %v1259 = vld [vmem:[%s4 + $0x88] sm:$0xff]
        %v1260 = vld [vmem:[%s4 + $0x90] sm:$0xff]
        %v1261 = vld [vmem:[%s4 + $0x98] sm:$0xff]
        %v1262 = vld [vmem:[%s4 + $0xa0] sm:$0xff]
        %v1263 = vld [vmem:[%s4 + $0xa8] sm:$0xff]
        %v1264 = vld [vmem:[%s4 + $0xb0] sm:$0xff]
        %v1265 = vld [vmem:[%s4 + $0xb8] sm:$0xff]
        %v1266 = vld [vmem:[%s4 + $0xc0] sm:$0xff]
        %v1267 = vld [vmem:[%s4 + $0xc8] sm:$0xff]
        %v1268 = vld [vmem:[%s4 + $0xd0] sm:$0xff]
        %v1269 = vld [vmem:[%s4 + $0xd8] sm:$0xff]
        %v1270 = vld [vmem:[%s4 + $0xe0] sm:$0xff]
        %v1271 = vld [vmem:[%s4 + $0xe8] sm:$0xff]
        %v1272 = vld [vmem:[%s4 + $0xf0] sm:$0xff]
        %v1273 = vld [vmem:[%s4 + $0xf8] sm:$0xff]
        %v1274 = vld [vmem:[%s4 + $0x100] sm:$0xff]
        %v1275 = vld [vmem:[%s4 + $0x108] sm:$0xff]
        %v1276 = vld [vmem:[%s4 + $0x110] sm:$0xff]
        %v1277 = vld [vmem:[%s4 + $0x118] sm:$0xff]
        %v1278 = vld [vmem:[%s4 + $0x120] sm:$0xff]
        %v1279 = vld [vmem:[%s4 + $0x128] sm:$0xff]
        %v1280 = vld [vmem:[%s4 + $0x130] sm:$0xff]
        %v1281 = vld [vmem:[%s4 + $0x138] sm:$0xff]
        %v1282 = vld [vmem:[%s4 + $0x140] sm:$0xff]
        %v1283 = vld [vmem:[%s4 + $0x148] sm:$0xff]
        %v1284 = vld [vmem:[%s4 + $0x150] sm:$0xff]
        %v1285 = vld [vmem:[%s4 + $0x158] sm:$0xff]
        %v1286 = vld [vmem:[%s4 + $0x160] sm:$0xff]
        %v1287 = vld [vmem:[%s4 + $0x168] sm:$0xff]
        %v1288 = vld [vmem:[%s4 + $0x170] sm:$0xff]
        %v1289 = vld [vmem:[%s4 + $0x178] sm:$0xff]
        %v1290 = vld [vmem:[%s4 + $0x180] sm:$0xff]
        %v1291 = vld [vmem:[%s4 + $0x188] sm:$0xff]
        %v1292 = vld [vmem:[%s4 + $0x190] sm:$0xff]
        %v1293 = vld [vmem:[%s4 + $0x198] sm:$0xff]
        %v1294 = vld [vmem:[%s4 + $0x1a0] sm:$0xff]
        %v1295 = vld [vmem:[%s4 + $0x1a8] sm:$0xff]
        %v1296 = vld [vmem:[%s4 + $0x1b0] sm:$0xff]
        %v1297 = vld [vmem:[%s4 + $0x1b8] sm:$0xff]
        %v1298 = vld [vmem:[%s4 + $0x1c0] sm:$0xff]
        %v1299 = vld [vmem:[%s4 + $0x1c8] sm:$0xff]
        %v1300 = vld [vmem:[%s4 + $0x1d0] sm:$0xff]
        %v1301 = vld [vmem:[%s4 + $0x1d8] sm:$0xff]
        %v1302 = vld [vmem:[%s4 + $0x1e0] sm:$0xff]
        %v1303 = vld [vmem:[%s4 + $0x1e8] sm:$0xff]
        %v1304 = vld [vmem:[%s4 + $0x1f0] sm:$0xff]
        %v1305 = vld [vmem:[%s4 + $0x1f8] sm:$0xff]
        %v1306 = vld [vmem:[%s4 + $0x200] sm:$0xff]
        %v1307 = vld [vmem:[%s4 + $0x208] sm:$0xff]
        %v1308 = vld [vmem:[%s4 + $0x210] sm:$0xff]
        %v1309 = vld [vmem:[%s4 + $0x218] sm:$0xff]
        %v1310 = vld [vmem:[%s4 + $0x220] sm:$0xff]
        %v1311 = vld [vmem:[%s4 + $0x228] sm:$0xff]
        %v1312 = vld [vmem:[%s4 + $0x230] sm:$0xff]
        %v1313 = vld [vmem:[%s4 + $0x238] sm:$0xff]
        %v1314 = vld [vmem:[%s4 + $0x240] sm:$0xff]
        %v1315 = vld [vmem:[%s4 + $0x248] sm:$0xff]
        %v1316 = vld [vmem:[%s4 + $0x250] sm:$0xff]
        %v1317 = vld [vmem:[%s4 + $0x258] sm:$0xff]
        %v1318 = vld [vmem:[%s4 + $0x260] sm:$0xff]
        %v1319 = vld [vmem:[%s4 + $0x268] sm:$0xff]
        %v1320 = vld [vmem:[%s4 + $0x270] sm:$0xff]
        %v1321 = vld [vmem:[%s4 + $0x278] sm:$0xff]
        %v1322 = vld [vmem:[%s4 + $0x280] sm:$0xff]
        %v1323 = vld [vmem:[%s4 + $0x288] sm:$0xff]
        %v1324 = vld [vmem:[%s4 + $0x290] sm:$0xff]
        %v1325 = vld [vmem:[%s4 + $0x298] sm:$0xff]
        %v1326 = vld [vmem:[%s4 + $0x2a0] sm:$0xff]
        %v1327 = vld [vmem:[%s4 + $0x2a8] sm:$0xff]
        %v1328 = vld [vmem:[%s4 + $0x2b0] sm:$0xff]
        %v1329 = vld [vmem:[%s4 + $0x2b8] sm:$0xff]
        %v1330 = vld [vmem:[%s4 + $0x2c0] sm:$0xff]
        %v1331 = vld [vmem:[%s4 + $0x2c8] sm:$0xff]
        %v1332 = vld [vmem:[%s4 + $0x2d0] sm:$0xff]
        %v1333 = vld [vmem:[%s4 + $0x2d8] sm:$0xff]
        %v1334 = vld [vmem:[%s4 + $0x2e0] sm:$0xff]
        %v1335 = vld [vmem:[%s4 + $0x2e8] sm:$0xff]
        %v1336 = vld [vmem:[%s4 + $0x2f0] sm:$0xff]
        %v1337 = vld [vmem:[%s4 + $0x2f8] sm:$0xff]
        %v1338 = vld [vmem:[%s4 + $0x300] sm:$0x7]
        %v1339 = vld [vmem:[%s4 + $0x308] sm:$0x7]
        %v1340 = vld [vmem:[%s4 + $0x310] sm:$0x7]
        %v1341 = vld [vmem:[%s4 + $0x318] sm:$0x7]
        %vm1342 = vcmask 48128
        %v1344 = vsel %vm1342, %v1245, 0
        %v1347 = vsel %vm1342, %v1249, 0
        %v1350 = vsel %vm1342, %v1253, 0
        %v1353 = vsel %vm1342, %v1257, 0
        %v1356 = vsel %vm1342, %v1261, 0
        %v1359 = vsel %vm1342, %v1265, 0
        %v1362 = vsel %vm1342, %v1269, 0
        %v1365 = vsel %vm1342, %v1273, 0
        %v1368 = vsel %vm1342, %v1277, 0
        %v1371 = vsel %vm1342, %v1281, 0
        %v1374 = vsel %vm1342, %v1285, 0
        %v1377 = vsel %vm1342, %v1289, 0
        %v1380 = vsel %vm1342, %v1293, 0
        %v1383 = vsel %vm1342, %v1297, 0
        %v1386 = vsel %vm1342, %v1301, 0
        %v1389 = vsel %vm1342, %v1305, 0
        %v1392 = vsel %vm1342, %v1309, 0
        %v1395 = vsel %vm1342, %v1313, 0
        %v1398 = vsel %vm1342, %v1317, 0
        %v1401 = vsel %vm1342, %v1321, 0
        %v1404 = vsel %vm1342, %v1325, 0
        %v1407 = vsel %vm1342, %v1329, 0
        %v1410 = vsel %vm1342, %v1333, 0
        %v1413 = vsel %vm1342, %v1337, 0
        %v1416 = vsel %vm1342, %v1341, 0
        %vm1418 = vcmask 1045504
        %v1420 = vsel %vm1418, %v1241, 0
        %1422 = vmatpush.msra.mxu0 %v1208
        %1423 = vmatpush.msra.mxu0 %v1207
        %1424 = vmatpush.msra.mxu0 %v1206
        %1425 = vmatpush.msra.mxu0 %v1205
        %1426 = vmatpush.msra.mxu0 %v1204
        %1427 = vmatpush.msra.mxu0 %v1203
        %1428 = vmatpush.msra.mxu0 %v1202
        %1429 = vmatpush.msra.mxu0 %v1201
        %1430 = vmatpush.msra.mxu0 %v1200
        %1431 = vmatpush.msra.mxu0 %v1199
        %1432 = vmatpush.msra.mxu0 %v1198
        %1433 = vmatpush.msra.mxu0 %v1197
        %1434 = vmatpush.msra.mxu0 %v1196
        %1435 = vmatpush.msra.mxu0 %v1195
        %1436 = vmatpush.msra.mxu0 %v1194
        %1437 = vmatpush.msra.mxu0 %v1193
        %1438 = vmatmul.f32.gmra.mxu0 %v1242
        %v1439 = vpop.f32.mrf.mxu0
        %v1440 = vadd.f32 0.0, %v1439
        %1441 = vmatmul.f32.gmra.mxu0 %v1246
        %v1442 = vpop.f32.mrf.mxu0
        %v1443 = vadd.f32 0.0, %v1442
        %1444 = vmatmul.f32.gmra.mxu0 %v1250
        %v1445 = vpop.f32.mrf.mxu0
        %v1446 = vadd.f32 0.0, %v1445
        %1447 = vmatmul.f32.gmra.mxu0 %v1254
        %v1448 = vpop.f32.mrf.mxu0
        %v1449 = vadd.f32 0.0, %v1448
        %1450 = vmatmul.f32.gmra.mxu0 %v1258
        %v1451 = vpop.f32.mrf.mxu0
        %v1452 = vadd.f32 0.0, %v1451
        %1453 = vmatmul.f32.gmra.mxu0 %v1262
        %v1454 = vpop.f32.mrf.mxu0
        %v1455 = vadd.f32 0.0, %v1454
        %1456 = vmatmul.f32.gmra.mxu0 %v1266
        %v1457 = vpop.f32.mrf.mxu0
        %v1458 = vadd.f32 0.0, %v1457
        %1459 = vmatmul.f32.gmra.mxu0 %v1270
        %v1460 = vpop.f32.mrf.mxu0
        %v1461 = vadd.f32 0.0, %v1460
        %1462 = vmatmul.f32.gmra.mxu0 %v1274
        %v1463 = vpop.f32.mrf.mxu0
        %v1464 = vadd.f32 0.0, %v1463
        %1465 = vmatmul.f32.gmra.mxu0 %v1278
        %v1466 = vpop.f32.mrf.mxu0
        %v1467 = vadd.f32 0.0, %v1466
        %1468 = vmatmul.f32.gmra.mxu0 %v1282
        %v1469 = vpop.f32.mrf.mxu0
        %v1470 = vadd.f32 0.0, %v1469
        %1471 = vmatmul.f32.gmra.mxu0 %v1286
        %v1472 = vpop.f32.mrf.mxu0
        %v1473 = vadd.f32 0.0, %v1472
        %1474 = vmatmul.f32.gmra.mxu0 %v1290
        %v1475 = vpop.f32.mrf.mxu0
        %v1476 = vadd.f32 0.0, %v1475
        %1477 = vmatmul.f32.gmra.mxu0 %v1294
        %v1478 = vpop.f32.mrf.mxu0
        %v1479 = vadd.f32 0.0, %v1478
        %1480 = vmatmul.f32.gmra.mxu0 %v1298
        %v1481 = vpop.f32.mrf.mxu0
        %v1482 = vadd.f32 0.0, %v1481
        %1483 = vmatmul.f32.gmra.mxu0 %v1302
        %v1484 = vpop.f32.mrf.mxu0
        %v1485 = vadd.f32 0.0, %v1484
        %1486 = vmatmul.f32.gmra.mxu0 %v1306
        %v1487 = vpop.f32.mrf.mxu0
        %v1488 = vadd.f32 0.0, %v1487
        %1489 = vmatmul.f32.gmra.mxu0 %v1310
        %v1490 = vpop.f32.mrf.mxu0
        %v1491 = vadd.f32 0.0, %v1490
        %1492 = vmatmul.f32.gmra.mxu0 %v1314
        %v1493 = vpop.f32.mrf.mxu0
        %v1494 = vadd.f32 0.0, %v1493
        %1495 = vmatmul.f32.gmra.mxu0 %v1318
        %v1496 = vpop.f32.mrf.mxu0
        %v1497 = vadd.f32 0.0, %v1496
        %1498 = vmatmul.f32.gmra.mxu0 %v1322
        %v1499 = vpop.f32.mrf.mxu0
        %v1500 = vadd.f32 0.0, %v1499
        %1501 = vmatmul.f32.gmra.mxu0 %v1326
        %v1502 = vpop.f32.mrf.mxu0
        %v1503 = vadd.f32 0.0, %v1502
        %1504 = vmatmul.f32.gmra.mxu0 %v1330
        %v1505 = vpop.f32.mrf.mxu0
        %v1506 = vadd.f32 0.0, %v1505
        %1507 = vmatmul.f32.gmra.mxu0 %v1334
        %v1508 = vpop.f32.mrf.mxu0
        %v1509 = vadd.f32 0.0, %v1508
        %1510 = vmatmul.f32.gmra.mxu0 %v1338
        %v1511 = vpop.f32.mrf.mxu0
        %v1512 = vadd.f32 0.0, %v1511
        %1513 = vdwg.mxu0
        %1514 = vmatpush.msra.mxu0 %v1224
        %1515 = vmatpush.msra.mxu0 %v1223
        %1516 = vmatpush.msra.mxu0 %v1222
        %1517 = vmatpush.msra.mxu0 %v1221
        %1518 = vmatpush.msra.mxu0 %v1220
        %1519 = vmatpush.msra.mxu0 %v1219
        %1520 = vmatpush.msra.mxu0 %v1218
        %1521 = vmatpush.msra.mxu0 %v1217
        %1522 = vmatpush.msra.mxu0 %v1216
        %1523 = vmatpush.msra.mxu0 %v1215
        %1524 = vmatpush.msra.mxu0 %v1214
        %1525 = vmatpush.msra.mxu0 %v1213
        %1526 = vmatpush.msra.mxu0 %v1212
        %1527 = vmatpush.msra.mxu0 %v1211
        %1528 = vmatpush.msra.mxu0 %v1210
        %1529 = vmatpush.msra.mxu0 %v1209
        %1530 = vmatmul.f32.gmra.mxu0 %v1243
        %v1531 = vpop.f32.mrf.mxu0
        %v1532 = vadd.f32 %v1440, %v1531
        %1533 = vmatmul.f32.gmra.mxu0 %v1247
        %v1534 = vpop.f32.mrf.mxu0
        %v1535 = vadd.f32 %v1443, %v1534
        %1536 = vmatmul.f32.gmra.mxu0 %v1251
        %v1537 = vpop.f32.mrf.mxu0
        %v1538 = vadd.f32 %v1446, %v1537
        %1539 = vmatmul.f32.gmra.mxu0 %v1255
        %v1540 = vpop.f32.mrf.mxu0
        %v1541 = vadd.f32 %v1449, %v1540
        %1542 = vmatmul.f32.gmra.mxu0 %v1259
        %v1543 = vpop.f32.mrf.mxu0
        %v1544 = vadd.f32 %v1452, %v1543
        %1545 = vmatmul.f32.gmra.mxu0 %v1263
        %v1546 = vpop.f32.mrf.mxu0
        %v1547 = vadd.f32 %v1455, %v1546
        %1548 = vmatmul.f32.gmra.mxu0 %v1267
        %v1549 = vpop.f32.mrf.mxu0
        %v1550 = vadd.f32 %v1458, %v1549
        %1551 = vmatmul.f32.gmra.mxu0 %v1271
        %v1552 = vpop.f32.mrf.mxu0
        %v1553 = vadd.f32 %v1461, %v1552
        %1554 = vmatmul.f32.gmra.mxu0 %v1275
        %v1555 = vpop.f32.mrf.mxu0
        %v1556 = vadd.f32 %v1464, %v1555
        %1557 = vmatmul.f32.gmra.mxu0 %v1279
        %v1558 = vpop.f32.mrf.mxu0
        %v1559 = vadd.f32 %v1467, %v1558
        %1560 = vmatmul.f32.gmra.mxu0 %v1283
        %v1561 = vpop.f32.mrf.mxu0
        %v1562 = vadd.f32 %v1470, %v1561
        %1563 = vmatmul.f32.gmra.mxu0 %v1287
        %v1564 = vpop.f32.mrf.mxu0
        %v1565 = vadd.f32 %v1473, %v1564
        %1566 = vmatmul.f32.gmra.mxu0 %v1291
        %v1567 = vpop.f32.mrf.mxu0
        %v1568 = vadd.f32 %v1476, %v1567
        %1569 = vmatmul.f32.gmra.mxu0 %v1295
        %v1570 = vpop.f32.mrf.mxu0
        %v1571 = vadd.f32 %v1479, %v1570
        %1572 = vmatmul.f32.gmra.mxu0 %v1299
        %v1573 = vpop.f32.mrf.mxu0
        %v1574 = vadd.f32 %v1482, %v1573
        %1575 = vmatmul.f32.gmra.mxu0 %v1303
        %v1576 = vpop.f32.mrf.mxu0
        %v1577 = vadd.f32 %v1485, %v1576
        %1578 = vmatmul.f32.gmra.mxu0 %v1307
        %v1579 = vpop.f32.mrf.mxu0
        %v1580 = vadd.f32 %v1488, %v1579
        %1581 = vmatmul.f32.gmra.mxu0 %v1311
        %v1582 = vpop.f32.mrf.mxu0
        %v1583 = vadd.f32 %v1491, %v1582
        %1584 = vmatmul.f32.gmra.mxu0 %v1315
        %v1585 = vpop.f32.mrf.mxu0
        %v1586 = vadd.f32 %v1494, %v1585
        %1587 = vmatmul.f32.gmra.mxu0 %v1319
        %v1588 = vpop.f32.mrf.mxu0
        %v1589 = vadd.f32 %v1497, %v1588
        %1590 = vmatmul.f32.gmra.mxu0 %v1323
        %v1591 = vpop.f32.mrf.mxu0
        %v1592 = vadd.f32 %v1500, %v1591
        %1593 = vmatmul.f32.gmra.mxu0 %v1327
        %v1594 = vpop.f32.mrf.mxu0
        %v1595 = vadd.f32 %v1503, %v1594
        %1596 = vmatmul.f32.gmra.mxu0 %v1331
        %v1597 = vpop.f32.mrf.mxu0
        %v1598 = vadd.f32 %v1506, %v1597
        %1599 = vmatmul.f32.gmra.mxu0 %v1335
        %v1600 = vpop.f32.mrf.mxu0
        %v1601 = vadd.f32 %v1509, %v1600
        %1602 = vmatmul.f32.gmra.mxu0 %v1339
        %v1603 = vpop.f32.mrf.mxu0
        %v1604 = vadd.f32 %v1512, %v1603
        %1605 = vdwg.mxu0
        %1606 = vmatpush.msra.mxu0 %v1240
        %1607 = vmatpush.msra.mxu0 %v1239
        %1608 = vmatpush.msra.mxu0 %v1238
        %1609 = vmatpush.msra.mxu0 %v1237
        %1610 = vmatpush.msra.mxu0 %v1236
        %1611 = vmatpush.msra.mxu0 %v1235
        %1612 = vmatpush.msra.mxu0 %v1234
        %1613 = vmatpush.msra.mxu0 %v1233
        %1614 = vmatpush.msra.mxu0 %v1232
        %1615 = vmatpush.msra.mxu0 %v1231
        %1616 = vmatpush.msra.mxu0 %v1230
        %1617 = vmatpush.msra.mxu0 %v1229
        %1618 = vmatpush.msra.mxu0 %v1228
        %1619 = vmatpush.msra.mxu0 %v1227
        %1620 = vmatpush.msra.mxu0 %v1226
        %1621 = vmatpush.msra.mxu0 %v1225
        %1622 = vmatmul.f32.gmra.mxu0 %v1244
        %v1623 = vpop.f32.mrf.mxu0
        %v1624 = vadd.f32 %v1532, %v1623
        %1625 = vmatmul.f32.gmra.mxu0 %v1248
        %v1626 = vpop.f32.mrf.mxu0
        %v1627 = vadd.f32 %v1535, %v1626
        %1628 = vmatmul.f32.gmra.mxu0 %v1252
        %v1629 = vpop.f32.mrf.mxu0
        %v1630 = vadd.f32 %v1538, %v1629
        %1631 = vmatmul.f32.gmra.mxu0 %v1256
        %v1632 = vpop.f32.mrf.mxu0
        %v1633 = vadd.f32 %v1541, %v1632
        %1634 = vmatmul.f32.gmra.mxu0 %v1260
        %v1635 = vpop.f32.mrf.mxu0
        %v1636 = vadd.f32 %v1544, %v1635
        %1637 = vmatmul.f32.gmra.mxu0 %v1264
        %v1638 = vpop.f32.mrf.mxu0
        %v1639 = vadd.f32 %v1547, %v1638
        %1640 = vmatmul.f32.gmra.mxu0 %v1268
        %v1641 = vpop.f32.mrf.mxu0
        %v1642 = vadd.f32 %v1550, %v1641
        %1643 = vmatmul.f32.gmra.mxu0 %v1272
        %v1644 = vpop.f32.mrf.mxu0
        %v1645 = vadd.f32 %v1553, %v1644
        %1646 = vmatmul.f32.gmra.mxu0 %v1276
        %v1647 = vpop.f32.mrf.mxu0
        %v1648 = vadd.f32 %v1556, %v1647
        %1649 = vmatmul.f32.gmra.mxu0 %v1280
        %v1650 = vpop.f32.mrf.mxu0
        %v1651 = vadd.f32 %v1559, %v1650
        %1652 = vmatmul.f32.gmra.mxu0 %v1284
        %v1653 = vpop.f32.mrf.mxu0
        %v1654 = vadd.f32 %v1562, %v1653
        %1655 = vmatmul.f32.gmra.mxu0 %v1288
        %v1656 = vpop.f32.mrf.mxu0
        %v1657 = vadd.f32 %v1565, %v1656
        %1658 = vmatmul.f32.gmra.mxu0 %v1292
        %v1659 = vpop.f32.mrf.mxu0
        %v1660 = vadd.f32 %v1568, %v1659
        %1661 = vmatmul.f32.gmra.mxu0 %v1296
        %v1662 = vpop.f32.mrf.mxu0
        %v1663 = vadd.f32 %v1571, %v1662
        %1664 = vmatmul.f32.gmra.mxu0 %v1300
        %v1665 = vpop.f32.mrf.mxu0
        %v1666 = vadd.f32 %v1574, %v1665
        %1667 = vmatmul.f32.gmra.mxu0 %v1304
        %v1668 = vpop.f32.mrf.mxu0
        %v1669 = vadd.f32 %v1577, %v1668
        %1670 = vmatmul.f32.gmra.mxu0 %v1308
        %v1671 = vpop.f32.mrf.mxu0
        %v1672 = vadd.f32 %v1580, %v1671
        %1673 = vmatmul.f32.gmra.mxu0 %v1312
        %v1674 = vpop.f32.mrf.mxu0
        %v1675 = vadd.f32 %v1583, %v1674
        %1676 = vmatmul.f32.gmra.mxu0 %v1316
        %v1677 = vpop.f32.mrf.mxu0
        %v1678 = vadd.f32 %v1586, %v1677
        %1679 = vmatmul.f32.gmra.mxu0 %v1320
        %v1680 = vpop.f32.mrf.mxu0
        %v1681 = vadd.f32 %v1589, %v1680
        %1682 = vmatmul.f32.gmra.mxu0 %v1324
        %v1683 = vpop.f32.mrf.mxu0
        %v1684 = vadd.f32 %v1592, %v1683
        %1685 = vmatmul.f32.gmra.mxu0 %v1328
        %v1686 = vpop.f32.mrf.mxu0
        %v1687 = vadd.f32 %v1595, %v1686
        %1688 = vmatmul.f32.gmra.mxu0 %v1332
        %v1689 = vpop.f32.mrf.mxu0
        %v1690 = vadd.f32 %v1598, %v1689
        %1691 = vmatmul.f32.gmra.mxu0 %v1336
        %v1692 = vpop.f32.mrf.mxu0
        %v1693 = vadd.f32 %v1601, %v1692
        %1694 = vmatmul.f32.gmra.mxu0 %v1340
        %v1695 = vpop.f32.mrf.mxu0
        %v1696 = vadd.f32 %v1604, %v1695
        %1697 = vdwg.mxu0
        %1698 = vmatpush.msra.mxu0 0.0
        %1699 = vmatpush.msra.mxu0 0.0
        %1700 = vmatpush.msra.mxu0 0.0
        %1701 = vmatpush.msra.mxu0 0.0
        %1702 = vmatpush.msra.mxu0 0.0
        %1703 = vmatpush.msra.mxu0 0.0
        %1704 = vmatpush.msra.mxu0 0.0
        %1705 = vmatpush.msra.mxu0 0.0
        %1706 = vmatpush.msra.mxu0 0.0
        %1707 = vmatpush.msra.mxu0 0.0
        %1708 = vmatpush.msra.mxu0 0.0
        %1709 = vmatpush.msra.mxu0 0.0
        %1710 = vmatpush.msra.mxu0 0.0
        %1711 = vmatpush.msra.mxu0 0.0
        %1712 = vmatpush.msra.mxu0 0.0
        %1713 = vmatpush.msra.mxu0 %v1420
        %1714 = vmatmul.f32.gmra.mxu0 %v1344
        %v1715 = vpop.f32.mrf.mxu0
        %v1716 = vadd.f32 %v1624, %v1715
        %1717 = vmatmul.f32.gmra.mxu0 %v1347
        %v1718 = vpop.f32.mrf.mxu0
        %v1719 = vadd.f32 %v1627, %v1718
        %1720 = vmatmul.f32.gmra.mxu0 %v1350
        %v1721 = vpop.f32.mrf.mxu0
        %v1722 = vadd.f32 %v1630, %v1721
        %1723 = vmatmul.f32.gmra.mxu0 %v1353
        %v1724 = vpop.f32.mrf.mxu0
        %v1725 = vadd.f32 %v1633, %v1724
        %1726 = vmatmul.f32.gmra.mxu0 %v1356
        %v1727 = vpop.f32.mrf.mxu0
        %v1728 = vadd.f32 %v1636, %v1727
        %1729 = vmatmul.f32.gmra.mxu0 %v1359
        %v1730 = vpop.f32.mrf.mxu0
        %v1731 = vadd.f32 %v1639, %v1730
        %1732 = vmatmul.f32.gmra.mxu0 %v1362
        %v1733 = vpop.f32.mrf.mxu0
        %v1734 = vadd.f32 %v1642, %v1733
        %1735 = vmatmul.f32.gmra.mxu0 %v1365
        %v1736 = vpop.f32.mrf.mxu0
        %v1737 = vadd.f32 %v1645, %v1736
        %1738 = vmatmul.f32.gmra.mxu0 %v1368
        %v1739 = vpop.f32.mrf.mxu0
        %v1740 = vadd.f32 %v1648, %v1739
        %1741 = vmatmul.f32.gmra.mxu0 %v1371
        %v1742 = vpop.f32.mrf.mxu0
        %v1743 = vadd.f32 %v1651, %v1742
        %1744 = vmatmul.f32.gmra.mxu0 %v1374
        %v1745 = vpop.f32.mrf.mxu0
        %v1746 = vadd.f32 %v1654, %v1745
        %1747 = vmatmul.f32.gmra.mxu0 %v1377
        %v1748 = vpop.f32.mrf.mxu0
        %v1749 = vadd.f32 %v1657, %v1748
        %1750 = vmatmul.f32.gmra.mxu0 %v1380
        %v1751 = vpop.f32.mrf.mxu0
        %v1752 = vadd.f32 %v1660, %v1751
        %1753 = vmatmul.f32.gmra.mxu0 %v1383
        %v1754 = vpop.f32.mrf.mxu0
        %v1755 = vadd.f32 %v1663, %v1754
        %1756 = vmatmul.f32.gmra.mxu0 %v1386
        %v1757 = vpop.f32.mrf.mxu0
        %v1758 = vadd.f32 %v1666, %v1757
        %1759 = vmatmul.f32.gmra.mxu0 %v1389
        %v1760 = vpop.f32.mrf.mxu0
        %v1761 = vadd.f32 %v1669, %v1760
        %1762 = vmatmul.f32.gmra.mxu0 %v1392
        %v1763 = vpop.f32.mrf.mxu0
        %v1764 = vadd.f32 %v1672, %v1763
        %1765 = vmatmul.f32.gmra.mxu0 %v1395
        %v1766 = vpop.f32.mrf.mxu0
        %v1767 = vadd.f32 %v1675, %v1766
        %1768 = vmatmul.f32.gmra.mxu0 %v1398
        %v1769 = vpop.f32.mrf.mxu0
        %v1770 = vadd.f32 %v1678, %v1769
        %1771 = vmatmul.f32.gmra.mxu0 %v1401
        %v1772 = vpop.f32.mrf.mxu0
        %v1773 = vadd.f32 %v1681, %v1772
        %1774 = vmatmul.f32.gmra.mxu0 %v1404
        %v1775 = vpop.f32.mrf.mxu0
        %v1776 = vadd.f32 %v1684, %v1775
        %1777 = vmatmul.f32.gmra.mxu0 %v1407
        %v1778 = vpop.f32.mrf.mxu0
        %v1779 = vadd.f32 %v1687, %v1778
        %1780 = vmatmul.f32.gmra.mxu0 %v1410
        %v1781 = vpop.f32.mrf.mxu0
        %v1782 = vadd.f32 %v1690, %v1781
        %1783 = vmatmul.f32.gmra.mxu0 %v1413
        %v1784 = vpop.f32.mrf.mxu0
        %v1785 = vadd.f32 %v1693, %v1784
        %1786 = vmatmul.f32.gmra.mxu0 %v1416
        %v1787 = vpop.f32.mrf.mxu0
        %v1788 = vadd.f32 %v1696, %v1787
        %1789 = vdwg.mxu0
        %vm1815 = vcmask 1046528
        %v1816 = vrot.slane %v1716, 1
        %v1817 = vrot.slane %v1719, 1
        %v1818 = vsel %vm1815, %v1816, %v1817
        %v1819 = vrot.slane %v1722, 1
        %v1820 = vsel %vm1815, %v1817, %v1819
        %v1821 = vrot.slane %v1725, 1
        %v1822 = vsel %vm1815, %v1819, %v1821
        %v1823 = vrot.slane %v1728, 1
        %v1824 = vsel %vm1815, %v1821, %v1823
        %v1825 = vrot.slane %v1731, 1
        %v1826 = vsel %vm1815, %v1823, %v1825
        %v1827 = vrot.slane %v1734, 1
        %v1828 = vsel %vm1815, %v1825, %v1827
        %v1829 = vrot.slane %v1737, 1
        %v1830 = vsel %vm1815, %v1827, %v1829
        %v1831 = vrot.slane %v1740, 1
        %v1832 = vsel %vm1815, %v1829, %v1831
        %v1833 = vrot.slane %v1743, 1
        %v1834 = vsel %vm1815, %v1831, %v1833
        %v1835 = vrot.slane %v1746, 1
        %v1836 = vsel %vm1815, %v1833, %v1835
        %v1837 = vrot.slane %v1749, 1
        %v1838 = vsel %vm1815, %v1835, %v1837
        %v1839 = vrot.slane %v1752, 1
        %v1840 = vsel %vm1815, %v1837, %v1839
        %v1841 = vrot.slane %v1755, 1
        %v1842 = vsel %vm1815, %v1839, %v1841
        %v1843 = vrot.slane %v1758, 1
        %v1844 = vsel %vm1815, %v1841, %v1843
        %v1845 = vrot.slane %v1761, 1
        %v1846 = vsel %vm1815, %v1843, %v1845
        %v1847 = vrot.slane %v1764, 1
        %v1848 = vsel %vm1815, %v1845, %v1847
        %v1849 = vrot.slane %v1767, 1
        %v1850 = vsel %vm1815, %v1847, %v1849
        %v1851 = vrot.slane %v1770, 1
        %v1852 = vsel %vm1815, %v1849, %v1851
        %v1853 = vrot.slane %v1773, 1
        %v1854 = vsel %vm1815, %v1851, %v1853
        %v1855 = vrot.slane %v1776, 1
        %v1856 = vsel %vm1815, %v1853, %v1855
        %v1857 = vrot.slane %v1779, 1
        %v1858 = vsel %vm1815, %v1855, %v1857
        %v1859 = vrot.slane %v1782, 1
        %v1860 = vsel %vm1815, %v1857, %v1859
        %v1861 = vrot.slane %v1785, 1
        %v1862 = vsel %vm1815, %v1859, %v1861
        %v1863 = vrot.slane %v1788, 1
        %v1864 = vsel %vm1815, %v1861, %v1863
        %1865 = vrot.lane.b32.xlu0 %v1818, 64
        %v1866 = vpop.permute.xlu0 %1865
        %1867 = vrot.lane.b32.xlu0 %v1820, 64
        %v1868 = vpop.permute.xlu0 %1867
        %1869 = vrot.lane.b32.xlu0 %v1822, 64
        %v1870 = vpop.permute.xlu0 %1869
        %1871 = vrot.lane.b32.xlu0 %v1824, 64
        %v1872 = vpop.permute.xlu0 %1871
        %1873 = vrot.lane.b32.xlu0 %v1826, 64
        %v1874 = vpop.permute.xlu0 %1873
        %1875 = vrot.lane.b32.xlu0 %v1828, 64
        %v1876 = vpop.permute.xlu0 %1875
        %1877 = vrot.lane.b32.xlu0 %v1830, 64
        %v1878 = vpop.permute.xlu0 %1877
        %1879 = vrot.lane.b32.xlu0 %v1832, 64
        %v1880 = vpop.permute.xlu0 %1879
        %1881 = vrot.lane.b32.xlu0 %v1834, 64
        %v1882 = vpop.permute.xlu0 %1881
        %1883 = vrot.lane.b32.xlu0 %v1836, 64
        %v1884 = vpop.permute.xlu0 %1883
        %1885 = vrot.lane.b32.xlu0 %v1838, 64
        %v1886 = vpop.permute.xlu0 %1885
        %1887 = vrot.lane.b32.xlu0 %v1840, 64
        %v1888 = vpop.permute.xlu0 %1887
        %1889 = vrot.lane.b32.xlu0 %v1842, 64
        %v1890 = vpop.permute.xlu0 %1889
        %1891 = vrot.lane.b32.xlu0 %v1844, 64
        %v1892 = vpop.permute.xlu0 %1891
        %1893 = vrot.lane.b32.xlu0 %v1846, 64
        %v1894 = vpop.permute.xlu0 %1893
        %1895 = vrot.lane.b32.xlu0 %v1848, 64
        %v1896 = vpop.permute.xlu0 %1895
        %1897 = vrot.lane.b32.xlu0 %v1850, 64
        %v1898 = vpop.permute.xlu0 %1897
        %1899 = vrot.lane.b32.xlu0 %v1852, 64
        %v1900 = vpop.permute.xlu0 %1899
        %1901 = vrot.lane.b32.xlu0 %v1854, 64
        %v1902 = vpop.permute.xlu0 %1901
        %1903 = vrot.lane.b32.xlu0 %v1856, 64
        %v1904 = vpop.permute.xlu0 %1903
        %1905 = vrot.lane.b32.xlu0 %v1858, 64
        %v1906 = vpop.permute.xlu0 %1905
        %1907 = vrot.lane.b32.xlu0 %v1860, 64
        %v1908 = vpop.permute.xlu0 %1907
        %1909 = vrot.lane.b32.xlu0 %v1862, 64
        %v1910 = vpop.permute.xlu0 %1909
        %1911 = vrot.lane.b32.xlu0 %v1864, 64
        %v1912 = vpop.permute.xlu0 %1911
        %v1937 = vrot.slane %v1716, 2
        %v1938 = vrot.slane %v1719, 2
        %v1939 = vsel %vm1418, %v1937, %v1938
        %v1940 = vrot.slane %v1722, 2
        %v1941 = vsel %vm1418, %v1938, %v1940
        %v1942 = vrot.slane %v1725, 2
        %v1943 = vsel %vm1418, %v1940, %v1942
        %v1944 = vrot.slane %v1728, 2
        %v1945 = vsel %vm1418, %v1942, %v1944
        %v1946 = vrot.slane %v1731, 2
        %v1947 = vsel %vm1418, %v1944, %v1946
        %v1948 = vrot.slane %v1734, 2
        %v1949 = vsel %vm1418, %v1946, %v1948
        %v1950 = vrot.slane %v1737, 2
        %v1951 = vsel %vm1418, %v1948, %v1950
        %v1952 = vrot.slane %v1740, 2
        %v1953 = vsel %vm1418, %v1950, %v1952
        %v1954 = vrot.slane %v1743, 2
        %v1955 = vsel %vm1418, %v1952, %v1954
        %v1956 = vrot.slane %v1746, 2
        %v1957 = vsel %vm1418, %v1954, %v1956
        %v1958 = vrot.slane %v1749, 2
        %v1959 = vsel %vm1418, %v1956, %v1958
        %v1960 = vrot.slane %v1752, 2
        %v1961 = vsel %vm1418, %v1958, %v1960
        %v1962 = vrot.slane %v1755, 2
        %v1963 = vsel %vm1418, %v1960, %v1962
        %v1964 = vrot.slane %v1758, 2
        %v1965 = vsel %vm1418, %v1962, %v1964
        %v1966 = vrot.slane %v1761, 2
        %v1967 = vsel %vm1418, %v1964, %v1966
        %v1968 = vrot.slane %v1764, 2
        %v1969 = vsel %vm1418, %v1966, %v1968
        %v1970 = vrot.slane %v1767, 2
        %v1971 = vsel %vm1418, %v1968, %v1970
        %v1972 = vrot.slane %v1770, 2
        %v1973 = vsel %vm1418, %v1970, %v1972
        %v1974 = vrot.slane %v1773, 2
        %v1975 = vsel %vm1418, %v1972, %v1974
        %v1976 = vrot.slane %v1776, 2
        %v1977 = vsel %vm1418, %v1974, %v1976
        %v1978 = vrot.slane %v1779, 2
        %v1979 = vsel %vm1418, %v1976, %v1978
        %v1980 = vrot.slane %v1782, 2
        %v1981 = vsel %vm1418, %v1978, %v1980
        %v1982 = vrot.slane %v1785, 2
        %v1983 = vsel %vm1418, %v1980, %v1982
        %v1984 = vrot.slane %v1788, 2
        %v1985 = vsel %vm1418, %v1982, %v1984
        %vm2010 = vcmask 1044480
        %v2011 = vrot.slane %v1716, 3
        %v2012 = vrot.slane %v1719, 3
        %v2013 = vsel %vm2010, %v2011, %v2012
        %v2014 = vrot.slane %v1722, 3
        %v2015 = vsel %vm2010, %v2012, %v2014
        %v2016 = vrot.slane %v1725, 3
        %v2017 = vsel %vm2010, %v2014, %v2016
        %v2018 = vrot.slane %v1728, 3
        %v2019 = vsel %vm2010, %v2016, %v2018
        %v2020 = vrot.slane %v1731, 3
        %v2021 = vsel %vm2010, %v2018, %v2020
        %v2022 = vrot.slane %v1734, 3
        %v2023 = vsel %vm2010, %v2020, %v2022
        %v2024 = vrot.slane %v1737, 3
        %v2025 = vsel %vm2010, %v2022, %v2024
        %v2026 = vrot.slane %v1740, 3
        %v2027 = vsel %vm2010, %v2024, %v2026
        %v2028 = vrot.slane %v1743, 3
        %v2029 = vsel %vm2010, %v2026, %v2028
        %v2030 = vrot.slane %v1746, 3
        %v2031 = vsel %vm2010, %v2028, %v2030
        %v2032 = vrot.slane %v1749, 3
        %v2033 = vsel %vm2010, %v2030, %v2032
        %v2034 = vrot.slane %v1752, 3
        %v2035 = vsel %vm2010, %v2032, %v2034
        %v2036 = vrot.slane %v1755, 3
        %v2037 = vsel %vm2010, %v2034, %v2036
        %v2038 = vrot.slane %v1758, 3
        %v2039 = vsel %vm2010, %v2036, %v2038
        %v2040 = vrot.slane %v1761, 3
        %v2041 = vsel %vm2010, %v2038, %v2040
        %v2042 = vrot.slane %v1764, 3
        %v2043 = vsel %vm2010, %v2040, %v2042
        %v2044 = vrot.slane %v1767, 3
        %v2045 = vsel %vm2010, %v2042, %v2044
        %v2046 = vrot.slane %v1770, 3
        %v2047 = vsel %vm2010, %v2044, %v2046
        %v2048 = vrot.slane %v1773, 3
        %v2049 = vsel %vm2010, %v2046, %v2048
        %v2050 = vrot.slane %v1776, 3
        %v2051 = vsel %vm2010, %v2048, %v2050
        %v2052 = vrot.slane %v1779, 3
        %v2053 = vsel %vm2010, %v2050, %v2052
        %v2054 = vrot.slane %v1782, 3
        %v2055 = vsel %vm2010, %v2052, %v2054
        %v2056 = vrot.slane %v1785, 3
        %v2057 = vsel %vm2010, %v2054, %v2056
        %v2058 = vrot.slane %v1788, 3
        %v2059 = vsel %vm2010, %v2056, %v2058
        %2060 = vrot.lane.b32.xlu0 %v2013, 64
        %v2061 = vpop.permute.xlu0 %2060
        %2062 = vrot.lane.b32.xlu0 %v2015, 64
        %v2063 = vpop.permute.xlu0 %2062
        %2064 = vrot.lane.b32.xlu0 %v2017, 64
        %v2065 = vpop.permute.xlu0 %2064
        %2066 = vrot.lane.b32.xlu0 %v2019, 64
        %v2067 = vpop.permute.xlu0 %2066
        %2068 = vrot.lane.b32.xlu0 %v2021, 64
        %v2069 = vpop.permute.xlu0 %2068
        %2070 = vrot.lane.b32.xlu0 %v2023, 64
        %v2071 = vpop.permute.xlu0 %2070
        %2072 = vrot.lane.b32.xlu0 %v2025, 64
        %v2073 = vpop.permute.xlu0 %2072
        %2074 = vrot.lane.b32.xlu0 %v2027, 64
        %v2075 = vpop.permute.xlu0 %2074
        %2076 = vrot.lane.b32.xlu0 %v2029, 64
        %v2077 = vpop.permute.xlu0 %2076
        %2078 = vrot.lane.b32.xlu0 %v2031, 64
        %v2079 = vpop.permute.xlu0 %2078
        %2080 = vrot.lane.b32.xlu0 %v2033, 64
        %v2081 = vpop.permute.xlu0 %2080
        %2082 = vrot.lane.b32.xlu0 %v2035, 64
        %v2083 = vpop.permute.xlu0 %2082
        %2084 = vrot.lane.b32.xlu0 %v2037, 64
        %v2085 = vpop.permute.xlu0 %2084
        %2086 = vrot.lane.b32.xlu0 %v2039, 64
        %v2087 = vpop.permute.xlu0 %2086
        %2088 = vrot.lane.b32.xlu0 %v2041, 64
        %v2089 = vpop.permute.xlu0 %2088
        %2090 = vrot.lane.b32.xlu0 %v2043, 64
        %v2091 = vpop.permute.xlu0 %2090
        %2092 = vrot.lane.b32.xlu0 %v2045, 64
        %v2093 = vpop.permute.xlu0 %2092
        %2094 = vrot.lane.b32.xlu0 %v2047, 64
        %v2095 = vpop.permute.xlu0 %2094
        %2096 = vrot.lane.b32.xlu0 %v2049, 64
        %v2097 = vpop.permute.xlu0 %2096
        %2098 = vrot.lane.b32.xlu0 %v2051, 64
        %v2099 = vpop.permute.xlu0 %2098
        %2100 = vrot.lane.b32.xlu0 %v2053, 64
        %v2101 = vpop.permute.xlu0 %2100
        %2102 = vrot.lane.b32.xlu0 %v2055, 64
        %v2103 = vpop.permute.xlu0 %2102
        %2104 = vrot.lane.b32.xlu0 %v2057, 64
        %v2105 = vpop.permute.xlu0 %2104
        %2106 = vrot.lane.b32.xlu0 %v2059, 64
        %v2107 = vpop.permute.xlu0 %2106
        %vm2132 = vcmask 523264
        %v2133 = vsel %vm2132, %v1716, %v1866
        %v2134 = vsel %vm2132, %v1719, %v1868
        %v2135 = vsel %vm2132, %v1722, %v1870
        %v2136 = vsel %vm2132, %v1725, %v1872
        %v2137 = vsel %vm2132, %v1728, %v1874
        %v2138 = vsel %vm2132, %v1731, %v1876
        %v2139 = vsel %vm2132, %v1734, %v1878
        %v2140 = vsel %vm2132, %v1737, %v1880
        %v2141 = vsel %vm2132, %v1740, %v1882
        %v2142 = vsel %vm2132, %v1743, %v1884
        %v2143 = vsel %vm2132, %v1746, %v1886
        %v2144 = vsel %vm2132, %v1749, %v1888
        %v2145 = vsel %vm2132, %v1752, %v1890
        %v2146 = vsel %vm2132, %v1755, %v1892
        %v2147 = vsel %vm2132, %v1758, %v1894
        %v2148 = vsel %vm2132, %v1761, %v1896
        %v2149 = vsel %vm2132, %v1764, %v1898
        %v2150 = vsel %vm2132, %v1767, %v1900
        %v2151 = vsel %vm2132, %v1770, %v1902
        %v2152 = vsel %vm2132, %v1773, %v1904
        %v2153 = vsel %vm2132, %v1776, %v1906
        %v2154 = vsel %vm2132, %v1779, %v1908
        %v2155 = vsel %vm2132, %v1782, %v1910
        %v2156 = vsel %vm2132, %v1785, %v1912
        %v2157 = vsel %vm2132, %v1939, %v2061
        %v2158 = vsel %vm2132, %v1941, %v2063
        %v2159 = vsel %vm2132, %v1943, %v2065
        %v2160 = vsel %vm2132, %v1945, %v2067
        %v2161 = vsel %vm2132, %v1947, %v2069
        %v2162 = vsel %vm2132, %v1949, %v2071
        %v2163 = vsel %vm2132, %v1951, %v2073
        %v2164 = vsel %vm2132, %v1953, %v2075
        %v2165 = vsel %vm2132, %v1955, %v2077
        %v2166 = vsel %vm2132, %v1957, %v2079
        %v2167 = vsel %vm2132, %v1959, %v2081
        %v2168 = vsel %vm2132, %v1961, %v2083
        %v2169 = vsel %vm2132, %v1963, %v2085
        %v2170 = vsel %vm2132, %v1965, %v2087
        %v2171 = vsel %vm2132, %v1967, %v2089
        %v2172 = vsel %vm2132, %v1969, %v2091
        %v2173 = vsel %vm2132, %v1971, %v2093
        %v2174 = vsel %vm2132, %v1973, %v2095
        %v2175 = vsel %vm2132, %v1975, %v2097
        %v2176 = vsel %vm2132, %v1977, %v2099
        %v2177 = vsel %vm2132, %v1979, %v2101
        %v2178 = vsel %vm2132, %v1981, %v2103
        %v2179 = vsel %vm2132, %v1983, %v2105
        %v2180 = vsel %vm2132, %v1985, %v2107
        %v2181 = vld [vmem:[%s5] sm:$0xff]
        %v2182 = vld [vmem:[%s5 + $0x8] sm:$0xff]
        %v2183 = vld [vmem:[%s5 + $0x10] sm:$0xff]
        %v2184 = vld [vmem:[%s5 + $0x18] sm:$0xff]
        %v2185 = vld [vmem:[%s5 + $0x20] sm:$0xff]
        %v2186 = vld [vmem:[%s5 + $0x28] sm:$0xff]
        %v2187 = vld [vmem:[%s5 + $0x30] sm:$0xff]
        %v2188 = vld [vmem:[%s5 + $0x38] sm:$0xff]
        %v2189 = vld [vmem:[%s5 + $0x40] sm:$0xff]
        %v2190 = vld [vmem:[%s5 + $0x48] sm:$0xff]
        %v2191 = vld [vmem:[%s5 + $0x50] sm:$0xff]
        %v2192 = vld [vmem:[%s5 + $0x58] sm:$0xff]
        %v2193 = vld [vmem:[%s5 + $0x60] sm:$0xff]
        %v2194 = vld [vmem:[%s5 + $0x68] sm:$0xff]
        %v2195 = vld [vmem:[%s5 + $0x70] sm:$0xff]
        %v2196 = vld [vmem:[%s5 + $0x78] sm:$0xff]
        %v2197 = vld [vmem:[%s5 + $0x80] sm:$0xff]
        %v2198 = vld [vmem:[%s5 + $0x88] sm:$0xff]
        %v2199 = vld [vmem:[%s5 + $0x90] sm:$0xff]
        %v2200 = vld [vmem:[%s5 + $0x98] sm:$0xff]
        %v2201 = vld [vmem:[%s5 + $0xa0] sm:$0xff]
        %v2202 = vld [vmem:[%s5 + $0xa8] sm:$0xff]
        %v2203 = vld [vmem:[%s5 + $0xb0] sm:$0xff]
        %v2204 = vld [vmem:[%s5 + $0xb8] sm:$0xff]
        %v2205 = vld [vmem:[%s5 + $0xc0] sm:$0xff]
        %v2206 = vld [vmem:[%s5 + $0xc8] sm:$0xff]
        %v2207 = vld [vmem:[%s5 + $0xd0] sm:$0xff]
        %v2208 = vld [vmem:[%s5 + $0xd8] sm:$0xff]
        %v2209 = vld [vmem:[%s5 + $0xe0] sm:$0xff]
        %v2210 = vld [vmem:[%s5 + $0xe8] sm:$0xff]
        %v2211 = vld [vmem:[%s5 + $0xf0] sm:$0xff]
        %v2212 = vld [vmem:[%s5 + $0xf8] sm:$0xff]
        %2213 = vmatpush.msra.mxu0 %v2196
        %2214 = vmatpush.msra.mxu0 %v2195
        %2215 = vmatpush.msra.mxu0 %v2194
        %2216 = vmatpush.msra.mxu0 %v2193
        %2217 = vmatpush.msra.mxu0 %v2192
        %2218 = vmatpush.msra.mxu0 %v2191
        %2219 = vmatpush.msra.mxu0 %v2190
        %2220 = vmatpush.msra.mxu0 %v2189
        %2221 = vmatpush.msra.mxu0 %v2188
        %2222 = vmatpush.msra.mxu0 %v2187
        %2223 = vmatpush.msra.mxu0 %v2186
        %2224 = vmatpush.msra.mxu0 %v2185
        %2225 = vmatpush.msra.mxu0 %v2184
        %2226 = vmatpush.msra.mxu0 %v2183
        %2227 = vmatpush.msra.mxu0 %v2182
        %2228 = vmatpush.msra.mxu0 %v2181
        %2229 = vmatmul.f32.gmra.mxu0 %v2133
        %v2230 = vpop.f32.mrf.mxu0
        %v2231 = vadd.f32 0.0, %v2230
        %2232 = vmatmul.f32.gmra.mxu0 %v2134
        %v2233 = vpop.f32.mrf.mxu0
        %v2234 = vadd.f32 0.0, %v2233
        %2235 = vmatmul.f32.gmra.mxu0 %v2135
        %v2236 = vpop.f32.mrf.mxu0
        %v2237 = vadd.f32 0.0, %v2236
        %2238 = vmatmul.f32.gmra.mxu0 %v2136
        %v2239 = vpop.f32.mrf.mxu0
        %v2240 = vadd.f32 0.0, %v2239
        %2241 = vmatmul.f32.gmra.mxu0 %v2137
        %v2242 = vpop.f32.mrf.mxu0
        %v2243 = vadd.f32 0.0, %v2242
        %2244 = vmatmul.f32.gmra.mxu0 %v2138
        %v2245 = vpop.f32.mrf.mxu0
        %v2246 = vadd.f32 0.0, %v2245
        %2247 = vmatmul.f32.gmra.mxu0 %v2139
        %v2248 = vpop.f32.mrf.mxu0
        %v2249 = vadd.f32 0.0, %v2248
        %2250 = vmatmul.f32.gmra.mxu0 %v2140
        %v2251 = vpop.f32.mrf.mxu0
        %v2252 = vadd.f32 0.0, %v2251
        %2253 = vmatmul.f32.gmra.mxu0 %v2141
        %v2254 = vpop.f32.mrf.mxu0
        %v2255 = vadd.f32 0.0, %v2254
        %2256 = vmatmul.f32.gmra.mxu0 %v2142
        %v2257 = vpop.f32.mrf.mxu0
        %v2258 = vadd.f32 0.0, %v2257
        %2259 = vmatmul.f32.gmra.mxu0 %v2143
        %v2260 = vpop.f32.mrf.mxu0
        %v2261 = vadd.f32 0.0, %v2260
        %2262 = vmatmul.f32.gmra.mxu0 %v2144
        %v2263 = vpop.f32.mrf.mxu0
        %v2264 = vadd.f32 0.0, %v2263
        %2265 = vmatmul.f32.gmra.mxu0 %v2145
        %v2266 = vpop.f32.mrf.mxu0
        %v2267 = vadd.f32 0.0, %v2266
        %2268 = vmatmul.f32.gmra.mxu0 %v2146
        %v2269 = vpop.f32.mrf.mxu0
        %v2270 = vadd.f32 0.0, %v2269
        %2271 = vmatmul.f32.gmra.mxu0 %v2147
        %v2272 = vpop.f32.mrf.mxu0
        %v2273 = vadd.f32 0.0, %v2272
        %2274 = vmatmul.f32.gmra.mxu0 %v2148
        %v2275 = vpop.f32.mrf.mxu0
        %v2276 = vadd.f32 0.0, %v2275
        %2277 = vmatmul.f32.gmra.mxu0 %v2149
        %v2278 = vpop.f32.mrf.mxu0
        %v2279 = vadd.f32 0.0, %v2278
        %2280 = vmatmul.f32.gmra.mxu0 %v2150
        %v2281 = vpop.f32.mrf.mxu0
        %v2282 = vadd.f32 0.0, %v2281
        %2283 = vmatmul.f32.gmra.mxu0 %v2151
        %v2284 = vpop.f32.mrf.mxu0
        %v2285 = vadd.f32 0.0, %v2284
        %2286 = vmatmul.f32.gmra.mxu0 %v2152
        %v2287 = vpop.f32.mrf.mxu0
        %v2288 = vadd.f32 0.0, %v2287
        %2289 = vmatmul.f32.gmra.mxu0 %v2153
        %v2290 = vpop.f32.mrf.mxu0
        %v2291 = vadd.f32 0.0, %v2290
        %2292 = vmatmul.f32.gmra.mxu0 %v2154
        %v2293 = vpop.f32.mrf.mxu0
        %v2294 = vadd.f32 0.0, %v2293
        %2295 = vmatmul.f32.gmra.mxu0 %v2155
        %v2296 = vpop.f32.mrf.mxu0
        %v2297 = vadd.f32 0.0, %v2296
        %2298 = vmatmul.f32.gmra.mxu0 %v2156
        %v2299 = vpop.f32.mrf.mxu0
        %v2300 = vadd.f32 0.0, %v2299
        %2301 = vdwg.mxu0
        %2302 = vmatpush.msra.mxu0 %v2212
        %2303 = vmatpush.msra.mxu0 %v2211
        %2304 = vmatpush.msra.mxu0 %v2210
        %2305 = vmatpush.msra.mxu0 %v2209
        %2306 = vmatpush.msra.mxu0 %v2208
        %2307 = vmatpush.msra.mxu0 %v2207
        %2308 = vmatpush.msra.mxu0 %v2206
        %2309 = vmatpush.msra.mxu0 %v2205
        %2310 = vmatpush.msra.mxu0 %v2204
        %2311 = vmatpush.msra.mxu0 %v2203
        %2312 = vmatpush.msra.mxu0 %v2202
        %2313 = vmatpush.msra.mxu0 %v2201
        %2314 = vmatpush.msra.mxu0 %v2200
        %2315 = vmatpush.msra.mxu0 %v2199
        %2316 = vmatpush.msra.mxu0 %v2198
        %2317 = vmatpush.msra.mxu0 %v2197
        %2318 = vmatmul.f32.gmra.mxu0 %v2157
        %v2319 = vpop.f32.mrf.mxu0
        %v2320 = vadd.f32 %v2231, %v2319
        %2321 = vmatmul.f32.gmra.mxu0 %v2158
        %v2322 = vpop.f32.mrf.mxu0
        %v2323 = vadd.f32 %v2234, %v2322
        %2324 = vmatmul.f32.gmra.mxu0 %v2159
        %v2325 = vpop.f32.mrf.mxu0
        %v2326 = vadd.f32 %v2237, %v2325
        %2327 = vmatmul.f32.gmra.mxu0 %v2160
        %v2328 = vpop.f32.mrf.mxu0
        %v2329 = vadd.f32 %v2240, %v2328
        %2330 = vmatmul.f32.gmra.mxu0 %v2161
        %v2331 = vpop.f32.mrf.mxu0
        %v2332 = vadd.f32 %v2243, %v2331
        %2333 = vmatmul.f32.gmra.mxu0 %v2162
        %v2334 = vpop.f32.mrf.mxu0
        %v2335 = vadd.f32 %v2246, %v2334
        %2336 = vmatmul.f32.gmra.mxu0 %v2163
        %v2337 = vpop.f32.mrf.mxu0
        %v2338 = vadd.f32 %v2249, %v2337
        %2339 = vmatmul.f32.gmra.mxu0 %v2164
        %v2340 = vpop.f32.mrf.mxu0
        %v2341 = vadd.f32 %v2252, %v2340
        %2342 = vmatmul.f32.gmra.mxu0 %v2165
        %v2343 = vpop.f32.mrf.mxu0
        %v2344 = vadd.f32 %v2255, %v2343
        %2345 = vmatmul.f32.gmra.mxu0 %v2166
        %v2346 = vpop.f32.mrf.mxu0
        %v2347 = vadd.f32 %v2258, %v2346
        %2348 = vmatmul.f32.gmra.mxu0 %v2167
        %v2349 = vpop.f32.mrf.mxu0
        %v2350 = vadd.f32 %v2261, %v2349
        %2351 = vmatmul.f32.gmra.mxu0 %v2168
        %v2352 = vpop.f32.mrf.mxu0
        %v2353 = vadd.f32 %v2264, %v2352
        %2354 = vmatmul.f32.gmra.mxu0 %v2169
        %v2355 = vpop.f32.mrf.mxu0
        %v2356 = vadd.f32 %v2267, %v2355
        %2357 = vmatmul.f32.gmra.mxu0 %v2170
        %v2358 = vpop.f32.mrf.mxu0
        %v2359 = vadd.f32 %v2270, %v2358
        %2360 = vmatmul.f32.gmra.mxu0 %v2171
        %v2361 = vpop.f32.mrf.mxu0
        %v2362 = vadd.f32 %v2273, %v2361
        %2363 = vmatmul.f32.gmra.mxu0 %v2172
        %v2364 = vpop.f32.mrf.mxu0
        %v2365 = vadd.f32 %v2276, %v2364
        %2366 = vmatmul.f32.gmra.mxu0 %v2173
        %v2367 = vpop.f32.mrf.mxu0
        %v2368 = vadd.f32 %v2279, %v2367
        %2369 = vmatmul.f32.gmra.mxu0 %v2174
        %v2370 = vpop.f32.mrf.mxu0
        %v2371 = vadd.f32 %v2282, %v2370
        %2372 = vmatmul.f32.gmra.mxu0 %v2175
        %v2373 = vpop.f32.mrf.mxu0
        %v2374 = vadd.f32 %v2285, %v2373
        %2375 = vmatmul.f32.gmra.mxu0 %v2176
        %v2376 = vpop.f32.mrf.mxu0
        %v2377 = vadd.f32 %v2288, %v2376
        %2378 = vmatmul.f32.gmra.mxu0 %v2177
        %v2379 = vpop.f32.mrf.mxu0
        %v2380 = vadd.f32 %v2291, %v2379
        %2381 = vmatmul.f32.gmra.mxu0 %v2178
        %v2382 = vpop.f32.mrf.mxu0
        %v2383 = vadd.f32 %v2294, %v2382
        %2384 = vmatmul.f32.gmra.mxu0 %v2179
        %v2385 = vpop.f32.mrf.mxu0
        %v2386 = vadd.f32 %v2297, %v2385
        %2387 = vmatmul.f32.gmra.mxu0 %v2180
        %v2388 = vpop.f32.mrf.mxu0
        %v2389 = vadd.f32 %v2300, %v2388
        %2390 = vdwg.mxu0
        %v2391 = vld [vmem:[%s6] sm:$0x1]
        %v2393 = vperm.slane %v2391, 0
        %v2395 = vmul.f32 %v2320, %v2393
        %v2396 = vmul.f32 %v2323, %v2393
        %v2397 = vmul.f32 %v2326, %v2393
        %v2398 = vmul.f32 %v2329, %v2393
        %v2399 = vmul.f32 %v2332, %v2393
        %v2400 = vmul.f32 %v2335, %v2393
        %v2401 = vmul.f32 %v2338, %v2393
        %v2402 = vmul.f32 %v2341, %v2393
        %v2403 = vmul.f32 %v2344, %v2393
        %v2404 = vmul.f32 %v2347, %v2393
        %v2405 = vmul.f32 %v2350, %v2393
        %v2406 = vmul.f32 %v2353, %v2393
        %v2407 = vmul.f32 %v2356, %v2393
        %v2408 = vmul.f32 %v2359, %v2393
        %v2409 = vmul.f32 %v2362, %v2393
        %v2410 = vmul.f32 %v2365, %v2393
        %v2411 = vmul.f32 %v2368, %v2393
        %v2412 = vmul.f32 %v2371, %v2393
        %v2413 = vmul.f32 %v2374, %v2393
        %v2414 = vmul.f32 %v2377, %v2393
        %v2415 = vmul.f32 %v2380, %v2393
        %v2416 = vmul.f32 %v2383, %v2393
        %v2417 = vmul.f32 %v2386, %v2393
        %v2418 = vmul.f32 %v2389, %v2393
        %v2419 = vld [vmem:[%s7] sm:$0x1]
        %v2421 = vperm.slane %v2419, 0
        %v2423 = vadd.f32 %v2395, %v2421
        %v2424 = vadd.f32 %v2396, %v2421
        %v2425 = vadd.f32 %v2397, %v2421
        %v2426 = vadd.f32 %v2398, %v2421
        %v2427 = vadd.f32 %v2399, %v2421
        %v2428 = vadd.f32 %v2400, %v2421
        %v2429 = vadd.f32 %v2401, %v2421
        %v2430 = vadd.f32 %v2402, %v2421
        %v2431 = vadd.f32 %v2403, %v2421
        %v2432 = vadd.f32 %v2404, %v2421
        %v2433 = vadd.f32 %v2405, %v2421
        %v2434 = vadd.f32 %v2406, %v2421
        %v2435 = vadd.f32 %v2407, %v2421
        %v2436 = vadd.f32 %v2408, %v2421
        %v2437 = vadd.f32 %v2409, %v2421
        %v2438 = vadd.f32 %v2410, %v2421
        %v2439 = vadd.f32 %v2411, %v2421
        %v2440 = vadd.f32 %v2412, %v2421
        %v2441 = vadd.f32 %v2413, %v2421
        %v2442 = vadd.f32 %v2414, %v2421
        %v2443 = vadd.f32 %v2415, %v2421
        %v2444 = vadd.f32 %v2416, %v2421
        %v2445 = vadd.f32 %v2417, %v2421
        %v2446 = vadd.f32 %v2418, %v2421
        %v2447 = vmax.f32 %v2423, 0.0
        %v2448 = vmax.f32 %v2424, 0.0
        %v2449 = vmax.f32 %v2425, 0.0
        %v2450 = vmax.f32 %v2426, 0.0
        %v2451 = vmax.f32 %v2427, 0.0
        %v2452 = vmax.f32 %v2428, 0.0
        %v2453 = vmax.f32 %v2429, 0.0
        %v2454 = vmax.f32 %v2430, 0.0
        %v2455 = vmax.f32 %v2431, 0.0
        %v2456 = vmax.f32 %v2432, 0.0
        %v2457 = vmax.f32 %v2433, 0.0
        %v2458 = vmax.f32 %v2434, 0.0
        %v2459 = vmax.f32 %v2435, 0.0
        %v2460 = vmax.f32 %v2436, 0.0
        %v2461 = vmax.f32 %v2437, 0.0
        %v2462 = vmax.f32 %v2438, 0.0
        %v2463 = vmax.f32 %v2439, 0.0
        %v2464 = vmax.f32 %v2440, 0.0
        %v2465 = vmax.f32 %v2441, 0.0
        %v2466 = vmax.f32 %v2442, 0.0
        %v2467 = vmax.f32 %v2443, 0.0
        %v2468 = vmax.f32 %v2444, 0.0
        %v2469 = vmax.f32 %v2445, 0.0
        %v2470 = vmax.f32 %v2446, 0.0
        %v2471 = vld [vmem:[%s8] sm:$0xff]
        %v2472 = vld [vmem:[%s8 + $0x8] sm:$0xff]
        %v2473 = vld [vmem:[%s8 + $0x10] sm:$0xff]
        %v2474 = vld [vmem:[%s8 + $0x18] sm:$0xff]
        %v2475 = vld [vmem:[%s8 + $0x20] sm:$0xff]
        %v2476 = vld [vmem:[%s8 + $0x28] sm:$0xff]
        %v2477 = vld [vmem:[%s8 + $0x30] sm:$0xff]
        %v2478 = vld [vmem:[%s8 + $0x38] sm:$0xff]
        %v2479 = vld [vmem:[%s8 + $0x40] sm:$0xff]
        %v2480 = vld [vmem:[%s8 + $0x48] sm:$0xff]
        %v2481 = vld [vmem:[%s8 + $0x50] sm:$0xff]
        %v2482 = vld [vmem:[%s8 + $0x58] sm:$0xff]
        %v2484 = vsel %vm2132, %v2472, 0
        %v2487 = vsel %vm2132, %v2474, 0
        %v2490 = vsel %vm2132, %v2476, 0
        %v2493 = vsel %vm2132, %v2478, 0
        %v2496 = vsel %vm2132, %v2480, 0
        %v2499 = vsel %vm2132, %v2482, 0
        %2501 = vmatpush.msra.mxu0 %v2462
        %2502 = vmatpush.msra.mxu0 %v2461
        %2503 = vmatpush.msra.mxu0 %v2460
        %2504 = vmatpush.msra.mxu0 %v2459
        %2505 = vmatpush.msra.mxu0 %v2458
        %2506 = vmatpush.msra.mxu0 %v2457
        %2507 = vmatpush.msra.mxu0 %v2456
        %2508 = vmatpush.msra.mxu0 %v2455
        %2509 = vmatpush.msra.mxu0 %v2454
        %2510 = vmatpush.msra.mxu0 %v2453
        %2511 = vmatpush.msra.mxu0 %v2452
        %2512 = vmatpush.msra.mxu0 %v2451
        %2513 = vmatpush.msra.mxu0 %v2450
        %2514 = vmatpush.msra.mxu0 %v2449
        %2515 = vmatpush.msra.mxu0 %v2448
        %2516 = vmatpush.msra.mxu0 %v2447
        %2517 = vmatmul.f32.gmra.mxu0 %v2471
        %v2518 = vpop.f32.mrf.mxu0
        %v2519 = vadd.f32 0.0, %v2518
        %2520 = vmatmul.f32.gmra.mxu0 %v2473
        %v2521 = vpop.f32.mrf.mxu0
        %v2522 = vadd.f32 0.0, %v2521
        %2523 = vmatmul.f32.gmra.mxu0 %v2475
        %v2524 = vpop.f32.mrf.mxu0
        %v2525 = vadd.f32 0.0, %v2524
        %2526 = vmatmul.f32.gmra.mxu0 %v2477
        %v2527 = vpop.f32.mrf.mxu0
        %v2528 = vadd.f32 0.0, %v2527
        %2529 = vmatmul.f32.gmra.mxu0 %v2479
        %v2530 = vpop.f32.mrf.mxu0
        %v2531 = vadd.f32 0.0, %v2530
        %2532 = vmatmul.f32.gmra.mxu0 %v2481
        %v2533 = vpop.f32.mrf.mxu0
        %v2534 = vadd.f32 0.0, %v2533
        %2535 = vdwg.mxu0
        %2536 = vmatpush.msra.mxu0 0.0
        %2537 = vmatpush.msra.mxu0 0.0
        %2538 = vmatpush.msra.mxu0 0.0
        %2539 = vmatpush.msra.mxu0 0.0
        %2540 = vmatpush.msra.mxu0 0.0
        %2541 = vmatpush.msra.mxu0 0.0
        %2542 = vmatpush.msra.mxu0 0.0
        %2543 = vmatpush.msra.mxu0 0.0
        %2544 = vmatpush.msra.mxu0 %v2470
        %2545 = vmatpush.msra.mxu0 %v2469
        %2546 = vmatpush.msra.mxu0 %v2468
        %2547 = vmatpush.msra.mxu0 %v2467
        %2548 = vmatpush.msra.mxu0 %v2466
        %2549 = vmatpush.msra.mxu0 %v2465
        %2550 = vmatpush.msra.mxu0 %v2464
        %2551 = vmatpush.msra.mxu0 %v2463
        %2552 = vmatmul.f32.gmra.mxu0 %v2484
        %v2553 = vpop.f32.mrf.mxu0
        %v2554 = vadd.f32 %v2519, %v2553
        %2555 = vmatmul.f32.gmra.mxu0 %v2487
        %v2556 = vpop.f32.mrf.mxu0
        %v2557 = vadd.f32 %v2522, %v2556
        %2558 = vmatmul.f32.gmra.mxu0 %v2490
        %v2559 = vpop.f32.mrf.mxu0
        %v2560 = vadd.f32 %v2525, %v2559
        %2561 = vmatmul.f32.gmra.mxu0 %v2493
        %v2562 = vpop.f32.mrf.mxu0
        %v2563 = vadd.f32 %v2528, %v2562
        %2564 = vmatmul.f32.gmra.mxu0 %v2496
        %v2565 = vpop.f32.mrf.mxu0
        %v2566 = vadd.f32 %v2531, %v2565
        %2567 = vmatmul.f32.gmra.mxu0 %v2499
        %v2568 = vpop.f32.mrf.mxu0
        %v2569 = vadd.f32 %v2534, %v2568
        %2570 = vdwg.mxu0
        %v2577 = vrot.slane %v2554, 1
        %v2578 = vrot.slane %v2557, 1
        %v2579 = vsel %vm1815, %v2577, %v2578
        %v2580 = vrot.slane %v2560, 1
        %v2581 = vsel %vm1815, %v2578, %v2580
        %v2582 = vrot.slane %v2563, 1
        %v2583 = vsel %vm1815, %v2580, %v2582
        %v2584 = vrot.slane %v2566, 1
        %v2585 = vsel %vm1815, %v2582, %v2584
        %v2586 = vrot.slane %v2569, 1
        %v2587 = vsel %vm1815, %v2584, %v2586
        %v2594 = vrot.slane %v2554, 2
        %v2595 = vrot.slane %v2557, 2
        %v2596 = vsel %vm1418, %v2594, %v2595
        %v2597 = vrot.slane %v2560, 2
        %v2598 = vsel %vm1418, %v2595, %v2597
        %v2599 = vrot.slane %v2563, 2
        %v2600 = vsel %vm1418, %v2597, %v2599
        %v2601 = vrot.slane %v2566, 2
        %v2602 = vsel %vm1418, %v2599, %v2601
        %v2603 = vrot.slane %v2569, 2
        %v2604 = vsel %vm1418, %v2601, %v2603
        %v2611 = vrot.slane %v2554, 3
        %v2612 = vrot.slane %v2557, 3
        %v2613 = vsel %vm2010, %v2611, %v2612
        %v2614 = vrot.slane %v2560, 3
        %v2615 = vsel %vm2010, %v2612, %v2614
        %v2616 = vrot.slane %v2563, 3
        %v2617 = vsel %vm2010, %v2614, %v2616
        %v2618 = vrot.slane %v2566, 3
        %v2619 = vsel %vm2010, %v2616, %v2618
        %v2620 = vrot.slane %v2569, 3
        %v2621 = vsel %vm2010, %v2618, %v2620
        %v2628 = vld [vmem:[#allocation3] sm:$0xff]
        %v2629 = vld [vmem:[#allocation3 + $0x8] sm:$0xff]
        %v2630 = vld [vmem:[#allocation3 + $0x10] sm:$0xff]
        %v2631 = vld [vmem:[#allocation3 + $0x18] sm:$0xff]
        %v2632 = vld [vmem:[#allocation3 + $0x20] sm:$0xff]
        %v2633 = vld [vmem:[#allocation3 + $0x28] sm:$0xff]
        %v2634 = vld [vmem:[#allocation3 + $0x30] sm:$0xff]
        %v2635 = vld [vmem:[#allocation3 + $0x38] sm:$0xff]
        %v2636 = vld [vmem:[#allocation3 + $0x40] sm:$0xff]
        %v2637 = vld [vmem:[#allocation3 + $0x48] sm:$0xff]
        %v2638 = vld [vmem:[#allocation3 + $0x50] sm:$0xff]
        %v2639 = vld [vmem:[#allocation3 + $0x58] sm:$0xff]
        %v2640 = vld [vmem:[#allocation3 + $0x60] sm:$0xff]
        %v2641 = vld [vmem:[#allocation3 + $0x68] sm:$0xff]
        %v2642 = vld [vmem:[#allocation3 + $0x70] sm:$0xff]
        %v2643 = vld [vmem:[#allocation3 + $0x78] sm:$0xff]
        %v2644 = vld [vmem:[#allocation3 + $0x80] sm:$0xff]
        %v2645 = vld [vmem:[#allocation3 + $0x88] sm:$0xff]
        %v2646 = vld [vmem:[#allocation3 + $0x90] sm:$0xff]
        %v2647 = vld [vmem:[#allocation3 + $0x98] sm:$0xff]
        %v2648 = vld [vmem:[#allocation3 + $0xa0] sm:$0xff]
        %v2649 = vld [vmem:[#allocation3 + $0xa8] sm:$0xff]
        %v2650 = vld [vmem:[#allocation3 + $0xb0] sm:$0xff]
        %v2651 = vld [vmem:[#allocation3 + $0xb8] sm:$0xff]
        %v2652 = vld [vmem:[#allocation3 + $0xc0] sm:$0xff]
        %v2653 = vld [vmem:[#allocation3 + $0xc8] sm:$0xff]
        %v2654 = vld [vmem:[#allocation3 + $0xd0] sm:$0xff]
        %v2655 = vld [vmem:[#allocation3 + $0xd8] sm:$0xff]
        %v2656 = vld [vmem:[#allocation3 + $0xe0] sm:$0xff]
        %v2657 = vld [vmem:[#allocation3 + $0xe8] sm:$0xff]
        %v2658 = vld [vmem:[#allocation3 + $0xf0] sm:$0xff]
        %v2659 = vld [vmem:[#allocation3 + $0xf8] sm:$0xff]
        %v2660 = vld [vmem:[#allocation3 + $0x100] sm:$0xff]
        %v2661 = vld [vmem:[#allocation3 + $0x108] sm:$0xff]
        %v2662 = vld [vmem:[#allocation3 + $0x110] sm:$0xff]
        %v2663 = vld [vmem:[#allocation3 + $0x118] sm:$0xff]
        %v2664 = vld [vmem:[#allocation3 + $0x120] sm:$0xff]
        %v2665 = vld [vmem:[#allocation3 + $0x128] sm:$0xff]
        %v2666 = vld [vmem:[#allocation3 + $0x130] sm:$0xff]
        %v2667 = vld [vmem:[#allocation3 + $0x138] sm:$0xff]
        %v2668 = vld [vmem:[#allocation3 + $0x140] sm:$0xff]
        %v2669 = vld [vmem:[#allocation3 + $0x148] sm:$0xff]
        %v2670 = vld [vmem:[#allocation3 + $0x150] sm:$0xff]
        %v2671 = vld [vmem:[#allocation3 + $0x158] sm:$0xff]
        %v2672 = vld [vmem:[#allocation3 + $0x160] sm:$0xff]
        %v2673 = vld [vmem:[#allocation3 + $0x168] sm:$0xff]
        %v2674 = vld [vmem:[#allocation3 + $0x170] sm:$0xff]
        %v2675 = vld [vmem:[#allocation3 + $0x178] sm:$0xff]
        %v2676 = vld [vmem:[#allocation3 + $0x180] sm:$0xff]
        %v2677 = vld [vmem:[#allocation3 + $0x188] sm:$0xff]
        %v2678 = vld [vmem:[#allocation3 + $0x190] sm:$0xff]
        %v2679 = vld [vmem:[#allocation3 + $0x198] sm:$0xff]
        %v2680 = vld [vmem:[#allocation3 + $0x1a0] sm:$0xff]
        %v2681 = vld [vmem:[#allocation3 + $0x1a8] sm:$0xff]
        %v2682 = vld [vmem:[#allocation3 + $0x1b0] sm:$0xff]
        %v2683 = vld [vmem:[#allocation3 + $0x1b8] sm:$0xff]
        %v2684 = vld [vmem:[#allocation3 + $0x1c0] sm:$0xff]
        %v2685 = vld [vmem:[#allocation3 + $0x1c8] sm:$0xff]
        %v2686 = vld [vmem:[#allocation3 + $0x1d0] sm:$0xff]
        %v2687 = vld [vmem:[#allocation3 + $0x1d8] sm:$0xff]
        %v2688 = vld [vmem:[#allocation3 + $0x1e0] sm:$0xff]
        %v2689 = vld [vmem:[#allocation3 + $0x1e8] sm:$0xff]
        %v2690 = vld [vmem:[#allocation3 + $0x1f0] sm:$0xff]
        %v2691 = vld [vmem:[#allocation3 + $0x1f8] sm:$0xff]
        %v2692 = vld [vmem:[#allocation3 + $0x200] sm:$0xff]
        %v2693 = vld [vmem:[#allocation3 + $0x208] sm:$0xff]
        %v2694 = vld [vmem:[#allocation3 + $0x210] sm:$0xff]
        %v2695 = vld [vmem:[#allocation3 + $0x218] sm:$0xff]
        %v2696 = vld [vmem:[#allocation3 + $0x220] sm:$0xff]
        %v2697 = vld [vmem:[#allocation3 + $0x228] sm:$0xff]
        %v2698 = vld [vmem:[#allocation3 + $0x230] sm:$0xff]
        %v2699 = vld [vmem:[#allocation3 + $0x238] sm:$0xff]
        %v2700 = vld [vmem:[#allocation3 + $0x240] sm:$0xff]
        %v2701 = vld [vmem:[#allocation3 + $0x248] sm:$0xff]
        %v2702 = vld [vmem:[#allocation3 + $0x250] sm:$0xff]
        %v2703 = vld [vmem:[#allocation3 + $0x258] sm:$0xff]
        %v2704 = vld [vmem:[#allocation3 + $0x260] sm:$0xff]
        %v2705 = vld [vmem:[#allocation3 + $0x268] sm:$0xff]
        %v2706 = vld [vmem:[#allocation3 + $0x270] sm:$0xff]
        %v2707 = vld [vmem:[#allocation3 + $0x278] sm:$0xff]
        %v2708 = vld [vmem:[#allocation3 + $0x280] sm:$0xff]
        %v2709 = vld [vmem:[#allocation3 + $0x288] sm:$0xff]
        %v2710 = vld [vmem:[#allocation3 + $0x290] sm:$0xff]
        %v2711 = vld [vmem:[#allocation3 + $0x298] sm:$0xff]
        %v2712 = vld [vmem:[#allocation3 + $0x2a0] sm:$0xff]
        %v2713 = vld [vmem:[#allocation3 + $0x2a8] sm:$0xff]
        %v2714 = vld [vmem:[#allocation3 + $0x2b0] sm:$0xff]
        %v2715 = vld [vmem:[#allocation3 + $0x2b8] sm:$0xff]
        %v2716 = vld [vmem:[#allocation3 + $0x2c0] sm:$0xff]
        %v2717 = vld [vmem:[#allocation3 + $0x2c8] sm:$0xff]
        %v2718 = vld [vmem:[#allocation3 + $0x2d0] sm:$0xff]
        %v2719 = vld [vmem:[#allocation3 + $0x2d8] sm:$0xff]
        %v2720 = vld [vmem:[#allocation3 + $0x2e0] sm:$0xff]
        %v2721 = vld [vmem:[#allocation3 + $0x2e8] sm:$0xff]
        %v2722 = vld [vmem:[#allocation3 + $0x2f0] sm:$0xff]
        %v2723 = vld [vmem:[#allocation3 + $0x2f8] sm:$0xff]
        %v2724 = vld [vmem:[#allocation3 + $0x300] sm:$0xff]
        %v2725 = vld [vmem:[#allocation3 + $0x308] sm:$0xff]
        %v2726 = vld [vmem:[#allocation3 + $0x310] sm:$0xff]
        %v2727 = vld [vmem:[#allocation3 + $0x318] sm:$0xff]
        %v2728 = vld [vmem:[#allocation3 + $0x320] sm:$0xff]
        %v2729 = vld [vmem:[#allocation3 + $0x328] sm:$0xff]
        %v2730 = vld [vmem:[#allocation3 + $0x330] sm:$0xff]
        %v2731 = vld [vmem:[#allocation3 + $0x338] sm:$0xff]
        %v2732 = vld [vmem:[#allocation3 + $0x340] sm:$0xff]
        %v2733 = vld [vmem:[#allocation3 + $0x348] sm:$0xff]
        %v2734 = vld [vmem:[#allocation3 + $0x350] sm:$0xff]
        %v2735 = vld [vmem:[#allocation3 + $0x358] sm:$0xff]
        %v2736 = vld [vmem:[#allocation3 + $0x360] sm:$0xff]
        %v2737 = vld [vmem:[#allocation3 + $0x368] sm:$0xff]
        %v2738 = vld [vmem:[#allocation3 + $0x370] sm:$0xff]
        %v2739 = vld [vmem:[#allocation3 + $0x378] sm:$0xff]
        %v2740 = vld [vmem:[#allocation3 + $0x380] sm:$0xff]
        %v2741 = vld [vmem:[#allocation3 + $0x388] sm:$0xff]
        %v2742 = vld [vmem:[#allocation3 + $0x390] sm:$0xff]
        %v2743 = vld [vmem:[#allocation3 + $0x398] sm:$0xff]
        %v2744 = vld [vmem:[#allocation3 + $0x3a0] sm:$0xff]
        %v2745 = vld [vmem:[#allocation3 + $0x3a8] sm:$0xff]
        %v2746 = vld [vmem:[#allocation3 + $0x3b0] sm:$0xff]
        %v2747 = vld [vmem:[#allocation3 + $0x3b8] sm:$0xff]
        %v2748 = vld [vmem:[#allocation3 + $0x3c0] sm:$0xff]
        %v2749 = vld [vmem:[#allocation3 + $0x3c8] sm:$0xff]
        %v2750 = vld [vmem:[#allocation3 + $0x3d0] sm:$0xff]
        %v2751 = vld [vmem:[#allocation3 + $0x3d8] sm:$0xff]
        %v2752 = vld [vmem:[#allocation3 + $0x3e0] sm:$0xff]
        %v2753 = vld [vmem:[#allocation3 + $0x3e8] sm:$0xff]
        %v2754 = vld [vmem:[#allocation3 + $0x3f0] sm:$0xff]
        %v2755 = vld [vmem:[#allocation3 + $0x3f8] sm:$0xff]
        %2756 = vmatpush.msra.mxu0 %v2658
        %2757 = vmatpush.msra.mxu0 %v2656
        %2758 = vmatpush.msra.mxu0 %v2654
        %2759 = vmatpush.msra.mxu0 %v2652
        %2760 = vmatpush.msra.mxu0 %v2650
        %2761 = vmatpush.msra.mxu0 %v2648
        %2762 = vmatpush.msra.mxu0 %v2646
        %2763 = vmatpush.msra.mxu0 %v2644
        %2764 = vmatpush.msra.mxu0 %v2642
        %2765 = vmatpush.msra.mxu0 %v2640
        %2766 = vmatpush.msra.mxu0 %v2638
        %2767 = vmatpush.msra.mxu0 %v2636
        %2768 = vmatpush.msra.mxu0 %v2634
        %2769 = vmatpush.msra.mxu0 %v2632
        %2770 = vmatpush.msra.mxu0 %v2630
        %2771 = vmatpush.msra.mxu0 %v2628
        %2772 = vmatmul.f32.gmra.mxu0 %v2554
        %v2773 = vpop.f32.mrf.mxu0
        %v2774 = vadd.f32 0.0, %v2773
        %2775 = vmatmul.f32.gmra.mxu0 %v2557
        %v2776 = vpop.f32.mrf.mxu0
        %v2777 = vadd.f32 0.0, %v2776
        %2778 = vmatmul.f32.gmra.mxu0 %v2560
        %v2779 = vpop.f32.mrf.mxu0
        %v2780 = vadd.f32 0.0, %v2779
        %2781 = vmatmul.f32.gmra.mxu0 %v2563
        %v2782 = vpop.f32.mrf.mxu0
        %v2783 = vadd.f32 0.0, %v2782
        %2784 = vmatmul.f32.gmra.mxu0 %v2566
        %v2785 = vpop.f32.mrf.mxu0
        %v2786 = vadd.f32 0.0, %v2785
        %2787 = vmatmul.f32.gmra.mxu0 %v2569
        %v2788 = vpop.f32.mrf.mxu0
        %v2789 = vadd.f32 0.0, %v2788
        %2790 = vdwg.mxu0
        %2791 = vmatpush.msra.mxu0 %v2690
        %2792 = vmatpush.msra.mxu0 %v2688
        %2793 = vmatpush.msra.mxu0 %v2686
        %2794 = vmatpush.msra.mxu0 %v2684
        %2795 = vmatpush.msra.mxu0 %v2682
        %2796 = vmatpush.msra.mxu0 %v2680
        %2797 = vmatpush.msra.mxu0 %v2678
        %2798 = vmatpush.msra.mxu0 %v2676
        %2799 = vmatpush.msra.mxu0 %v2674
        %2800 = vmatpush.msra.mxu0 %v2672
        %2801 = vmatpush.msra.mxu0 %v2670
        %2802 = vmatpush.msra.mxu0 %v2668
        %2803 = vmatpush.msra.mxu0 %v2666
        %2804 = vmatpush.msra.mxu0 %v2664
        %2805 = vmatpush.msra.mxu0 %v2662
        %2806 = vmatpush.msra.mxu0 %v2660
        %2807 = vmatmul.f32.gmra.mxu0 %v2579
        %v2808 = vpop.f32.mrf.mxu0
        %v2809 = vadd.f32 %v2774, %v2808
        %2810 = vmatmul.f32.gmra.mxu0 %v2581
        %v2811 = vpop.f32.mrf.mxu0
        %v2812 = vadd.f32 %v2777, %v2811
        %2813 = vmatmul.f32.gmra.mxu0 %v2583
        %v2814 = vpop.f32.mrf.mxu0
        %v2815 = vadd.f32 %v2780, %v2814
        %2816 = vmatmul.f32.gmra.mxu0 %v2585
        %v2817 = vpop.f32.mrf.mxu0
        %v2818 = vadd.f32 %v2783, %v2817
        %2819 = vmatmul.f32.gmra.mxu0 %v2587
        %v2820 = vpop.f32.mrf.mxu0
        %v2821 = vadd.f32 %v2786, %v2820
        %2822 = vmatmul.f32.gmra.mxu0 %v2586
        %v2823 = vpop.f32.mrf.mxu0
        %v2824 = vadd.f32 %v2789, %v2823
        %2825 = vdwg.mxu0
        %2826 = vmatpush.msra.mxu0 %v2722
        %2827 = vmatpush.msra.mxu0 %v2720
        %2828 = vmatpush.msra.mxu0 %v2718
        %2829 = vmatpush.msra.mxu0 %v2716
        %2830 = vmatpush.msra.mxu0 %v2714
        %2831 = vmatpush.msra.mxu0 %v2712
        %2832 = vmatpush.msra.mxu0 %v2710
        %2833 = vmatpush.msra.mxu0 %v2708
        %2834 = vmatpush.msra.mxu0 %v2706
        %2835 = vmatpush.msra.mxu0 %v2704
        %2836 = vmatpush.msra.mxu0 %v2702
        %2837 = vmatpush.msra.mxu0 %v2700
        %2838 = vmatpush.msra.mxu0 %v2698
        %2839 = vmatpush.msra.mxu0 %v2696
        %2840 = vmatpush.msra.mxu0 %v2694
        %2841 = vmatpush.msra.mxu0 %v2692
        %2842 = vmatmul.f32.gmra.mxu0 %v2596
        %v2843 = vpop.f32.mrf.mxu0
        %v2844 = vadd.f32 %v2809, %v2843
        %2845 = vmatmul.f32.gmra.mxu0 %v2598
        %v2846 = vpop.f32.mrf.mxu0
        %v2847 = vadd.f32 %v2812, %v2846
        %2848 = vmatmul.f32.gmra.mxu0 %v2600
        %v2849 = vpop.f32.mrf.mxu0
        %v2850 = vadd.f32 %v2815, %v2849
        %2851 = vmatmul.f32.gmra.mxu0 %v2602
        %v2852 = vpop.f32.mrf.mxu0
        %v2853 = vadd.f32 %v2818, %v2852
        %2854 = vmatmul.f32.gmra.mxu0 %v2604
        %v2855 = vpop.f32.mrf.mxu0
        %v2856 = vadd.f32 %v2821, %v2855
        %2857 = vmatmul.f32.gmra.mxu0 %v2603
        %v2858 = vpop.f32.mrf.mxu0
        %v2859 = vadd.f32 %v2824, %v2858
        %2860 = vdwg.mxu0
        %2861 = vmatpush.msra.mxu0 %v2754
        %2862 = vmatpush.msra.mxu0 %v2752
        %2863 = vmatpush.msra.mxu0 %v2750
        %2864 = vmatpush.msra.mxu0 %v2748
        %2865 = vmatpush.msra.mxu0 %v2746
        %2866 = vmatpush.msra.mxu0 %v2744
        %2867 = vmatpush.msra.mxu0 %v2742
        %2868 = vmatpush.msra.mxu0 %v2740
        %2869 = vmatpush.msra.mxu0 %v2738
        %2870 = vmatpush.msra.mxu0 %v2736
        %2871 = vmatpush.msra.mxu0 %v2734
        %2872 = vmatpush.msra.mxu0 %v2732
        %2873 = vmatpush.msra.mxu0 %v2730
        %2874 = vmatpush.msra.mxu0 %v2728
        %2875 = vmatpush.msra.mxu0 %v2726
        %2876 = vmatpush.msra.mxu0 %v2724
        %2877 = vmatmul.f32.gmra.mxu0 %v2613
        %v2878 = vpop.f32.mrf.mxu0
        %v2879 = vadd.f32 %v2844, %v2878
        %2880 = vmatmul.f32.gmra.mxu0 %v2615
        %v2881 = vpop.f32.mrf.mxu0
        %v2882 = vadd.f32 %v2847, %v2881
        %2883 = vmatmul.f32.gmra.mxu0 %v2617
        %v2884 = vpop.f32.mrf.mxu0
        %v2885 = vadd.f32 %v2850, %v2884
        %2886 = vmatmul.f32.gmra.mxu0 %v2619
        %v2887 = vpop.f32.mrf.mxu0
        %v2888 = vadd.f32 %v2853, %v2887
        %2889 = vmatmul.f32.gmra.mxu0 %v2621
        %v2890 = vpop.f32.mrf.mxu0
        %v2891 = vadd.f32 %v2856, %v2890
        %2892 = vmatmul.f32.gmra.mxu0 %v2620
        %v2893 = vpop.f32.mrf.mxu0
        %v2894 = vadd.f32 %v2859, %v2893
        %2895 = vdwg.mxu0
        %2896 = vmatpush.msra.mxu0 %v2659
        %2897 = vmatpush.msra.mxu0 %v2657
        %2898 = vmatpush.msra.mxu0 %v2655
        %2899 = vmatpush.msra.mxu0 %v2653
        %2900 = vmatpush.msra.mxu0 %v2651
        %2901 = vmatpush.msra.mxu0 %v2649
        %2902 = vmatpush.msra.mxu0 %v2647
        %2903 = vmatpush.msra.mxu0 %v2645
        %2904 = vmatpush.msra.mxu0 %v2643
        %2905 = vmatpush.msra.mxu0 %v2641
        %2906 = vmatpush.msra.mxu0 %v2639
        %2907 = vmatpush.msra.mxu0 %v2637
        %2908 = vmatpush.msra.mxu0 %v2635
        %2909 = vmatpush.msra.mxu0 %v2633
        %2910 = vmatpush.msra.mxu0 %v2631
        %2911 = vmatpush.msra.mxu0 %v2629
        %2912 = vmatmul.f32.gmra.mxu0 %v2554
        %v2913 = vpop.f32.mrf.mxu0
        %v2914 = vadd.f32 0.0, %v2913
        %2915 = vmatmul.f32.gmra.mxu0 %v2557
        %v2916 = vpop.f32.mrf.mxu0
        %v2917 = vadd.f32 0.0, %v2916
        %2918 = vmatmul.f32.gmra.mxu0 %v2560
        %v2919 = vpop.f32.mrf.mxu0
        %v2920 = vadd.f32 0.0, %v2919
        %2921 = vmatmul.f32.gmra.mxu0 %v2563
        %v2922 = vpop.f32.mrf.mxu0
        %v2923 = vadd.f32 0.0, %v2922
        %2924 = vmatmul.f32.gmra.mxu0 %v2566
        %v2925 = vpop.f32.mrf.mxu0
        %v2926 = vadd.f32 0.0, %v2925
        %2927 = vmatmul.f32.gmra.mxu0 %v2569
        %v2928 = vpop.f32.mrf.mxu0
        %v2929 = vadd.f32 0.0, %v2928
        %2930 = vdwg.mxu0
        %2931 = vmatpush.msra.mxu0 %v2691
        %2932 = vmatpush.msra.mxu0 %v2689
        %2933 = vmatpush.msra.mxu0 %v2687
        %2934 = vmatpush.msra.mxu0 %v2685
        %2935 = vmatpush.msra.mxu0 %v2683
        %2936 = vmatpush.msra.mxu0 %v2681
        %2937 = vmatpush.msra.mxu0 %v2679
        %2938 = vmatpush.msra.mxu0 %v2677
        %2939 = vmatpush.msra.mxu0 %v2675
        %2940 = vmatpush.msra.mxu0 %v2673
        %2941 = vmatpush.msra.mxu0 %v2671
        %2942 = vmatpush.msra.mxu0 %v2669
        %2943 = vmatpush.msra.mxu0 %v2667
        %2944 = vmatpush.msra.mxu0 %v2665
        %2945 = vmatpush.msra.mxu0 %v2663
        %2946 = vmatpush.msra.mxu0 %v2661
        %2947 = vmatmul.f32.gmra.mxu0 %v2579
        %v2948 = vpop.f32.mrf.mxu0
        %v2949 = vadd.f32 %v2914, %v2948
        %2950 = vmatmul.f32.gmra.mxu0 %v2581
        %v2951 = vpop.f32.mrf.mxu0
        %v2952 = vadd.f32 %v2917, %v2951
        %2953 = vmatmul.f32.gmra.mxu0 %v2583
        %v2954 = vpop.f32.mrf.mxu0
        %v2955 = vadd.f32 %v2920, %v2954
        %2956 = vmatmul.f32.gmra.mxu0 %v2585
        %v2957 = vpop.f32.mrf.mxu0
        %v2958 = vadd.f32 %v2923, %v2957
        %2959 = vmatmul.f32.gmra.mxu0 %v2587
        %v2960 = vpop.f32.mrf.mxu0
        %v2961 = vadd.f32 %v2926, %v2960
        %2962 = vmatmul.f32.gmra.mxu0 %v2586
        %v2963 = vpop.f32.mrf.mxu0
        %v2964 = vadd.f32 %v2929, %v2963
        %2965 = vdwg.mxu0
        %2966 = vmatpush.msra.mxu0 %v2723
        %2967 = vmatpush.msra.mxu0 %v2721
        %2968 = vmatpush.msra.mxu0 %v2719
        %2969 = vmatpush.msra.mxu0 %v2717
        %2970 = vmatpush.msra.mxu0 %v2715
        %2971 = vmatpush.msra.mxu0 %v2713
        %2972 = vmatpush.msra.mxu0 %v2711
        %2973 = vmatpush.msra.mxu0 %v2709
        %2974 = vmatpush.msra.mxu0 %v2707
        %2975 = vmatpush.msra.mxu0 %v2705
        %2976 = vmatpush.msra.mxu0 %v2703
        %2977 = vmatpush.msra.mxu0 %v2701
        %2978 = vmatpush.msra.mxu0 %v2699
        %2979 = vmatpush.msra.mxu0 %v2697
        %2980 = vmatpush.msra.mxu0 %v2695
        %2981 = vmatpush.msra.mxu0 %v2693
        %2982 = vmatmul.f32.gmra.mxu0 %v2596
        %v2983 = vpop.f32.mrf.mxu0
        %v2984 = vadd.f32 %v2949, %v2983
        %2985 = vmatmul.f32.gmra.mxu0 %v2598
        %v2986 = vpop.f32.mrf.mxu0
        %v2987 = vadd.f32 %v2952, %v2986
        %2988 = vmatmul.f32.gmra.mxu0 %v2600
        %v2989 = vpop.f32.mrf.mxu0
        %v2990 = vadd.f32 %v2955, %v2989
        %2991 = vmatmul.f32.gmra.mxu0 %v2602
        %v2992 = vpop.f32.mrf.mxu0
        %v2993 = vadd.f32 %v2958, %v2992
        %2994 = vmatmul.f32.gmra.mxu0 %v2604
        %v2995 = vpop.f32.mrf.mxu0
        %v2996 = vadd.f32 %v2961, %v2995
        %2997 = vmatmul.f32.gmra.mxu0 %v2603
        %v2998 = vpop.f32.mrf.mxu0
        %v2999 = vadd.f32 %v2964, %v2998
        %3000 = vdwg.mxu0
        %3001 = vmatpush.msra.mxu0 %v2755
        %3002 = vmatpush.msra.mxu0 %v2753
        %3003 = vmatpush.msra.mxu0 %v2751
        %3004 = vmatpush.msra.mxu0 %v2749
        %3005 = vmatpush.msra.mxu0 %v2747
        %3006 = vmatpush.msra.mxu0 %v2745
        %3007 = vmatpush.msra.mxu0 %v2743
        %3008 = vmatpush.msra.mxu0 %v2741
        %3009 = vmatpush.msra.mxu0 %v2739
        %3010 = vmatpush.msra.mxu0 %v2737
        %3011 = vmatpush.msra.mxu0 %v2735
        %3012 = vmatpush.msra.mxu0 %v2733
        %3013 = vmatpush.msra.mxu0 %v2731
        %3014 = vmatpush.msra.mxu0 %v2729
        %3015 = vmatpush.msra.mxu0 %v2727
        %3016 = vmatpush.msra.mxu0 %v2725
        %3017 = vmatmul.f32.gmra.mxu0 %v2613
        %v3018 = vpop.f32.mrf.mxu0
        %v3019 = vadd.f32 %v2984, %v3018
        %3020 = vmatmul.f32.gmra.mxu0 %v2615
        %v3021 = vpop.f32.mrf.mxu0
        %v3022 = vadd.f32 %v2987, %v3021
        %3023 = vmatmul.f32.gmra.mxu0 %v2617
        %v3024 = vpop.f32.mrf.mxu0
        %v3025 = vadd.f32 %v2990, %v3024
        %3026 = vmatmul.f32.gmra.mxu0 %v2619
        %v3027 = vpop.f32.mrf.mxu0
        %v3028 = vadd.f32 %v2993, %v3027
        %3029 = vmatmul.f32.gmra.mxu0 %v2621
        %v3030 = vpop.f32.mrf.mxu0
        %v3031 = vadd.f32 %v2996, %v3030
        %3032 = vmatmul.f32.gmra.mxu0 %v2620
        %v3033 = vpop.f32.mrf.mxu0
        %v3034 = vadd.f32 %v2999, %v3033
        %3035 = vdwg.mxu0
        %v3036 = vld [vmem:[%s10] sm:$0x3]
        %v3038 = vperm.slane %v3036, 0
        %v3039 = vperm.slane %v3036, 1
        %v3042 = vmul.f32 %v2879, %v3038
        %v3043 = vmul.f32 %v3019, %v3039
        %v3044 = vmul.f32 %v2882, %v3038
        %v3045 = vmul.f32 %v3022, %v3039
        %v3046 = vmul.f32 %v2885, %v3038
        %v3047 = vmul.f32 %v3025, %v3039
        %v3048 = vmul.f32 %v2888, %v3038
        %v3049 = vmul.f32 %v3028, %v3039
        %v3050 = vmul.f32 %v2891, %v3038
        %v3051 = vmul.f32 %v3031, %v3039
        %v3052 = vmul.f32 %v2894, %v3038
        %v3053 = vmul.f32 %v3034, %v3039
        %v3054 = vld [vmem:[%s11] sm:$0x3]
        %v3056 = vperm.slane %v3054, 0
        %v3057 = vperm.slane %v3054, 1
        %v3060 = vadd.f32 %v3042, %v3056
        %v3061 = vadd.f32 %v3043, %v3057
        %v3062 = vadd.f32 %v3044, %v3056
        %v3063 = vadd.f32 %v3045, %v3057
        %v3064 = vadd.f32 %v3046, %v3056
        %v3065 = vadd.f32 %v3047, %v3057
        %v3066 = vadd.f32 %v3048, %v3056
        %v3067 = vadd.f32 %v3049, %v3057
        %v3068 = vadd.f32 %v3050, %v3056
        %v3069 = vadd.f32 %v3051, %v3057
        %v3070 = vadd.f32 %v3052, %v3056
        %v3071 = vadd.f32 %v3053, %v3057
        %v3072 = vmax.f32 %v3060, 0.0
        %v3073 = vmax.f32 %v3061, 0.0
        %v3074 = vmax.f32 %v3062, 0.0
        %v3075 = vmax.f32 %v3063, 0.0
        %v3076 = vmax.f32 %v3064, 0.0
        %v3077 = vmax.f32 %v3065, 0.0
        %v3078 = vmax.f32 %v3066, 0.0
        %v3079 = vmax.f32 %v3067, 0.0
        %v3080 = vmax.f32 %v3068, 0.0
        %v3081 = vmax.f32 %v3069, 0.0
        %v3082 = vmax.f32 %v3070, 0.0
        %v3083 = vmax.f32 %v3071, 0.0
        %v3084 = vld [vmem:[%s12] sm:$0xff]
        %v3085 = vld [vmem:[%s12 + $0x8] sm:$0x1]
        %vm3086 = vcmask 367616
        %v3088 = vsel %vm3086, %v3084, 0
        %v3091 = vsel %vm3086, %v3085, 0
        %v3094 = vsel %vm2010, %v3082, 0
        %v3097 = vsel %vm2010, %v3083, 0
        %3099 = vmatpush.msra.mxu0 0.0
        %3100 = vmatpush.msra.mxu0 0.0
        %3101 = vmatpush.msra.mxu0 0.0
        %3102 = vmatpush.msra.mxu0 0.0
        %3103 = vmatpush.msra.mxu0 0.0
        %3104 = vmatpush.msra.mxu0 0.0
        %3105 = vmatpush.msra.mxu0 0.0
        %3106 = vmatpush.msra.mxu0 0.0
        %3107 = vmatpush.msra.mxu0 0.0
        %3108 = vmatpush.msra.mxu0 0.0
        %3109 = vmatpush.msra.mxu0 %v3094
        %3110 = vmatpush.msra.mxu0 %v3080
        %3111 = vmatpush.msra.mxu0 %v3078
        %3112 = vmatpush.msra.mxu0 %v3076
        %3113 = vmatpush.msra.mxu0 %v3074
        %3114 = vmatpush.msra.mxu0 %v3072
        %3115 = vmatmul.f32.gmra.mxu0 %v3088
        %v3116 = vpop.f32.mrf.mxu0
        %v3117 = vadd.f32 0.0, %v3116
        %3118 = vmatmul.f32.gmra.mxu0 %v3091
        %v3119 = vpop.f32.mrf.mxu0
        %v3120 = vadd.f32 0.0, %v3119
        %3121 = vdwg.mxu0
        %3122 = vmatpush.msra.mxu0 0.0
        %3123 = vmatpush.msra.mxu0 0.0
        %3124 = vmatpush.msra.mxu0 0.0
        %3125 = vmatpush.msra.mxu0 0.0
        %3126 = vmatpush.msra.mxu0 0.0
        %3127 = vmatpush.msra.mxu0 0.0
        %3128 = vmatpush.msra.mxu0 0.0
        %3129 = vmatpush.msra.mxu0 0.0
        %3130 = vmatpush.msra.mxu0 0.0
        %3131 = vmatpush.msra.mxu0 0.0
        %3132 = vmatpush.msra.mxu0 %v3097
        %3133 = vmatpush.msra.mxu0 %v3081
        %3134 = vmatpush.msra.mxu0 %v3079
        %3135 = vmatpush.msra.mxu0 %v3077
        %3136 = vmatpush.msra.mxu0 %v3075
        %3137 = vmatpush.msra.mxu0 %v3073
        %3138 = vmatmul.f32.gmra.mxu0 %v3088
        %v3139 = vpop.f32.mrf.mxu0
        %v3140 = vadd.f32 0.0, %v3139
        %3141 = vmatmul.f32.gmra.mxu0 %v3091
        %v3142 = vpop.f32.mrf.mxu0
        %v3143 = vadd.f32 0.0, %v3142
        %3144 = vdwg.mxu0
        %v3147 = vrot.slane %v3117, 1
        %v3148 = vrot.slane %v3140, 1
        %v3153 = vrot.slane %v3117, 2
        %v3154 = vrot.slane %v3120, 2
        %v3155 = vsel %vm1418, %v3153, %v3154
        %v3156 = vrot.slane %v3140, 2
        %v3157 = vrot.slane %v3143, 2
        %v3158 = vsel %vm1418, %v3156, %v3157
        %v3161 = vld [vmem:[%s13] sm:$0xff]
        %v3162 = vld [vmem:[%s13 + $0x8] sm:$0xff]
        %v3163 = vld [vmem:[%s13 + $0x10] sm:$0xff]
        %v3164 = vld [vmem:[%s13 + $0x18] sm:$0xff]
        %v3165 = vld [vmem:[%s13 + $0x20] sm:$0xff]
        %v3166 = vld [vmem:[%s13 + $0x28] sm:$0xff]
        %v3167 = vld [vmem:[%s13 + $0x30] sm:$0xff]
        %v3168 = vld [vmem:[%s13 + $0x38] sm:$0xff]
        %v3169 = vld [vmem:[%s13 + $0x40] sm:$0xff]
        %v3170 = vld [vmem:[%s13 + $0x48] sm:$0xff]
        %v3171 = vld [vmem:[%s13 + $0x50] sm:$0xff]
        %v3172 = vld [vmem:[%s13 + $0x58] sm:$0xff]
        %v3173 = vld [vmem:[%s13 + $0x60] sm:$0xff]
        %v3174 = vld [vmem:[%s13 + $0x68] sm:$0xff]
        %v3175 = vld [vmem:[%s13 + $0x70] sm:$0xff]
        %v3176 = vld [vmem:[%s13 + $0x78] sm:$0xff]
        %v3177 = vld [vmem:[%s13 + $0x80] sm:$0xff]
        %v3178 = vld [vmem:[%s13 + $0x88] sm:$0xff]
        %v3179 = vld [vmem:[%s13 + $0x90] sm:$0xff]
        %v3180 = vld [vmem:[%s13 + $0x98] sm:$0xff]
        %v3181 = vld [vmem:[%s13 + $0xa0] sm:$0xff]
        %v3182 = vld [vmem:[%s13 + $0xa8] sm:$0xff]
        %v3183 = vld [vmem:[%s13 + $0xb0] sm:$0xff]
        %v3184 = vld [vmem:[%s13 + $0xb8] sm:$0xff]
        %v3185 = vld [vmem:[%s13 + $0xc0] sm:$0xff]
        %v3186 = vld [vmem:[%s13 + $0xc8] sm:$0xff]
        %v3187 = vld [vmem:[%s13 + $0xd0] sm:$0xff]
        %v3188 = vld [vmem:[%s13 + $0xd8] sm:$0xff]
        %v3189 = vld [vmem:[%s13 + $0xe0] sm:$0xff]
        %v3190 = vld [vmem:[%s13 + $0xe8] sm:$0xff]
        %v3191 = vld [vmem:[%s13 + $0xf0] sm:$0xff]
        %v3192 = vld [vmem:[%s13 + $0xf8] sm:$0xff]
        %v3193 = vld [vmem:[%s13 + $0x100] sm:$0xff]
        %v3194 = vld [vmem:[%s13 + $0x108] sm:$0xff]
        %v3195 = vld [vmem:[%s13 + $0x110] sm:$0xff]
        %v3196 = vld [vmem:[%s13 + $0x118] sm:$0xff]
        %v3197 = vld [vmem:[%s13 + $0x120] sm:$0xff]
        %v3198 = vld [vmem:[%s13 + $0x128] sm:$0xff]
        %v3199 = vld [vmem:[%s13 + $0x130] sm:$0xff]
        %v3200 = vld [vmem:[%s13 + $0x138] sm:$0xff]
        %v3201 = vld [vmem:[%s13 + $0x140] sm:$0xff]
        %v3202 = vld [vmem:[%s13 + $0x148] sm:$0xff]
        %v3203 = vld [vmem:[%s13 + $0x150] sm:$0xff]
        %v3204 = vld [vmem:[%s13 + $0x158] sm:$0xff]
        %v3205 = vld [vmem:[%s13 + $0x160] sm:$0xff]
        %v3206 = vld [vmem:[%s13 + $0x168] sm:$0xff]
        %v3207 = vld [vmem:[%s13 + $0x170] sm:$0xff]
        %v3208 = vld [vmem:[%s13 + $0x178] sm:$0xff]
        %v3209 = vld [vmem:[%s13 + $0x180] sm:$0xff]
        %v3210 = vld [vmem:[%s13 + $0x188] sm:$0xff]
        %v3211 = vld [vmem:[%s13 + $0x190] sm:$0xff]
        %v3212 = vld [vmem:[%s13 + $0x198] sm:$0xff]
        %v3213 = vld [vmem:[%s13 + $0x1a0] sm:$0xff]
        %v3214 = vld [vmem:[%s13 + $0x1a8] sm:$0xff]
        %v3215 = vld [vmem:[%s13 + $0x1b0] sm:$0xff]
        %v3216 = vld [vmem:[%s13 + $0x1b8] sm:$0xff]
        %v3217 = vld [vmem:[%s13 + $0x1c0] sm:$0xff]
        %v3218 = vld [vmem:[%s13 + $0x1c8] sm:$0xff]
        %v3219 = vld [vmem:[%s13 + $0x1d0] sm:$0xff]
        %v3220 = vld [vmem:[%s13 + $0x1d8] sm:$0xff]
        %v3221 = vld [vmem:[%s13 + $0x1e0] sm:$0xff]
        %v3222 = vld [vmem:[%s13 + $0x1e8] sm:$0xff]
        %v3223 = vld [vmem:[%s13 + $0x1f0] sm:$0xff]
        %v3224 = vld [vmem:[%s13 + $0x1f8] sm:$0xff]
        %v3225 = vld [vmem:[%s13 + $0x200] sm:$0xff]
        %v3226 = vld [vmem:[%s13 + $0x208] sm:$0xff]
        %v3227 = vld [vmem:[%s13 + $0x210] sm:$0xff]
        %v3228 = vld [vmem:[%s13 + $0x218] sm:$0xff]
        %v3229 = vld [vmem:[%s13 + $0x220] sm:$0xff]
        %v3230 = vld [vmem:[%s13 + $0x228] sm:$0xff]
        %v3231 = vld [vmem:[%s13 + $0x230] sm:$0xff]
        %v3232 = vld [vmem:[%s13 + $0x238] sm:$0xff]
        %v3233 = vld [vmem:[%s13 + $0x240] sm:$0xff]
        %v3234 = vld [vmem:[%s13 + $0x248] sm:$0xff]
        %v3235 = vld [vmem:[%s13 + $0x250] sm:$0xff]
        %v3236 = vld [vmem:[%s13 + $0x258] sm:$0xff]
        %v3237 = vld [vmem:[%s13 + $0x260] sm:$0xff]
        %v3238 = vld [vmem:[%s13 + $0x268] sm:$0xff]
        %v3239 = vld [vmem:[%s13 + $0x270] sm:$0xff]
        %v3240 = vld [vmem:[%s13 + $0x278] sm:$0xff]
        %v3241 = vld [vmem:[%s13 + $0x280] sm:$0xff]
        %v3242 = vld [vmem:[%s13 + $0x288] sm:$0xff]
        %v3243 = vld [vmem:[%s13 + $0x290] sm:$0xff]
        %v3244 = vld [vmem:[%s13 + $0x298] sm:$0xff]
        %v3245 = vld [vmem:[%s13 + $0x2a0] sm:$0xff]
        %v3246 = vld [vmem:[%s13 + $0x2a8] sm:$0xff]
        %v3247 = vld [vmem:[%s13 + $0x2b0] sm:$0xff]
        %v3248 = vld [vmem:[%s13 + $0x2b8] sm:$0xff]
        %v3249 = vld [vmem:[%s13 + $0x2c0] sm:$0xff]
        %v3250 = vld [vmem:[%s13 + $0x2c8] sm:$0xff]
        %v3251 = vld [vmem:[%s13 + $0x2d0] sm:$0xff]
        %v3252 = vld [vmem:[%s13 + $0x2d8] sm:$0xff]
        %v3253 = vld [vmem:[%s13 + $0x2e0] sm:$0xff]
        %v3254 = vld [vmem:[%s13 + $0x2e8] sm:$0xff]
        %v3255 = vld [vmem:[%s13 + $0x2f0] sm:$0xff]
        %v3256 = vld [vmem:[%s13 + $0x2f8] sm:$0xff]
        %v3257 = vld [vmem:[%s13 + $0x300] sm:$0xff]
        %v3258 = vld [vmem:[%s13 + $0x308] sm:$0xff]
        %v3259 = vld [vmem:[%s13 + $0x310] sm:$0xff]
        %v3260 = vld [vmem:[%s13 + $0x318] sm:$0xff]
        %v3261 = vld [vmem:[%s13 + $0x320] sm:$0xff]
        %v3262 = vld [vmem:[%s13 + $0x328] sm:$0xff]
        %v3263 = vld [vmem:[%s13 + $0x330] sm:$0xff]
        %v3264 = vld [vmem:[%s13 + $0x338] sm:$0xff]
        %v3265 = vld [vmem:[%s13 + $0x340] sm:$0xff]
        %v3266 = vld [vmem:[%s13 + $0x348] sm:$0xff]
        %v3267 = vld [vmem:[%s13 + $0x350] sm:$0xff]
        %v3268 = vld [vmem:[%s13 + $0x358] sm:$0xff]
        %v3269 = vld [vmem:[%s13 + $0x360] sm:$0xff]
        %v3270 = vld [vmem:[%s13 + $0x368] sm:$0xff]
        %v3271 = vld [vmem:[%s13 + $0x370] sm:$0xff]
        %v3272 = vld [vmem:[%s13 + $0x378] sm:$0xff]
        %v3273 = vld [vmem:[%s13 + $0x380] sm:$0xff]
        %v3274 = vld [vmem:[%s13 + $0x388] sm:$0xff]
        %v3275 = vld [vmem:[%s13 + $0x390] sm:$0xff]
        %v3276 = vld [vmem:[%s13 + $0x398] sm:$0xff]
        %v3277 = vld [vmem:[%s13 + $0x3a0] sm:$0xff]
        %v3278 = vld [vmem:[%s13 + $0x3a8] sm:$0xff]
        %v3279 = vld [vmem:[%s13 + $0x3b0] sm:$0xff]
        %v3280 = vld [vmem:[%s13 + $0x3b8] sm:$0xff]
        %v3281 = vld [vmem:[%s13 + $0x3c0] sm:$0xff]
        %v3282 = vld [vmem:[%s13 + $0x3c8] sm:$0xff]
        %v3283 = vld [vmem:[%s13 + $0x3d0] sm:$0xff]
        %v3284 = vld [vmem:[%s13 + $0x3d8] sm:$0xff]
        %v3285 = vld [vmem:[%s13 + $0x3e0] sm:$0xff]
        %v3286 = vld [vmem:[%s13 + $0x3e8] sm:$0xff]
        %v3287 = vld [vmem:[%s13 + $0x3f0] sm:$0xff]
        %v3288 = vld [vmem:[%s13 + $0x3f8] sm:$0xff]
        %v3289 = vld [vmem:[%s13 + $0x400] sm:$0xff]
        %v3290 = vld [vmem:[%s13 + $0x408] sm:$0xff]
        %v3291 = vld [vmem:[%s13 + $0x410] sm:$0xff]
        %v3292 = vld [vmem:[%s13 + $0x418] sm:$0xff]
        %v3293 = vld [vmem:[%s13 + $0x420] sm:$0xff]
        %v3294 = vld [vmem:[%s13 + $0x428] sm:$0xff]
        %v3295 = vld [vmem:[%s13 + $0x430] sm:$0xff]
        %v3296 = vld [vmem:[%s13 + $0x438] sm:$0xff]
        %v3297 = vld [vmem:[%s13 + $0x440] sm:$0xff]
        %v3298 = vld [vmem:[%s13 + $0x448] sm:$0xff]
        %v3299 = vld [vmem:[%s13 + $0x450] sm:$0xff]
        %v3300 = vld [vmem:[%s13 + $0x458] sm:$0xff]
        %v3301 = vld [vmem:[%s13 + $0x460] sm:$0xff]
        %v3302 = vld [vmem:[%s13 + $0x468] sm:$0xff]
        %v3303 = vld [vmem:[%s13 + $0x470] sm:$0xff]
        %v3304 = vld [vmem:[%s13 + $0x478] sm:$0xff]
        %v3305 = vld [vmem:[%s13 + $0x480] sm:$0xff]
        %v3306 = vld [vmem:[%s13 + $0x488] sm:$0xff]
        %v3307 = vld [vmem:[%s13 + $0x490] sm:$0xff]
        %v3308 = vld [vmem:[%s13 + $0x498] sm:$0xff]
        %v3309 = vld [vmem:[%s13 + $0x4a0] sm:$0xff]
        %v3310 = vld [vmem:[%s13 + $0x4a8] sm:$0xff]
        %v3311 = vld [vmem:[%s13 + $0x4b0] sm:$0xff]
        %v3312 = vld [vmem:[%s13 + $0x4b8] sm:$0xff]
        %v3313 = vld [vmem:[%s13 + $0x4c0] sm:$0xff]
        %v3314 = vld [vmem:[%s13 + $0x4c8] sm:$0xff]
        %v3315 = vld [vmem:[%s13 + $0x4d0] sm:$0xff]
        %v3316 = vld [vmem:[%s13 + $0x4d8] sm:$0xff]
        %v3317 = vld [vmem:[%s13 + $0x4e0] sm:$0xff]
        %v3318 = vld [vmem:[%s13 + $0x4e8] sm:$0xff]
        %v3319 = vld [vmem:[%s13 + $0x4f0] sm:$0xff]
        %v3320 = vld [vmem:[%s13 + $0x4f8] sm:$0xff]
        %v3321 = vld [vmem:[%s13 + $0x500] sm:$0xff]
        %v3322 = vld [vmem:[%s13 + $0x508] sm:$0xff]
        %v3323 = vld [vmem:[%s13 + $0x510] sm:$0xff]
        %v3324 = vld [vmem:[%s13 + $0x518] sm:$0xff]
        %v3325 = vld [vmem:[%s13 + $0x520] sm:$0xff]
        %v3326 = vld [vmem:[%s13 + $0x528] sm:$0xff]
        %v3327 = vld [vmem:[%s13 + $0x530] sm:$0xff]
        %v3328 = vld [vmem:[%s13 + $0x538] sm:$0xff]
        %v3329 = vld [vmem:[%s13 + $0x540] sm:$0xff]
        %v3330 = vld [vmem:[%s13 + $0x548] sm:$0xff]
        %v3331 = vld [vmem:[%s13 + $0x550] sm:$0xff]
        %v3332 = vld [vmem:[%s13 + $0x558] sm:$0xff]
        %v3333 = vld [vmem:[%s13 + $0x560] sm:$0xff]
        %v3334 = vld [vmem:[%s13 + $0x568] sm:$0xff]
        %v3335 = vld [vmem:[%s13 + $0x570] sm:$0xff]
        %v3336 = vld [vmem:[%s13 + $0x578] sm:$0xff]
        %v3337 = vld [vmem:[%s13 + $0x580] sm:$0xff]
        %v3338 = vld [vmem:[%s13 + $0x588] sm:$0xff]
        %v3339 = vld [vmem:[%s13 + $0x590] sm:$0xff]
        %v3340 = vld [vmem:[%s13 + $0x598] sm:$0xff]
        %v3341 = vld [vmem:[%s13 + $0x5a0] sm:$0xff]
        %v3342 = vld [vmem:[%s13 + $0x5a8] sm:$0xff]
        %v3343 = vld [vmem:[%s13 + $0x5b0] sm:$0xff]
        %v3344 = vld [vmem:[%s13 + $0x5b8] sm:$0xff]
        %v3345 = vld [vmem:[%s13 + $0x5c0] sm:$0xff]
        %v3346 = vld [vmem:[%s13 + $0x5c8] sm:$0xff]
        %v3347 = vld [vmem:[%s13 + $0x5d0] sm:$0xff]
        %v3348 = vld [vmem:[%s13 + $0x5d8] sm:$0xff]
        %v3349 = vld [vmem:[%s13 + $0x5e0] sm:$0xff]
        %v3350 = vld [vmem:[%s13 + $0x5e8] sm:$0xff]
        %v3351 = vld [vmem:[%s13 + $0x5f0] sm:$0xff]
        %v3352 = vld [vmem:[%s13 + $0x5f8] sm:$0xff]
        %v3353 = vld [vmem:[%s13 + $0x600] sm:$0xff]
        %v3354 = vld [vmem:[%s13 + $0x608] sm:$0xff]
        %v3355 = vld [vmem:[%s13 + $0x610] sm:$0xff]
        %v3356 = vld [vmem:[%s13 + $0x618] sm:$0xff]
        %v3357 = vld [vmem:[%s13 + $0x620] sm:$0xff]
        %v3358 = vld [vmem:[%s13 + $0x628] sm:$0xff]
        %v3359 = vld [vmem:[%s13 + $0x630] sm:$0xff]
        %v3360 = vld [vmem:[%s13 + $0x638] sm:$0xff]
        %v3361 = vld [vmem:[%s13 + $0x640] sm:$0xff]
        %v3362 = vld [vmem:[%s13 + $0x648] sm:$0xff]
        %v3363 = vld [vmem:[%s13 + $0x650] sm:$0xff]
        %v3364 = vld [vmem:[%s13 + $0x658] sm:$0xff]
        %v3365 = vld [vmem:[%s13 + $0x660] sm:$0xff]
        %v3366 = vld [vmem:[%s13 + $0x668] sm:$0xff]
        %v3367 = vld [vmem:[%s13 + $0x670] sm:$0xff]
        %v3368 = vld [vmem:[%s13 + $0x678] sm:$0xff]
        %v3369 = vld [vmem:[%s13 + $0x680] sm:$0xff]
        %v3370 = vld [vmem:[%s13 + $0x688] sm:$0xff]
        %v3371 = vld [vmem:[%s13 + $0x690] sm:$0xff]
        %v3372 = vld [vmem:[%s13 + $0x698] sm:$0xff]
        %v3373 = vld [vmem:[%s13 + $0x6a0] sm:$0xff]
        %v3374 = vld [vmem:[%s13 + $0x6a8] sm:$0xff]
        %v3375 = vld [vmem:[%s13 + $0x6b0] sm:$0xff]
        %v3376 = vld [vmem:[%s13 + $0x6b8] sm:$0xff]
        %v3377 = vld [vmem:[%s13 + $0x6c0] sm:$0xff]
        %v3378 = vld [vmem:[%s13 + $0x6c8] sm:$0xff]
        %v3379 = vld [vmem:[%s13 + $0x6d0] sm:$0xff]
        %v3380 = vld [vmem:[%s13 + $0x6d8] sm:$0xff]
        %v3381 = vld [vmem:[%s13 + $0x6e0] sm:$0xff]
        %v3382 = vld [vmem:[%s13 + $0x6e8] sm:$0xff]
        %v3383 = vld [vmem:[%s13 + $0x6f0] sm:$0xff]
        %v3384 = vld [vmem:[%s13 + $0x6f8] sm:$0xff]
        %v3385 = vld [vmem:[%s13 + $0x700] sm:$0xff]
        %v3386 = vld [vmem:[%s13 + $0x708] sm:$0xff]
        %v3387 = vld [vmem:[%s13 + $0x710] sm:$0xff]
        %v3388 = vld [vmem:[%s13 + $0x718] sm:$0xff]
        %v3389 = vld [vmem:[%s13 + $0x720] sm:$0xff]
        %v3390 = vld [vmem:[%s13 + $0x728] sm:$0xff]
        %v3391 = vld [vmem:[%s13 + $0x730] sm:$0xff]
        %v3392 = vld [vmem:[%s13 + $0x738] sm:$0xff]
        %v3393 = vld [vmem:[%s13 + $0x740] sm:$0xff]
        %v3394 = vld [vmem:[%s13 + $0x748] sm:$0xff]
        %v3395 = vld [vmem:[%s13 + $0x750] sm:$0xff]
        %v3396 = vld [vmem:[%s13 + $0x758] sm:$0xff]
        %v3397 = vld [vmem:[%s13 + $0x760] sm:$0xff]
        %v3398 = vld [vmem:[%s13 + $0x768] sm:$0xff]
        %v3399 = vld [vmem:[%s13 + $0x770] sm:$0xff]
        %v3400 = vld [vmem:[%s13 + $0x778] sm:$0xff]
        %v3401 = vld [vmem:[%s13 + $0x780] sm:$0xff]
        %v3402 = vld [vmem:[%s13 + $0x788] sm:$0xff]
        %v3403 = vld [vmem:[%s13 + $0x790] sm:$0xff]
        %v3404 = vld [vmem:[%s13 + $0x798] sm:$0xff]
        %v3405 = vld [vmem:[%s13 + $0x7a0] sm:$0xff]
        %v3406 = vld [vmem:[%s13 + $0x7a8] sm:$0xff]
        %v3407 = vld [vmem:[%s13 + $0x7b0] sm:$0xff]
        %v3408 = vld [vmem:[%s13 + $0x7b8] sm:$0xff]
        %v3409 = vld [vmem:[%s13 + $0x7c0] sm:$0xff]
        %v3410 = vld [vmem:[%s13 + $0x7c8] sm:$0xff]
        %v3411 = vld [vmem:[%s13 + $0x7d0] sm:$0xff]
        %v3412 = vld [vmem:[%s13 + $0x7d8] sm:$0xff]
        %v3413 = vld [vmem:[%s13 + $0x7e0] sm:$0xff]
        %v3414 = vld [vmem:[%s13 + $0x7e8] sm:$0xff]
        %v3415 = vld [vmem:[%s13 + $0x7f0] sm:$0xff]
        %v3416 = vld [vmem:[%s13 + $0x7f8] sm:$0xff]
        %v3417 = vld [vmem:[%s13 + $0x800] sm:$0xff]
        %v3418 = vld [vmem:[%s13 + $0x808] sm:$0xff]
        %v3419 = vld [vmem:[%s13 + $0x810] sm:$0xff]
        %v3420 = vld [vmem:[%s13 + $0x818] sm:$0xff]
        %v3421 = vld [vmem:[%s13 + $0x820] sm:$0xff]
        %v3422 = vld [vmem:[%s13 + $0x828] sm:$0xff]
        %v3423 = vld [vmem:[%s13 + $0x830] sm:$0xff]
        %v3424 = vld [vmem:[%s13 + $0x838] sm:$0xff]
        %v3425 = vld [vmem:[%s13 + $0x840] sm:$0xff]
        %v3426 = vld [vmem:[%s13 + $0x848] sm:$0xff]
        %v3427 = vld [vmem:[%s13 + $0x850] sm:$0xff]
        %v3428 = vld [vmem:[%s13 + $0x858] sm:$0xff]
        %v3429 = vld [vmem:[%s13 + $0x860] sm:$0xff]
        %v3430 = vld [vmem:[%s13 + $0x868] sm:$0xff]
        %v3431 = vld [vmem:[%s13 + $0x870] sm:$0xff]
        %v3432 = vld [vmem:[%s13 + $0x878] sm:$0xff]
        %v3433 = vld [vmem:[%s13 + $0x880] sm:$0xff]
        %v3434 = vld [vmem:[%s13 + $0x888] sm:$0xff]
        %v3435 = vld [vmem:[%s13 + $0x890] sm:$0xff]
        %v3436 = vld [vmem:[%s13 + $0x898] sm:$0xff]
        %v3437 = vld [vmem:[%s13 + $0x8a0] sm:$0xff]
        %v3438 = vld [vmem:[%s13 + $0x8a8] sm:$0xff]
        %v3439 = vld [vmem:[%s13 + $0x8b0] sm:$0xff]
        %v3440 = vld [vmem:[%s13 + $0x8b8] sm:$0xff]
        %v3441 = vld [vmem:[%s13 + $0x8c0] sm:$0xff]
        %v3442 = vld [vmem:[%s13 + $0x8c8] sm:$0xff]
        %v3443 = vld [vmem:[%s13 + $0x8d0] sm:$0xff]
        %v3444 = vld [vmem:[%s13 + $0x8d8] sm:$0xff]
        %v3445 = vld [vmem:[%s13 + $0x8e0] sm:$0xff]
        %v3446 = vld [vmem:[%s13 + $0x8e8] sm:$0xff]
        %v3447 = vld [vmem:[%s13 + $0x8f0] sm:$0xff]
        %v3448 = vld [vmem:[%s13 + $0x8f8] sm:$0xff]
        %v3449 = vld [vmem:[%s13 + $0x900] sm:$0xff]
        %v3450 = vld [vmem:[%s13 + $0x908] sm:$0xff]
        %v3451 = vld [vmem:[%s13 + $0x910] sm:$0xff]
        %v3452 = vld [vmem:[%s13 + $0x918] sm:$0xff]
        %v3453 = vld [vmem:[%s13 + $0x920] sm:$0xff]
        %v3454 = vld [vmem:[%s13 + $0x928] sm:$0xff]
        %v3455 = vld [vmem:[%s13 + $0x930] sm:$0xff]
        %v3456 = vld [vmem:[%s13 + $0x938] sm:$0xff]
        %v3457 = vld [vmem:[%s13 + $0x940] sm:$0xff]
        %v3458 = vld [vmem:[%s13 + $0x948] sm:$0xff]
        %v3459 = vld [vmem:[%s13 + $0x950] sm:$0xff]
        %v3460 = vld [vmem:[%s13 + $0x958] sm:$0xff]
        %v3461 = vld [vmem:[%s13 + $0x960] sm:$0xff]
        %v3462 = vld [vmem:[%s13 + $0x968] sm:$0xff]
        %v3463 = vld [vmem:[%s13 + $0x970] sm:$0xff]
        %v3464 = vld [vmem:[%s13 + $0x978] sm:$0xff]
        %v3465 = vld [vmem:[%s13 + $0x980] sm:$0xff]
        %v3466 = vld [vmem:[%s13 + $0x988] sm:$0xff]
        %v3467 = vld [vmem:[%s13 + $0x990] sm:$0xff]
        %v3468 = vld [vmem:[%s13 + $0x998] sm:$0xff]
        %v3469 = vld [vmem:[%s13 + $0x9a0] sm:$0xff]
        %v3470 = vld [vmem:[%s13 + $0x9a8] sm:$0xff]
        %v3471 = vld [vmem:[%s13 + $0x9b0] sm:$0xff]
        %v3472 = vld [vmem:[%s13 + $0x9b8] sm:$0xff]
        %v3473 = vld [vmem:[%s13 + $0x9c0] sm:$0xff]
        %v3474 = vld [vmem:[%s13 + $0x9c8] sm:$0xff]
        %v3475 = vld [vmem:[%s13 + $0x9d0] sm:$0xff]
        %v3476 = vld [vmem:[%s13 + $0x9d8] sm:$0xff]
        %v3477 = vld [vmem:[%s13 + $0x9e0] sm:$0xff]
        %v3478 = vld [vmem:[%s13 + $0x9e8] sm:$0xff]
        %v3479 = vld [vmem:[%s13 + $0x9f0] sm:$0xff]
        %v3480 = vld [vmem:[%s13 + $0x9f8] sm:$0xff]
        %v3481 = vld [vmem:[%s13 + $0xa00] sm:$0xff]
        %v3482 = vld [vmem:[%s13 + $0xa08] sm:$0xff]
        %v3483 = vld [vmem:[%s13 + $0xa10] sm:$0xff]
        %v3484 = vld [vmem:[%s13 + $0xa18] sm:$0xff]
        %v3485 = vld [vmem:[%s13 + $0xa20] sm:$0xff]
        %v3486 = vld [vmem:[%s13 + $0xa28] sm:$0xff]
        %v3487 = vld [vmem:[%s13 + $0xa30] sm:$0xff]
        %v3488 = vld [vmem:[%s13 + $0xa38] sm:$0xff]
        %v3489 = vld [vmem:[%s13 + $0xa40] sm:$0xff]
        %v3490 = vld [vmem:[%s13 + $0xa48] sm:$0xff]
        %v3491 = vld [vmem:[%s13 + $0xa50] sm:$0xff]
        %v3492 = vld [vmem:[%s13 + $0xa58] sm:$0xff]
        %v3493 = vld [vmem:[%s13 + $0xa60] sm:$0xff]
        %v3494 = vld [vmem:[%s13 + $0xa68] sm:$0xff]
        %v3495 = vld [vmem:[%s13 + $0xa70] sm:$0xff]
        %v3496 = vld [vmem:[%s13 + $0xa78] sm:$0xff]
        %v3497 = vld [vmem:[%s13 + $0xa80] sm:$0xff]
        %v3498 = vld [vmem:[%s13 + $0xa88] sm:$0xff]
        %v3499 = vld [vmem:[%s13 + $0xa90] sm:$0xff]
        %v3500 = vld [vmem:[%s13 + $0xa98] sm:$0xff]
        %v3501 = vld [vmem:[%s13 + $0xaa0] sm:$0xff]
        %v3502 = vld [vmem:[%s13 + $0xaa8] sm:$0xff]
        %v3503 = vld [vmem:[%s13 + $0xab0] sm:$0xff]
        %v3504 = vld [vmem:[%s13 + $0xab8] sm:$0xff]
        %v3505 = vld [vmem:[%s13 + $0xac0] sm:$0xff]
        %v3506 = vld [vmem:[%s13 + $0xac8] sm:$0xff]
        %v3507 = vld [vmem:[%s13 + $0xad0] sm:$0xff]
        %v3508 = vld [vmem:[%s13 + $0xad8] sm:$0xff]
        %v3509 = vld [vmem:[%s13 + $0xae0] sm:$0xff]
        %v3510 = vld [vmem:[%s13 + $0xae8] sm:$0xff]
        %v3511 = vld [vmem:[%s13 + $0xaf0] sm:$0xff]
        %v3512 = vld [vmem:[%s13 + $0xaf8] sm:$0xff]
        %v3513 = vld [vmem:[%s13 + $0xb00] sm:$0xff]
        %v3514 = vld [vmem:[%s13 + $0xb08] sm:$0xff]
        %v3515 = vld [vmem:[%s13 + $0xb10] sm:$0xff]
        %v3516 = vld [vmem:[%s13 + $0xb18] sm:$0xff]
        %v3517 = vld [vmem:[%s13 + $0xb20] sm:$0xff]
        %v3518 = vld [vmem:[%s13 + $0xb28] sm:$0xff]
        %v3519 = vld [vmem:[%s13 + $0xb30] sm:$0xff]
        %v3520 = vld [vmem:[%s13 + $0xb38] sm:$0xff]
        %v3521 = vld [vmem:[%s13 + $0xb40] sm:$0xff]
        %v3522 = vld [vmem:[%s13 + $0xb48] sm:$0xff]
        %v3523 = vld [vmem:[%s13 + $0xb50] sm:$0xff]
        %v3524 = vld [vmem:[%s13 + $0xb58] sm:$0xff]
        %v3525 = vld [vmem:[%s13 + $0xb60] sm:$0xff]
        %v3526 = vld [vmem:[%s13 + $0xb68] sm:$0xff]
        %v3527 = vld [vmem:[%s13 + $0xb70] sm:$0xff]
        %v3528 = vld [vmem:[%s13 + $0xb78] sm:$0xff]
        %v3529 = vld [vmem:[%s13 + $0xb80] sm:$0xff]
        %v3530 = vld [vmem:[%s13 + $0xb88] sm:$0xff]
        %v3531 = vld [vmem:[%s13 + $0xb90] sm:$0xff]
        %v3532 = vld [vmem:[%s13 + $0xb98] sm:$0xff]
        %v3533 = vld [vmem:[%s13 + $0xba0] sm:$0xff]
        %v3534 = vld [vmem:[%s13 + $0xba8] sm:$0xff]
        %v3535 = vld [vmem:[%s13 + $0xbb0] sm:$0xff]
        %v3536 = vld [vmem:[%s13 + $0xbb8] sm:$0xff]
        %v3537 = vld [vmem:[%s13 + $0xbc0] sm:$0xff]
        %v3538 = vld [vmem:[%s13 + $0xbc8] sm:$0xff]
        %v3539 = vld [vmem:[%s13 + $0xbd0] sm:$0xff]
        %v3540 = vld [vmem:[%s13 + $0xbd8] sm:$0xff]
        %v3541 = vld [vmem:[%s13 + $0xbe0] sm:$0xff]
        %v3542 = vld [vmem:[%s13 + $0xbe8] sm:$0xff]
        %v3543 = vld [vmem:[%s13 + $0xbf0] sm:$0xff]
        %v3544 = vld [vmem:[%s13 + $0xbf8] sm:$0xff]
        %3545 = vmatpush.msra.mxu0 %v3221
        %3546 = vmatpush.msra.mxu0 %v3217
        %3547 = vmatpush.msra.mxu0 %v3213
        %3548 = vmatpush.msra.mxu0 %v3209
        %3549 = vmatpush.msra.mxu0 %v3205
        %3550 = vmatpush.msra.mxu0 %v3201
        %3551 = vmatpush.msra.mxu0 %v3197
        %3552 = vmatpush.msra.mxu0 %v3193
        %3553 = vmatpush.msra.mxu0 %v3189
        %3554 = vmatpush.msra.mxu0 %v3185
        %3555 = vmatpush.msra.mxu0 %v3181
        %3556 = vmatpush.msra.mxu0 %v3177
        %3557 = vmatpush.msra.mxu0 %v3173
        %3558 = vmatpush.msra.mxu0 %v3169
        %3559 = vmatpush.msra.mxu0 %v3165
        %3560 = vmatpush.msra.mxu0 %v3161
        %3561 = vmatmul.f32.gmra.mxu0 %v3117
        %v3562 = vpop.f32.mrf.mxu0
        %v3563 = vadd.f32 0.0, %v3562
        %3564 = vdwg.mxu0
        %3565 = vmatpush.msra.mxu0 %v3285
        %3566 = vmatpush.msra.mxu0 %v3281
        %3567 = vmatpush.msra.mxu0 %v3277
        %3568 = vmatpush.msra.mxu0 %v3273
        %3569 = vmatpush.msra.mxu0 %v3269
        %3570 = vmatpush.msra.mxu0 %v3265
        %3571 = vmatpush.msra.mxu0 %v3261
        %3572 = vmatpush.msra.mxu0 %v3257
        %3573 = vmatpush.msra.mxu0 %v3253
        %3574 = vmatpush.msra.mxu0 %v3249
        %3575 = vmatpush.msra.mxu0 %v3245
        %3576 = vmatpush.msra.mxu0 %v3241
        %3577 = vmatpush.msra.mxu0 %v3237
        %3578 = vmatpush.msra.mxu0 %v3233
        %3579 = vmatpush.msra.mxu0 %v3229
        %3580 = vmatpush.msra.mxu0 %v3225
        %3581 = vmatmul.f32.gmra.mxu0 %v3140
        %v3582 = vpop.f32.mrf.mxu0
        %v3583 = vadd.f32 %v3563, %v3582
        %3584 = vdwg.mxu0
        %3585 = vmatpush.msra.mxu0 %v3349
        %3586 = vmatpush.msra.mxu0 %v3345
        %3587 = vmatpush.msra.mxu0 %v3341
        %3588 = vmatpush.msra.mxu0 %v3337
        %3589 = vmatpush.msra.mxu0 %v3333
        %3590 = vmatpush.msra.mxu0 %v3329
        %3591 = vmatpush.msra.mxu0 %v3325
        %3592 = vmatpush.msra.mxu0 %v3321
        %3593 = vmatpush.msra.mxu0 %v3317
        %3594 = vmatpush.msra.mxu0 %v3313
        %3595 = vmatpush.msra.mxu0 %v3309
        %3596 = vmatpush.msra.mxu0 %v3305
        %3597 = vmatpush.msra.mxu0 %v3301
        %3598 = vmatpush.msra.mxu0 %v3297
        %3599 = vmatpush.msra.mxu0 %v3293
        %3600 = vmatpush.msra.mxu0 %v3289
        %3601 = vmatmul.f32.gmra.mxu0 %v3147
        %v3602 = vpop.f32.mrf.mxu0
        %v3603 = vadd.f32 %v3583, %v3602
        %3604 = vdwg.mxu0
        %3605 = vmatpush.msra.mxu0 %v3413
        %3606 = vmatpush.msra.mxu0 %v3409
        %3607 = vmatpush.msra.mxu0 %v3405
        %3608 = vmatpush.msra.mxu0 %v3401
        %3609 = vmatpush.msra.mxu0 %v3397
        %3610 = vmatpush.msra.mxu0 %v3393
        %3611 = vmatpush.msra.mxu0 %v3389
        %3612 = vmatpush.msra.mxu0 %v3385
        %3613 = vmatpush.msra.mxu0 %v3381
        %3614 = vmatpush.msra.mxu0 %v3377
        %3615 = vmatpush.msra.mxu0 %v3373
        %3616 = vmatpush.msra.mxu0 %v3369
        %3617 = vmatpush.msra.mxu0 %v3365
        %3618 = vmatpush.msra.mxu0 %v3361
        %3619 = vmatpush.msra.mxu0 %v3357
        %3620 = vmatpush.msra.mxu0 %v3353
        %3621 = vmatmul.f32.gmra.mxu0 %v3148
        %v3622 = vpop.f32.mrf.mxu0
        %v3623 = vadd.f32 %v3603, %v3622
        %3624 = vdwg.mxu0
        %3625 = vmatpush.msra.mxu0 %v3477
        %3626 = vmatpush.msra.mxu0 %v3473
        %3627 = vmatpush.msra.mxu0 %v3469
        %3628 = vmatpush.msra.mxu0 %v3465
        %3629 = vmatpush.msra.mxu0 %v3461
        %3630 = vmatpush.msra.mxu0 %v3457
        %3631 = vmatpush.msra.mxu0 %v3453
        %3632 = vmatpush.msra.mxu0 %v3449
        %3633 = vmatpush.msra.mxu0 %v3445
        %3634 = vmatpush.msra.mxu0 %v3441
        %3635 = vmatpush.msra.mxu0 %v3437
        %3636 = vmatpush.msra.mxu0 %v3433
        %3637 = vmatpush.msra.mxu0 %v3429
        %3638 = vmatpush.msra.mxu0 %v3425
        %3639 = vmatpush.msra.mxu0 %v3421
        %3640 = vmatpush.msra.mxu0 %v3417
        %3641 = vmatmul.f32.gmra.mxu0 %v3155
        %v3642 = vpop.f32.mrf.mxu0
        %v3643 = vadd.f32 %v3623, %v3642
        %3644 = vdwg.mxu0
        %3645 = vmatpush.msra.mxu0 %v3541
        %3646 = vmatpush.msra.mxu0 %v3537
        %3647 = vmatpush.msra.mxu0 %v3533
        %3648 = vmatpush.msra.mxu0 %v3529
        %3649 = vmatpush.msra.mxu0 %v3525
        %3650 = vmatpush.msra.mxu0 %v3521
        %3651 = vmatpush.msra.mxu0 %v3517
        %3652 = vmatpush.msra.mxu0 %v3513
        %3653 = vmatpush.msra.mxu0 %v3509
        %3654 = vmatpush.msra.mxu0 %v3505
        %3655 = vmatpush.msra.mxu0 %v3501
        %3656 = vmatpush.msra.mxu0 %v3497
        %3657 = vmatpush.msra.mxu0 %v3493
        %3658 = vmatpush.msra.mxu0 %v3489
        %3659 = vmatpush.msra.mxu0 %v3485
        %3660 = vmatpush.msra.mxu0 %v3481
        %3661 = vmatmul.f32.gmra.mxu0 %v3158
        %v3662 = vpop.f32.mrf.mxu0
        %v3663 = vadd.f32 %v3643, %v3662
        %3664 = vdwg.mxu0
        %3665 = vmatpush.msra.mxu0 %v3222
        %3666 = vmatpush.msra.mxu0 %v3218
        %3667 = vmatpush.msra.mxu0 %v3214
        %3668 = vmatpush.msra.mxu0 %v3210
        %3669 = vmatpush.msra.mxu0 %v3206
        %3670 = vmatpush.msra.mxu0 %v3202
        %3671 = vmatpush.msra.mxu0 %v3198
        %3672 = vmatpush.msra.mxu0 %v3194
        %3673 = vmatpush.msra.mxu0 %v3190
        %3674 = vmatpush.msra.mxu0 %v3186
        %3675 = vmatpush.msra.mxu0 %v3182
        %3676 = vmatpush.msra.mxu0 %v3178
        %3677 = vmatpush.msra.mxu0 %v3174
        %3678 = vmatpush.msra.mxu0 %v3170
        %3679 = vmatpush.msra.mxu0 %v3166
        %3680 = vmatpush.msra.mxu0 %v3162
        %3681 = vmatmul.f32.gmra.mxu0 %v3117
        %v3682 = vpop.f32.mrf.mxu0
        %v3683 = vadd.f32 0.0, %v3682
        %3684 = vdwg.mxu0
        %3685 = vmatpush.msra.mxu0 %v3286
        %3686 = vmatpush.msra.mxu0 %v3282
        %3687 = vmatpush.msra.mxu0 %v3278
        %3688 = vmatpush.msra.mxu0 %v3274
        %3689 = vmatpush.msra.mxu0 %v3270
        %3690 = vmatpush.msra.mxu0 %v3266
        %3691 = vmatpush.msra.mxu0 %v3262
        %3692 = vmatpush.msra.mxu0 %v3258
        %3693 = vmatpush.msra.mxu0 %v3254
        %3694 = vmatpush.msra.mxu0 %v3250
        %3695 = vmatpush.msra.mxu0 %v3246
        %3696 = vmatpush.msra.mxu0 %v3242
        %3697 = vmatpush.msra.mxu0 %v3238
        %3698 = vmatpush.msra.mxu0 %v3234
        %3699 = vmatpush.msra.mxu0 %v3230
        %3700 = vmatpush.msra.mxu0 %v3226
        %3701 = vmatmul.f32.gmra.mxu0 %v3140
        %v3702 = vpop.f32.mrf.mxu0
        %v3703 = vadd.f32 %v3683, %v3702
        %3704 = vdwg.mxu0
        %3705 = vmatpush.msra.mxu0 %v3350
        %3706 = vmatpush.msra.mxu0 %v3346
        %3707 = vmatpush.msra.mxu0 %v3342
        %3708 = vmatpush.msra.mxu0 %v3338
        %3709 = vmatpush.msra.mxu0 %v3334
        %3710 = vmatpush.msra.mxu0 %v3330
        %3711 = vmatpush.msra.mxu0 %v3326
        %3712 = vmatpush.msra.mxu0 %v3322
        %3713 = vmatpush.msra.mxu0 %v3318
        %3714 = vmatpush.msra.mxu0 %v3314
        %3715 = vmatpush.msra.mxu0 %v3310
        %3716 = vmatpush.msra.mxu0 %v3306
        %3717 = vmatpush.msra.mxu0 %v3302
        %3718 = vmatpush.msra.mxu0 %v3298
        %3719 = vmatpush.msra.mxu0 %v3294
        %3720 = vmatpush.msra.mxu0 %v3290
        %3721 = vmatmul.f32.gmra.mxu0 %v3147
        %v3722 = vpop.f32.mrf.mxu0
        %v3723 = vadd.f32 %v3703, %v3722
        %3724 = vdwg.mxu0
        %3725 = vmatpush.msra.mxu0 %v3414
        %3726 = vmatpush.msra.mxu0 %v3410
        %3727 = vmatpush.msra.mxu0 %v3406
        %3728 = vmatpush.msra.mxu0 %v3402
        %3729 = vmatpush.msra.mxu0 %v3398
        %3730 = vmatpush.msra.mxu0 %v3394
        %3731 = vmatpush.msra.mxu0 %v3390
        %3732 = vmatpush.msra.mxu0 %v3386
        %3733 = vmatpush.msra.mxu0 %v3382
        %3734 = vmatpush.msra.mxu0 %v3378
        %3735 = vmatpush.msra.mxu0 %v3374
        %3736 = vmatpush.msra.mxu0 %v3370
        %3737 = vmatpush.msra.mxu0 %v3366
        %3738 = vmatpush.msra.mxu0 %v3362
        %3739 = vmatpush.msra.mxu0 %v3358
        %3740 = vmatpush.msra.mxu0 %v3354
        %3741 = vmatmul.f32.gmra.mxu0 %v3148
        %v3742 = vpop.f32.mrf.mxu0
        %v3743 = vadd.f32 %v3723, %v3742
        %3744 = vdwg.mxu0
        %3745 = vmatpush.msra.mxu0 %v3478
        %3746 = vmatpush.msra.mxu0 %v3474
        %3747 = vmatpush.msra.mxu0 %v3470
        %3748 = vmatpush.msra.mxu0 %v3466
        %3749 = vmatpush.msra.mxu0 %v3462
        %3750 = vmatpush.msra.mxu0 %v3458
        %3751 = vmatpush.msra.mxu0 %v3454
        %3752 = vmatpush.msra.mxu0 %v3450
        %3753 = vmatpush.msra.mxu0 %v3446
        %3754 = vmatpush.msra.mxu0 %v3442
        %3755 = vmatpush.msra.mxu0 %v3438
        %3756 = vmatpush.msra.mxu0 %v3434
        %3757 = vmatpush.msra.mxu0 %v3430
        %3758 = vmatpush.msra.mxu0 %v3426
        %3759 = vmatpush.msra.mxu0 %v3422
        %3760 = vmatpush.msra.mxu0 %v3418
        %3761 = vmatmul.f32.gmra.mxu0 %v3155
        %v3762 = vpop.f32.mrf.mxu0
        %v3763 = vadd.f32 %v3743, %v3762
        %3764 = vdwg.mxu0
        %3765 = vmatpush.msra.mxu0 %v3542
        %3766 = vmatpush.msra.mxu0 %v3538
        %3767 = vmatpush.msra.mxu0 %v3534
        %3768 = vmatpush.msra.mxu0 %v3530
        %3769 = vmatpush.msra.mxu0 %v3526
        %3770 = vmatpush.msra.mxu0 %v3522
        %3771 = vmatpush.msra.mxu0 %v3518
        %3772 = vmatpush.msra.mxu0 %v3514
        %3773 = vmatpush.msra.mxu0 %v3510
        %3774 = vmatpush.msra.mxu0 %v3506
        %3775 = vmatpush.msra.mxu0 %v3502
        %3776 = vmatpush.msra.mxu0 %v3498
        %3777 = vmatpush.msra.mxu0 %v3494
        %3778 = vmatpush.msra.mxu0 %v3490
        %3779 = vmatpush.msra.mxu0 %v3486
        %3780 = vmatpush.msra.mxu0 %v3482
        %3781 = vmatmul.f32.gmra.mxu0 %v3158
        %v3782 = vpop.f32.mrf.mxu0
        %v3783 = vadd.f32 %v3763, %v3782
        %3784 = vdwg.mxu0
        %3785 = vmatpush.msra.mxu0 %v3223
        %3786 = vmatpush.msra.mxu0 %v3219
        %3787 = vmatpush.msra.mxu0 %v3215
        %3788 = vmatpush.msra.mxu0 %v3211
        %3789 = vmatpush.msra.mxu0 %v3207
        %3790 = vmatpush.msra.mxu0 %v3203
        %3791 = vmatpush.msra.mxu0 %v3199
        %3792 = vmatpush.msra.mxu0 %v3195
        %3793 = vmatpush.msra.mxu0 %v3191
        %3794 = vmatpush.msra.mxu0 %v3187
        %3795 = vmatpush.msra.mxu0 %v3183
        %3796 = vmatpush.msra.mxu0 %v3179
        %3797 = vmatpush.msra.mxu0 %v3175
        %3798 = vmatpush.msra.mxu0 %v3171
        %3799 = vmatpush.msra.mxu0 %v3167
        %3800 = vmatpush.msra.mxu0 %v3163
        %3801 = vmatmul.f32.gmra.mxu0 %v3117
        %v3802 = vpop.f32.mrf.mxu0
        %v3803 = vadd.f32 0.0, %v3802
        %3804 = vdwg.mxu0
        %3805 = vmatpush.msra.mxu0 %v3287
        %3806 = vmatpush.msra.mxu0 %v3283
        %3807 = vmatpush.msra.mxu0 %v3279
        %3808 = vmatpush.msra.mxu0 %v3275
        %3809 = vmatpush.msra.mxu0 %v3271
        %3810 = vmatpush.msra.mxu0 %v3267
        %3811 = vmatpush.msra.mxu0 %v3263
        %3812 = vmatpush.msra.mxu0 %v3259
        %3813 = vmatpush.msra.mxu0 %v3255
        %3814 = vmatpush.msra.mxu0 %v3251
        %3815 = vmatpush.msra.mxu0 %v3247
        %3816 = vmatpush.msra.mxu0 %v3243
        %3817 = vmatpush.msra.mxu0 %v3239
        %3818 = vmatpush.msra.mxu0 %v3235
        %3819 = vmatpush.msra.mxu0 %v3231
        %3820 = vmatpush.msra.mxu0 %v3227
        %3821 = vmatmul.f32.gmra.mxu0 %v3140
        %v3822 = vpop.f32.mrf.mxu0
        %v3823 = vadd.f32 %v3803, %v3822
        %3824 = vdwg.mxu0
        %3825 = vmatpush.msra.mxu0 %v3351
        %3826 = vmatpush.msra.mxu0 %v3347
        %3827 = vmatpush.msra.mxu0 %v3343
        %3828 = vmatpush.msra.mxu0 %v3339
        %3829 = vmatpush.msra.mxu0 %v3335
        %3830 = vmatpush.msra.mxu0 %v3331
        %3831 = vmatpush.msra.mxu0 %v3327
        %3832 = vmatpush.msra.mxu0 %v3323
        %3833 = vmatpush.msra.mxu0 %v3319
        %3834 = vmatpush.msra.mxu0 %v3315
        %3835 = vmatpush.msra.mxu0 %v3311
        %3836 = vmatpush.msra.mxu0 %v3307
        %3837 = vmatpush.msra.mxu0 %v3303
        %3838 = vmatpush.msra.mxu0 %v3299
        %3839 = vmatpush.msra.mxu0 %v3295
        %3840 = vmatpush.msra.mxu0 %v3291
        %3841 = vmatmul.f32.gmra.mxu0 %v3147
        %v3842 = vpop.f32.mrf.mxu0
        %v3843 = vadd.f32 %v3823, %v3842
        %3844 = vdwg.mxu0
        %3845 = vmatpush.msra.mxu0 %v3415
        %3846 = vmatpush.msra.mxu0 %v3411
        %3847 = vmatpush.msra.mxu0 %v3407
        %3848 = vmatpush.msra.mxu0 %v3403
        %3849 = vmatpush.msra.mxu0 %v3399
        %3850 = vmatpush.msra.mxu0 %v3395
        %3851 = vmatpush.msra.mxu0 %v3391
        %3852 = vmatpush.msra.mxu0 %v3387
        %3853 = vmatpush.msra.mxu0 %v3383
        %3854 = vmatpush.msra.mxu0 %v3379
        %3855 = vmatpush.msra.mxu0 %v3375
        %3856 = vmatpush.msra.mxu0 %v3371
        %3857 = vmatpush.msra.mxu0 %v3367
        %3858 = vmatpush.msra.mxu0 %v3363
        %3859 = vmatpush.msra.mxu0 %v3359
        %3860 = vmatpush.msra.mxu0 %v3355
        %3861 = vmatmul.f32.gmra.mxu0 %v3148
        %v3862 = vpop.f32.mrf.mxu0
        %v3863 = vadd.f32 %v3843, %v3862
        %3864 = vdwg.mxu0
        %3865 = vmatpush.msra.mxu0 %v3479
        %3866 = vmatpush.msra.mxu0 %v3475
        %3867 = vmatpush.msra.mxu0 %v3471
        %3868 = vmatpush.msra.mxu0 %v3467
        %3869 = vmatpush.msra.mxu0 %v3463
        %3870 = vmatpush.msra.mxu0 %v3459
        %3871 = vmatpush.msra.mxu0 %v3455
        %3872 = vmatpush.msra.mxu0 %v3451
        %3873 = vmatpush.msra.mxu0 %v3447
        %3874 = vmatpush.msra.mxu0 %v3443
        %3875 = vmatpush.msra.mxu0 %v3439
        %3876 = vmatpush.msra.mxu0 %v3435
        %3877 = vmatpush.msra.mxu0 %v3431
        %3878 = vmatpush.msra.mxu0 %v3427
        %3879 = vmatpush.msra.mxu0 %v3423
        %3880 = vmatpush.msra.mxu0 %v3419
        %3881 = vmatmul.f32.gmra.mxu0 %v3155
        %v3882 = vpop.f32.mrf.mxu0
        %v3883 = vadd.f32 %v3863, %v3882
        %3884 = vdwg.mxu0
        %3885 = vmatpush.msra.mxu0 %v3543
        %3886 = vmatpush.msra.mxu0 %v3539
        %3887 = vmatpush.msra.mxu0 %v3535
        %3888 = vmatpush.msra.mxu0 %v3531
        %3889 = vmatpush.msra.mxu0 %v3527
        %3890 = vmatpush.msra.mxu0 %v3523
        %3891 = vmatpush.msra.mxu0 %v3519
        %3892 = vmatpush.msra.mxu0 %v3515
        %3893 = vmatpush.msra.mxu0 %v3511
        %3894 = vmatpush.msra.mxu0 %v3507
        %3895 = vmatpush.msra.mxu0 %v3503
        %3896 = vmatpush.msra.mxu0 %v3499
        %3897 = vmatpush.msra.mxu0 %v3495
        %3898 = vmatpush.msra.mxu0 %v3491
        %3899 = vmatpush.msra.mxu0 %v3487
        %3900 = vmatpush.msra.mxu0 %v3483
        %3901 = vmatmul.f32.gmra.mxu0 %v3158
        %v3902 = vpop.f32.mrf.mxu0
        %v3903 = vadd.f32 %v3883, %v3902
        %3904 = vdwg.mxu0
        %3905 = vmatpush.msra.mxu0 %v3224
        %3906 = vmatpush.msra.mxu0 %v3220
        %3907 = vmatpush.msra.mxu0 %v3216
        %3908 = vmatpush.msra.mxu0 %v3212
        %3909 = vmatpush.msra.mxu0 %v3208
        %3910 = vmatpush.msra.mxu0 %v3204
        %3911 = vmatpush.msra.mxu0 %v3200
        %3912 = vmatpush.msra.mxu0 %v3196
        %3913 = vmatpush.msra.mxu0 %v3192
        %3914 = vmatpush.msra.mxu0 %v3188
        %3915 = vmatpush.msra.mxu0 %v3184
        %3916 = vmatpush.msra.mxu0 %v3180
        %3917 = vmatpush.msra.mxu0 %v3176
        %3918 = vmatpush.msra.mxu0 %v3172
        %3919 = vmatpush.msra.mxu0 %v3168
        %3920 = vmatpush.msra.mxu0 %v3164
        %3921 = vmatmul.f32.gmra.mxu0 %v3117
        %v3922 = vpop.f32.mrf.mxu0
        %v3923 = vadd.f32 0.0, %v3922
        %3924 = vdwg.mxu0
        %3925 = vmatpush.msra.mxu0 %v3288
        %3926 = vmatpush.msra.mxu0 %v3284
        %3927 = vmatpush.msra.mxu0 %v3280
        %3928 = vmatpush.msra.mxu0 %v3276
        %3929 = vmatpush.msra.mxu0 %v3272
        %3930 = vmatpush.msra.mxu0 %v3268
        %3931 = vmatpush.msra.mxu0 %v3264
        %3932 = vmatpush.msra.mxu0 %v3260
        %3933 = vmatpush.msra.mxu0 %v3256
        %3934 = vmatpush.msra.mxu0 %v3252
        %3935 = vmatpush.msra.mxu0 %v3248
        %3936 = vmatpush.msra.mxu0 %v3244
        %3937 = vmatpush.msra.mxu0 %v3240
        %3938 = vmatpush.msra.mxu0 %v3236
        %3939 = vmatpush.msra.mxu0 %v3232
        %3940 = vmatpush.msra.mxu0 %v3228
        %3941 = vmatmul.f32.gmra.mxu0 %v3140
        %v3942 = vpop.f32.mrf.mxu0
        %v3943 = vadd.f32 %v3923, %v3942
        %3944 = vdwg.mxu0
        %3945 = vmatpush.msra.mxu0 %v3352
        %3946 = vmatpush.msra.mxu0 %v3348
        %3947 = vmatpush.msra.mxu0 %v3344
        %3948 = vmatpush.msra.mxu0 %v3340
        %3949 = vmatpush.msra.mxu0 %v3336
        %3950 = vmatpush.msra.mxu0 %v3332
        %3951 = vmatpush.msra.mxu0 %v3328
        %3952 = vmatpush.msra.mxu0 %v3324
        %3953 = vmatpush.msra.mxu0 %v3320
        %3954 = vmatpush.msra.mxu0 %v3316
        %3955 = vmatpush.msra.mxu0 %v3312
        %3956 = vmatpush.msra.mxu0 %v3308
        %3957 = vmatpush.msra.mxu0 %v3304
        %3958 = vmatpush.msra.mxu0 %v3300
        %3959 = vmatpush.msra.mxu0 %v3296
        %3960 = vmatpush.msra.mxu0 %v3292
        %3961 = vmatmul.f32.gmra.mxu0 %v3147
        %v3962 = vpop.f32.mrf.mxu0
        %v3963 = vadd.f32 %v3943, %v3962
        %3964 = vdwg.mxu0
        %3965 = vmatpush.msra.mxu0 %v3416
        %3966 = vmatpush.msra.mxu0 %v3412
        %3967 = vmatpush.msra.mxu0 %v3408
        %3968 = vmatpush.msra.mxu0 %v3404
        %3969 = vmatpush.msra.mxu0 %v3400
        %3970 = vmatpush.msra.mxu0 %v3396
        %3971 = vmatpush.msra.mxu0 %v3392
        %3972 = vmatpush.msra.mxu0 %v3388
        %3973 = vmatpush.msra.mxu0 %v3384
        %3974 = vmatpush.msra.mxu0 %v3380
        %3975 = vmatpush.msra.mxu0 %v3376
        %3976 = vmatpush.msra.mxu0 %v3372
        %3977 = vmatpush.msra.mxu0 %v3368
        %3978 = vmatpush.msra.mxu0 %v3364
        %3979 = vmatpush.msra.mxu0 %v3360
        %3980 = vmatpush.msra.mxu0 %v3356
        %3981 = vmatmul.f32.gmra.mxu0 %v3148
        %v3982 = vpop.f32.mrf.mxu0
        %v3983 = vadd.f32 %v3963, %v3982
        %3984 = vdwg.mxu0
        %3985 = vmatpush.msra.mxu0 %v3480
        %3986 = vmatpush.msra.mxu0 %v3476
        %3987 = vmatpush.msra.mxu0 %v3472
        %3988 = vmatpush.msra.mxu0 %v3468
        %3989 = vmatpush.msra.mxu0 %v3464
        %3990 = vmatpush.msra.mxu0 %v3460
        %3991 = vmatpush.msra.mxu0 %v3456
        %3992 = vmatpush.msra.mxu0 %v3452
        %3993 = vmatpush.msra.mxu0 %v3448
        %3994 = vmatpush.msra.mxu0 %v3444
        %3995 = vmatpush.msra.mxu0 %v3440
        %3996 = vmatpush.msra.mxu0 %v3436
        %3997 = vmatpush.msra.mxu0 %v3432
        %3998 = vmatpush.msra.mxu0 %v3428
        %3999 = vmatpush.msra.mxu0 %v3424
        %4000 = vmatpush.msra.mxu0 %v3420
        %4001 = vmatmul.f32.gmra.mxu0 %v3155
        %v4002 = vpop.f32.mrf.mxu0
        %v4003 = vadd.f32 %v3983, %v4002
        %4004 = vdwg.mxu0
        %4005 = vmatpush.msra.mxu0 %v3544
        %4006 = vmatpush.msra.mxu0 %v3540
        %4007 = vmatpush.msra.mxu0 %v3536
        %4008 = vmatpush.msra.mxu0 %v3532
        %4009 = vmatpush.msra.mxu0 %v3528
        %4010 = vmatpush.msra.mxu0 %v3524
        %4011 = vmatpush.msra.mxu0 %v3520
        %4012 = vmatpush.msra.mxu0 %v3516
        %4013 = vmatpush.msra.mxu0 %v3512
        %4014 = vmatpush.msra.mxu0 %v3508
        %4015 = vmatpush.msra.mxu0 %v3504
        %4016 = vmatpush.msra.mxu0 %v3500
        %4017 = vmatpush.msra.mxu0 %v3496
        %4018 = vmatpush.msra.mxu0 %v3492
        %4019 = vmatpush.msra.mxu0 %v3488
        %4020 = vmatpush.msra.mxu0 %v3484
        %4021 = vmatmul.f32.gmra.mxu0 %v3158
        %v4022 = vpop.f32.mrf.mxu0
        %v4023 = vadd.f32 %v4003, %v4022
        %4024 = vdwg.mxu0
        %v4025 = vld [vmem:[%s14] sm:$0xf]
        %v4027 = vperm.slane %v4025, 0
        %v4028 = vperm.slane %v4025, 1
        %v4029 = vperm.slane %v4025, 2
        %v4030 = vperm.slane %v4025, 3
        %v4035 = vmul.f32 %v3663, %v4027
        %v4036 = vmul.f32 %v3783, %v4028
        %v4037 = vmul.f32 %v3903, %v4029
        %v4038 = vmul.f32 %v4023, %v4030
        %v4039 = vld [vmem:[%s15] sm:$0xf]
        %v4041 = vperm.slane %v4039, 0
        %v4042 = vperm.slane %v4039, 1
        %v4043 = vperm.slane %v4039, 2
        %v4044 = vperm.slane %v4039, 3
        %v4049 = vadd.f32 %v4035, %v4041
        %v4050 = vadd.f32 %v4036, %v4042
        %v4051 = vadd.f32 %v4037, %v4043
        %v4052 = vadd.f32 %v4038, %v4044
        %v4053 = vmax.f32 %v4049, 0.0
        %v4054 = vmax.f32 %v4050, 0.0
        %v4055 = vmax.f32 %v4051, 0.0
        %v4056 = vmax.f32 %v4052, 0.0
        %v4057 = vld [vmem:[%s16] sm:$0x1]
        %vm4058 = vcmask 56320
        %v4060 = vsel %vm4058, %v4057, 0
        %v4063 = vsel %vm1815, %v4053, 0
        %v4066 = vsel %vm1815, %v4054, 0
        %v4069 = vsel %vm1815, %v4055, 0
        %v4072 = vsel %vm1815, %v4056, 0
        %4074 = vmatpush.msra.mxu0 0.0
        %4075 = vmatpush.msra.mxu0 0.0
        %4076 = vmatpush.msra.mxu0 0.0
        %4077 = vmatpush.msra.mxu0 0.0
        %4078 = vmatpush.msra.mxu0 0.0
        %4079 = vmatpush.msra.mxu0 0.0
        %4080 = vmatpush.msra.mxu0 0.0
        %4081 = vmatpush.msra.mxu0 0.0
        %4082 = vmatpush.msra.mxu0 0.0
        %4083 = vmatpush.msra.mxu0 0.0
        %4084 = vmatpush.msra.mxu0 0.0
        %4085 = vmatpush.msra.mxu0 0.0
        %4086 = vmatpush.msra.mxu0 0.0
        %4087 = vmatpush.msra.mxu0 0.0
        %4088 = vmatpush.msra.mxu0 0.0
        %4089 = vmatpush.msra.mxu0 %v4063
        %4090 = vmatmul.f32.gmra.mxu0 %v4060
        %v4091 = vpop.f32.mrf.mxu0
        %v4092 = vadd.f32 0.0, %v4091
        %4093 = vdwg.mxu0
        %4094 = vmatpush.msra.mxu0 0.0
        %4095 = vmatpush.msra.mxu0 0.0
        %4096 = vmatpush.msra.mxu0 0.0
        %4097 = vmatpush.msra.mxu0 0.0
        %4098 = vmatpush.msra.mxu0 0.0
        %4099 = vmatpush.msra.mxu0 0.0
        %4100 = vmatpush.msra.mxu0 0.0
        %4101 = vmatpush.msra.mxu0 0.0
        %4102 = vmatpush.msra.mxu0 0.0
        %4103 = vmatpush.msra.mxu0 0.0
        %4104 = vmatpush.msra.mxu0 0.0
        %4105 = vmatpush.msra.mxu0 0.0
        %4106 = vmatpush.msra.mxu0 0.0
        %4107 = vmatpush.msra.mxu0 0.0
        %4108 = vmatpush.msra.mxu0 0.0
        %4109 = vmatpush.msra.mxu0 %v4066
        %4110 = vmatmul.f32.gmra.mxu0 %v4060
        %v4111 = vpop.f32.mrf.mxu0
        %v4112 = vadd.f32 0.0, %v4111
        %4113 = vdwg.mxu0
        %4114 = vmatpush.msra.mxu0 0.0
        %4115 = vmatpush.msra.mxu0 0.0
        %4116 = vmatpush.msra.mxu0 0.0
        %4117 = vmatpush.msra.mxu0 0.0
        %4118 = vmatpush.msra.mxu0 0.0
        %4119 = vmatpush.msra.mxu0 0.0
        %4120 = vmatpush.msra.mxu0 0.0
        %4121 = vmatpush.msra.mxu0 0.0
        %4122 = vmatpush.msra.mxu0 0.0
        %4123 = vmatpush.msra.mxu0 0.0
        %4124 = vmatpush.msra.mxu0 0.0
        %4125 = vmatpush.msra.mxu0 0.0
        %4126 = vmatpush.msra.mxu0 0.0
        %4127 = vmatpush.msra.mxu0 0.0
        %4128 = vmatpush.msra.mxu0 0.0
        %4129 = vmatpush.msra.mxu0 %v4069
        %4130 = vmatmul.f32.gmra.mxu0 %v4060
        %v4131 = vpop.f32.mrf.mxu0
        %v4132 = vadd.f32 0.0, %v4131
        %4133 = vdwg.mxu0
        %4134 = vmatpush.msra.mxu0 0.0
        %4135 = vmatpush.msra.mxu0 0.0
        %4136 = vmatpush.msra.mxu0 0.0
        %4137 = vmatpush.msra.mxu0 0.0
        %4138 = vmatpush.msra.mxu0 0.0
        %4139 = vmatpush.msra.mxu0 0.0
        %4140 = vmatpush.msra.mxu0 0.0
        %4141 = vmatpush.msra.mxu0 0.0
        %4142 = vmatpush.msra.mxu0 0.0
        %4143 = vmatpush.msra.mxu0 0.0
        %4144 = vmatpush.msra.mxu0 0.0
        %4145 = vmatpush.msra.mxu0 0.0
        %4146 = vmatpush.msra.mxu0 0.0
        %4147 = vmatpush.msra.mxu0 0.0
        %4148 = vmatpush.msra.mxu0 0.0
        %4149 = vmatpush.msra.mxu0 %v4072
        %4150 = vmatmul.f32.gmra.mxu0 %v4060
        %v4151 = vpop.f32.mrf.mxu0
        %v4152 = vadd.f32 0.0, %v4151
        %4153 = vdwg.mxu0
        %v4154 = vld [vmem:[#allocation5] sm:$0xff]
        %v4155 = vld [vmem:[#allocation5 + $0x8] sm:$0xff]
        %v4156 = vld [vmem:[#allocation5 + $0x10] sm:$0xff]
        %v4157 = vld [vmem:[#allocation5 + $0x18] sm:$0xff]
        %v4158 = vld [vmem:[#allocation5 + $0x20] sm:$0xff]
        %v4159 = vld [vmem:[#allocation5 + $0x28] sm:$0xff]
        %v4160 = vld [vmem:[#allocation5 + $0x30] sm:$0xff]
        %v4161 = vld [vmem:[#allocation5 + $0x38] sm:$0xff]
        %v4162 = vld [vmem:[#allocation5 + $0x40] sm:$0xff]
        %v4163 = vld [vmem:[#allocation5 + $0x48] sm:$0xff]
        %v4164 = vld [vmem:[#allocation5 + $0x50] sm:$0xff]
        %v4165 = vld [vmem:[#allocation5 + $0x58] sm:$0xff]
        %v4166 = vld [vmem:[#allocation5 + $0x60] sm:$0xff]
        %v4167 = vld [vmem:[#allocation5 + $0x68] sm:$0xff]
        %v4168 = vld [vmem:[#allocation5 + $0x70] sm:$0xff]
        %v4169 = vld [vmem:[#allocation5 + $0x78] sm:$0xff]
        %v4170 = vld [vmem:[#allocation5 + $0x80] sm:$0xff]
        %v4171 = vld [vmem:[#allocation5 + $0x88] sm:$0xff]
        %v4172 = vld [vmem:[#allocation5 + $0x90] sm:$0xff]
        %v4173 = vld [vmem:[#allocation5 + $0x98] sm:$0xff]
        %v4174 = vld [vmem:[#allocation5 + $0xa0] sm:$0xff]
        %v4175 = vld [vmem:[#allocation5 + $0xa8] sm:$0xff]
        %v4176 = vld [vmem:[#allocation5 + $0xb0] sm:$0xff]
        %v4177 = vld [vmem:[#allocation5 + $0xb8] sm:$0xff]
        %v4178 = vld [vmem:[#allocation5 + $0xc0] sm:$0xff]
        %v4179 = vld [vmem:[#allocation5 + $0xc8] sm:$0xff]
        %v4180 = vld [vmem:[#allocation5 + $0xd0] sm:$0xff]
        %v4181 = vld [vmem:[#allocation5 + $0xd8] sm:$0xff]
        %v4182 = vld [vmem:[#allocation5 + $0xe0] sm:$0xff]
        %v4183 = vld [vmem:[#allocation5 + $0xe8] sm:$0xff]
        %v4184 = vld [vmem:[#allocation5 + $0xf0] sm:$0xff]
        %v4185 = vld [vmem:[#allocation5 + $0xf8] sm:$0xff]
        %v4186 = vld [vmem:[#allocation5 + $0x100] sm:$0xff]
        %v4187 = vld [vmem:[#allocation5 + $0x108] sm:$0xff]
        %v4188 = vld [vmem:[#allocation5 + $0x110] sm:$0xff]
        %v4189 = vld [vmem:[#allocation5 + $0x118] sm:$0xff]
        %v4190 = vld [vmem:[#allocation5 + $0x120] sm:$0xff]
        %v4191 = vld [vmem:[#allocation5 + $0x128] sm:$0xff]
        %v4192 = vld [vmem:[#allocation5 + $0x130] sm:$0xff]
        %v4193 = vld [vmem:[#allocation5 + $0x138] sm:$0xff]
        %v4194 = vld [vmem:[#allocation5 + $0x140] sm:$0xff]
        %v4195 = vld [vmem:[#allocation5 + $0x148] sm:$0xff]
        %v4196 = vld [vmem:[#allocation5 + $0x150] sm:$0xff]
        %v4197 = vld [vmem:[#allocation5 + $0x158] sm:$0xff]
        %v4198 = vld [vmem:[#allocation5 + $0x160] sm:$0xff]
        %v4199 = vld [vmem:[#allocation5 + $0x168] sm:$0xff]
        %v4200 = vld [vmem:[#allocation5 + $0x170] sm:$0xff]
        %v4201 = vld [vmem:[#allocation5 + $0x178] sm:$0xff]
        %v4202 = vld [vmem:[#allocation5 + $0x180] sm:$0xff]
        %v4203 = vld [vmem:[#allocation5 + $0x188] sm:$0xff]
        %v4204 = vld [vmem:[#allocation5 + $0x190] sm:$0xff]
        %v4205 = vld [vmem:[#allocation5 + $0x198] sm:$0xff]
        %v4206 = vld [vmem:[#allocation5 + $0x1a0] sm:$0xff]
        %v4207 = vld [vmem:[#allocation5 + $0x1a8] sm:$0xff]
        %v4208 = vld [vmem:[#allocation5 + $0x1b0] sm:$0xff]
        %v4209 = vld [vmem:[#allocation5 + $0x1b8] sm:$0xff]
        %v4210 = vld [vmem:[#allocation5 + $0x1c0] sm:$0xff]
        %v4211 = vld [vmem:[#allocation5 + $0x1c8] sm:$0xff]
        %v4212 = vld [vmem:[#allocation5 + $0x1d0] sm:$0xff]
        %v4213 = vld [vmem:[#allocation5 + $0x1d8] sm:$0xff]
        %v4214 = vld [vmem:[#allocation5 + $0x1e0] sm:$0xff]
        %v4215 = vld [vmem:[#allocation5 + $0x1e8] sm:$0xff]
        %v4216 = vld [vmem:[#allocation5 + $0x1f0] sm:$0xff]
        %v4217 = vld [vmem:[#allocation5 + $0x1f8] sm:$0xff]
        %v4218 = vld [vmem:[#allocation5 + $0x200] sm:$0xff]
        %v4219 = vld [vmem:[#allocation5 + $0x208] sm:$0xff]
        %v4220 = vld [vmem:[#allocation5 + $0x210] sm:$0xff]
        %v4221 = vld [vmem:[#allocation5 + $0x218] sm:$0xff]
        %v4222 = vld [vmem:[#allocation5 + $0x220] sm:$0xff]
        %v4223 = vld [vmem:[#allocation5 + $0x228] sm:$0xff]
        %v4224 = vld [vmem:[#allocation5 + $0x230] sm:$0xff]
        %v4225 = vld [vmem:[#allocation5 + $0x238] sm:$0xff]
        %v4226 = vld [vmem:[#allocation5 + $0x240] sm:$0xff]
        %v4227 = vld [vmem:[#allocation5 + $0x248] sm:$0xff]
        %v4228 = vld [vmem:[#allocation5 + $0x250] sm:$0xff]
        %v4229 = vld [vmem:[#allocation5 + $0x258] sm:$0xff]
        %v4230 = vld [vmem:[#allocation5 + $0x260] sm:$0xff]
        %v4231 = vld [vmem:[#allocation5 + $0x268] sm:$0xff]
        %v4232 = vld [vmem:[#allocation5 + $0x270] sm:$0xff]
        %v4233 = vld [vmem:[#allocation5 + $0x278] sm:$0xff]
        %v4234 = vld [vmem:[#allocation5 + $0x280] sm:$0xff]
        %v4235 = vld [vmem:[#allocation5 + $0x288] sm:$0xff]
        %v4236 = vld [vmem:[#allocation5 + $0x290] sm:$0xff]
        %v4237 = vld [vmem:[#allocation5 + $0x298] sm:$0xff]
        %v4238 = vld [vmem:[#allocation5 + $0x2a0] sm:$0xff]
        %v4239 = vld [vmem:[#allocation5 + $0x2a8] sm:$0xff]
        %v4240 = vld [vmem:[#allocation5 + $0x2b0] sm:$0xff]
        %v4241 = vld [vmem:[#allocation5 + $0x2b8] sm:$0xff]
        %v4242 = vld [vmem:[#allocation5 + $0x2c0] sm:$0xff]
        %v4243 = vld [vmem:[#allocation5 + $0x2c8] sm:$0xff]
        %v4244 = vld [vmem:[#allocation5 + $0x2d0] sm:$0xff]
        %v4245 = vld [vmem:[#allocation5 + $0x2d8] sm:$0xff]
        %v4246 = vld [vmem:[#allocation5 + $0x2e0] sm:$0xff]
        %v4247 = vld [vmem:[#allocation5 + $0x2e8] sm:$0xff]
        %v4248 = vld [vmem:[#allocation5 + $0x2f0] sm:$0xff]
        %v4249 = vld [vmem:[#allocation5 + $0x2f8] sm:$0xff]
        %v4250 = vld [vmem:[#allocation5 + $0x300] sm:$0xff]
        %v4251 = vld [vmem:[#allocation5 + $0x308] sm:$0xff]
        %v4252 = vld [vmem:[#allocation5 + $0x310] sm:$0xff]
        %v4253 = vld [vmem:[#allocation5 + $0x318] sm:$0xff]
        %v4254 = vld [vmem:[#allocation5 + $0x320] sm:$0xff]
        %v4255 = vld [vmem:[#allocation5 + $0x328] sm:$0xff]
        %v4256 = vld [vmem:[#allocation5 + $0x330] sm:$0xff]
        %v4257 = vld [vmem:[#allocation5 + $0x338] sm:$0xff]
        %v4258 = vld [vmem:[#allocation5 + $0x340] sm:$0xff]
        %v4259 = vld [vmem:[#allocation5 + $0x348] sm:$0xff]
        %v4260 = vld [vmem:[#allocation5 + $0x350] sm:$0xff]
        %v4261 = vld [vmem:[#allocation5 + $0x358] sm:$0xff]
        %v4262 = vld [vmem:[#allocation5 + $0x360] sm:$0xff]
        %v4263 = vld [vmem:[#allocation5 + $0x368] sm:$0xff]
        %v4264 = vld [vmem:[#allocation5 + $0x370] sm:$0xff]
        %v4265 = vld [vmem:[#allocation5 + $0x378] sm:$0xff]
        %v4266 = vld [vmem:[#allocation5 + $0x380] sm:$0xff]
        %v4267 = vld [vmem:[#allocation5 + $0x388] sm:$0xff]
        %v4268 = vld [vmem:[#allocation5 + $0x390] sm:$0xff]
        %v4269 = vld [vmem:[#allocation5 + $0x398] sm:$0xff]
        %v4270 = vld [vmem:[#allocation5 + $0x3a0] sm:$0xff]
        %v4271 = vld [vmem:[#allocation5 + $0x3a8] sm:$0xff]
        %v4272 = vld [vmem:[#allocation5 + $0x3b0] sm:$0xff]
        %v4273 = vld [vmem:[#allocation5 + $0x3b8] sm:$0xff]
        %v4274 = vld [vmem:[#allocation5 + $0x3c0] sm:$0xff]
        %v4275 = vld [vmem:[#allocation5 + $0x3c8] sm:$0xff]
        %v4276 = vld [vmem:[#allocation5 + $0x3d0] sm:$0xff]
        %v4277 = vld [vmem:[#allocation5 + $0x3d8] sm:$0xff]
        %v4278 = vld [vmem:[#allocation5 + $0x3e0] sm:$0xff]
        %v4279 = vld [vmem:[#allocation5 + $0x3e8] sm:$0xff]
        %v4280 = vld [vmem:[#allocation5 + $0x3f0] sm:$0xff]
        %v4281 = vld [vmem:[#allocation5 + $0x3f8] sm:$0xff]
        %4282 = vmatpush.msra.mxu0 %v4184
        %4283 = vmatpush.msra.mxu0 %v4182
        %4284 = vmatpush.msra.mxu0 %v4180
        %4285 = vmatpush.msra.mxu0 %v4178
        %4286 = vmatpush.msra.mxu0 %v4176
        %4287 = vmatpush.msra.mxu0 %v4174
        %4288 = vmatpush.msra.mxu0 %v4172
        %4289 = vmatpush.msra.mxu0 %v4170
        %4290 = vmatpush.msra.mxu0 %v4168
        %4291 = vmatpush.msra.mxu0 %v4166
        %4292 = vmatpush.msra.mxu0 %v4164
        %4293 = vmatpush.msra.mxu0 %v4162
        %4294 = vmatpush.msra.mxu0 %v4160
        %4295 = vmatpush.msra.mxu0 %v4158
        %4296 = vmatpush.msra.mxu0 %v4156
        %4297 = vmatpush.msra.mxu0 %v4154
        %4298 = vmatmul.f32.gmra.mxu0 %v4092
        %v4299 = vpop.f32.mrf.mxu0
        %v4300 = vadd.f32 0.0, %v4299
        %4301 = vdwg.mxu0
        %4302 = vmatpush.msra.mxu0 %v4216
        %4303 = vmatpush.msra.mxu0 %v4214
        %4304 = vmatpush.msra.mxu0 %v4212
        %4305 = vmatpush.msra.mxu0 %v4210
        %4306 = vmatpush.msra.mxu0 %v4208
        %4307 = vmatpush.msra.mxu0 %v4206
        %4308 = vmatpush.msra.mxu0 %v4204
        %4309 = vmatpush.msra.mxu0 %v4202
        %4310 = vmatpush.msra.mxu0 %v4200
        %4311 = vmatpush.msra.mxu0 %v4198
        %4312 = vmatpush.msra.mxu0 %v4196
        %4313 = vmatpush.msra.mxu0 %v4194
        %4314 = vmatpush.msra.mxu0 %v4192
        %4315 = vmatpush.msra.mxu0 %v4190
        %4316 = vmatpush.msra.mxu0 %v4188
        %4317 = vmatpush.msra.mxu0 %v4186
        %4318 = vmatmul.f32.gmra.mxu0 %v4112
        %v4319 = vpop.f32.mrf.mxu0
        %v4320 = vadd.f32 %v4300, %v4319
        %4321 = vdwg.mxu0
        %4322 = vmatpush.msra.mxu0 %v4248
        %4323 = vmatpush.msra.mxu0 %v4246
        %4324 = vmatpush.msra.mxu0 %v4244
        %4325 = vmatpush.msra.mxu0 %v4242
        %4326 = vmatpush.msra.mxu0 %v4240
        %4327 = vmatpush.msra.mxu0 %v4238
        %4328 = vmatpush.msra.mxu0 %v4236
        %4329 = vmatpush.msra.mxu0 %v4234
        %4330 = vmatpush.msra.mxu0 %v4232
        %4331 = vmatpush.msra.mxu0 %v4230
        %4332 = vmatpush.msra.mxu0 %v4228
        %4333 = vmatpush.msra.mxu0 %v4226
        %4334 = vmatpush.msra.mxu0 %v4224
        %4335 = vmatpush.msra.mxu0 %v4222
        %4336 = vmatpush.msra.mxu0 %v4220
        %4337 = vmatpush.msra.mxu0 %v4218
        %4338 = vmatmul.f32.gmra.mxu0 %v4132
        %v4339 = vpop.f32.mrf.mxu0
        %v4340 = vadd.f32 %v4320, %v4339
        %4341 = vdwg.mxu0
        %4342 = vmatpush.msra.mxu0 %v4280
        %4343 = vmatpush.msra.mxu0 %v4278
        %4344 = vmatpush.msra.mxu0 %v4276
        %4345 = vmatpush.msra.mxu0 %v4274
        %4346 = vmatpush.msra.mxu0 %v4272
        %4347 = vmatpush.msra.mxu0 %v4270
        %4348 = vmatpush.msra.mxu0 %v4268
        %4349 = vmatpush.msra.mxu0 %v4266
        %4350 = vmatpush.msra.mxu0 %v4264
        %4351 = vmatpush.msra.mxu0 %v4262
        %4352 = vmatpush.msra.mxu0 %v4260
        %4353 = vmatpush.msra.mxu0 %v4258
        %4354 = vmatpush.msra.mxu0 %v4256
        %4355 = vmatpush.msra.mxu0 %v4254
        %4356 = vmatpush.msra.mxu0 %v4252
        %4357 = vmatpush.msra.mxu0 %v4250
        %4358 = vmatmul.f32.gmra.mxu0 %v4152
        %v4359 = vpop.f32.mrf.mxu0
        %v4360 = vadd.f32 %v4340, %v4359
        %4361 = vdwg.mxu0
        %4362 = vmatpush.msra.mxu0 %v4185
        %4363 = vmatpush.msra.mxu0 %v4183
        %4364 = vmatpush.msra.mxu0 %v4181
        %4365 = vmatpush.msra.mxu0 %v4179
        %4366 = vmatpush.msra.mxu0 %v4177
        %4367 = vmatpush.msra.mxu0 %v4175
        %4368 = vmatpush.msra.mxu0 %v4173
        %4369 = vmatpush.msra.mxu0 %v4171
        %4370 = vmatpush.msra.mxu0 %v4169
        %4371 = vmatpush.msra.mxu0 %v4167
        %4372 = vmatpush.msra.mxu0 %v4165
        %4373 = vmatpush.msra.mxu0 %v4163
        %4374 = vmatpush.msra.mxu0 %v4161
        %4375 = vmatpush.msra.mxu0 %v4159
        %4376 = vmatpush.msra.mxu0 %v4157
        %4377 = vmatpush.msra.mxu0 %v4155
        %4378 = vmatmul.f32.gmra.mxu0 %v4092
        %v4379 = vpop.f32.mrf.mxu0
        %v4380 = vadd.f32 0.0, %v4379
        %4381 = vdwg.mxu0
        %4382 = vmatpush.msra.mxu0 %v4217
        %4383 = vmatpush.msra.mxu0 %v4215
        %4384 = vmatpush.msra.mxu0 %v4213
        %4385 = vmatpush.msra.mxu0 %v4211
        %4386 = vmatpush.msra.mxu0 %v4209
        %4387 = vmatpush.msra.mxu0 %v4207
        %4388 = vmatpush.msra.mxu0 %v4205
        %4389 = vmatpush.msra.mxu0 %v4203
        %4390 = vmatpush.msra.mxu0 %v4201
        %4391 = vmatpush.msra.mxu0 %v4199
        %4392 = vmatpush.msra.mxu0 %v4197
        %4393 = vmatpush.msra.mxu0 %v4195
        %4394 = vmatpush.msra.mxu0 %v4193
        %4395 = vmatpush.msra.mxu0 %v4191
        %4396 = vmatpush.msra.mxu0 %v4189
        %4397 = vmatpush.msra.mxu0 %v4187
        %4398 = vmatmul.f32.gmra.mxu0 %v4112
        %v4399 = vpop.f32.mrf.mxu0
        %v4400 = vadd.f32 %v4380, %v4399
        %4401 = vdwg.mxu0
        %4402 = vmatpush.msra.mxu0 %v4249
        %4403 = vmatpush.msra.mxu0 %v4247
        %4404 = vmatpush.msra.mxu0 %v4245
        %4405 = vmatpush.msra.mxu0 %v4243
        %4406 = vmatpush.msra.mxu0 %v4241
        %4407 = vmatpush.msra.mxu0 %v4239
        %4408 = vmatpush.msra.mxu0 %v4237
        %4409 = vmatpush.msra.mxu0 %v4235
        %4410 = vmatpush.msra.mxu0 %v4233
        %4411 = vmatpush.msra.mxu0 %v4231
        %4412 = vmatpush.msra.mxu0 %v4229
        %4413 = vmatpush.msra.mxu0 %v4227
        %4414 = vmatpush.msra.mxu0 %v4225
        %4415 = vmatpush.msra.mxu0 %v4223
        %4416 = vmatpush.msra.mxu0 %v4221
        %4417 = vmatpush.msra.mxu0 %v4219
        %4418 = vmatmul.f32.gmra.mxu0 %v4132
        %v4419 = vpop.f32.mrf.mxu0
        %v4420 = vadd.f32 %v4400, %v4419
        %4421 = vdwg.mxu0
        %4422 = vmatpush.msra.mxu0 %v4281
        %4423 = vmatpush.msra.mxu0 %v4279
        %4424 = vmatpush.msra.mxu0 %v4277
        %4425 = vmatpush.msra.mxu0 %v4275
        %4426 = vmatpush.msra.mxu0 %v4273
        %4427 = vmatpush.msra.mxu0 %v4271
        %4428 = vmatpush.msra.mxu0 %v4269
        %4429 = vmatpush.msra.mxu0 %v4267
        %4430 = vmatpush.msra.mxu0 %v4265
        %4431 = vmatpush.msra.mxu0 %v4263
        %4432 = vmatpush.msra.mxu0 %v4261
        %4433 = vmatpush.msra.mxu0 %v4259
        %4434 = vmatpush.msra.mxu0 %v4257
        %4435 = vmatpush.msra.mxu0 %v4255
        %4436 = vmatpush.msra.mxu0 %v4253
        %4437 = vmatpush.msra.mxu0 %v4251
        %4438 = vmatmul.f32.gmra.mxu0 %v4152
        %v4439 = vpop.f32.mrf.mxu0
        %v4440 = vadd.f32 %v4420, %v4439
        %4441 = vdwg.mxu0
        %v4442 = vld [vmem:[%s18] sm:$0x3]
        %v4444 = vperm.slane %v4442, 0
        %v4445 = vperm.slane %v4442, 1
        %v4448 = vmul.f32 %v4360, %v4444
        %v4449 = vmul.f32 %v4440, %v4445
        %v4450 = vld [vmem:[%s19] sm:$0x3]
        %v4452 = vperm.slane %v4450, 0
        %v4453 = vperm.slane %v4450, 1
        %v4456 = vadd.f32 %v4448, %v4452
        %v4457 = vadd.f32 %v4449, %v4453
        %v4458 = vmax.f32 %v4456, 0.0
        %v4459 = vmax.f32 %v4457, 0.0
        %v4460 = vld [vmem:[%s20] sm:$0xff]
        %v4461 = vld [vmem:[%s20 + $0x8] sm:$0xff]
        %v4462 = vld [vmem:[%s20 + $0x10] sm:$0xff]
        %v4463 = vld [vmem:[%s20 + $0x18] sm:$0xff]
        %v4464 = vld [vmem:[%s20 + $0x20] sm:$0xff]
        %v4465 = vld [vmem:[%s20 + $0x28] sm:$0xff]
        %v4466 = vld [vmem:[%s20 + $0x30] sm:$0xff]
        %v4467 = vld [vmem:[%s20 + $0x38] sm:$0xff]
        %v4468 = vld [vmem:[%s20 + $0x40] sm:$0xff]
        %v4469 = vld [vmem:[%s20 + $0x48] sm:$0xff]
        %v4470 = vld [vmem:[%s20 + $0x50] sm:$0xff]
        %v4471 = vld [vmem:[%s20 + $0x58] sm:$0xff]
        %v4472 = vld [vmem:[%s20 + $0x60] sm:$0xff]
        %v4473 = vld [vmem:[%s20 + $0x68] sm:$0xff]
        %v4474 = vld [vmem:[%s20 + $0x70] sm:$0xff]
        %v4475 = vld [vmem:[%s20 + $0x78] sm:$0xff]
        %v4476 = vld [vmem:[%s20 + $0x80] sm:$0xff]
        %v4477 = vld [vmem:[%s20 + $0x88] sm:$0xff]
        %v4478 = vld [vmem:[%s20 + $0x90] sm:$0xff]
        %v4479 = vld [vmem:[%s20 + $0x98] sm:$0xff]
        %v4480 = vld [vmem:[%s20 + $0xa0] sm:$0xff]
        %v4481 = vld [vmem:[%s20 + $0xa8] sm:$0xff]
        %v4482 = vld [vmem:[%s20 + $0xb0] sm:$0xff]
        %v4483 = vld [vmem:[%s20 + $0xb8] sm:$0xff]
        %v4484 = vld [vmem:[%s20 + $0xc0] sm:$0xff]
        %v4485 = vld [vmem:[%s20 + $0xc8] sm:$0xff]
        %v4486 = vld [vmem:[%s20 + $0xd0] sm:$0xff]
        %v4487 = vld [vmem:[%s20 + $0xd8] sm:$0xff]
        %v4488 = vld [vmem:[%s20 + $0xe0] sm:$0xff]
        %v4489 = vld [vmem:[%s20 + $0xe8] sm:$0xff]
        %v4490 = vld [vmem:[%s20 + $0xf0] sm:$0xff]
        %v4491 = vld [vmem:[%s20 + $0xf8] sm:$0xff]
        %v4492 = vld [vmem:[#allocation2] sm:$0x1]
        %4493 = vmatpush.msra.mxu0 %v4475
        %4494 = vmatpush.msra.mxu0 %v4474
        %4495 = vmatpush.msra.mxu0 %v4473
        %4496 = vmatpush.msra.mxu0 %v4472
        %4497 = vmatpush.msra.mxu0 %v4471
        %4498 = vmatpush.msra.mxu0 %v4470
        %4499 = vmatpush.msra.mxu0 %v4469
        %4500 = vmatpush.msra.mxu0 %v4468
        %4501 = vmatpush.msra.mxu0 %v4467
        %4502 = vmatpush.msra.mxu0 %v4466
        %4503 = vmatpush.msra.mxu0 %v4465
        %4504 = vmatpush.msra.mxu0 %v4464
        %4505 = vmatpush.msra.mxu0 %v4463
        %4506 = vmatpush.msra.mxu0 %v4462
        %4507 = vmatpush.msra.mxu0 %v4461
        %4508 = vmatpush.msra.mxu0 %v4460
        %4509 = vmatmul.f32.gmra.mxu0 %v4458
        %v4510 = vpop.f32.mrf.mxu0
        %v4511 = vadd.f32 %v4492, %v4510
        %4512 = vdwg.mxu0
        %4513 = vmatpush.msra.mxu0 %v4491
        %4514 = vmatpush.msra.mxu0 %v4490
        %4515 = vmatpush.msra.mxu0 %v4489
        %4516 = vmatpush.msra.mxu0 %v4488
        %4517 = vmatpush.msra.mxu0 %v4487
        %4518 = vmatpush.msra.mxu0 %v4486
        %4519 = vmatpush.msra.mxu0 %v4485
        %4520 = vmatpush.msra.mxu0 %v4484
        %4521 = vmatpush.msra.mxu0 %v4483
        %4522 = vmatpush.msra.mxu0 %v4482
        %4523 = vmatpush.msra.mxu0 %v4481
        %4524 = vmatpush.msra.mxu0 %v4480
        %4525 = vmatpush.msra.mxu0 %v4479
        %4526 = vmatpush.msra.mxu0 %v4478
        %4527 = vmatpush.msra.mxu0 %v4477
        %4528 = vmatpush.msra.mxu0 %v4476
        %4529 = vmatmul.f32.gmra.mxu0 %v4459
        %v4530 = vpop.f32.mrf.mxu0
        %v4531 = vadd.f32 %v4511, %v4530
        %4532 = vdwg.mxu0
        %vm4533 = vcmask 0
        %4534 = vst.msk [vmem:[%s715] sm:$0x1] %vm4533, %v4531
        %p4535 = scmp.lt.s32.totalorder %s37, 1
        %s4536 = scalar_select %p4535, %s37, 1
        %s4537 = scalar_lea.vmem %s22, %s4536
        // Predicated region
        $region117: #{cnet_v5_2_forward.1} parent=107 // pred_check
          %p4538 = pneg %p522
        $region118: #{cnet_v5_2_forward.1} parent=107 // pred_check_branch
          %4540 = sbr.rel (%p4538) target = $region120
        $region119: #{cnet_v5_2_forward.1} parent=107 // pred_region
          _
        $region120: #{cnet_v5_2_forward.1} parent=107 // pred_fallthru
          _
      $region108: #{cnet_v5_2_forward.1} parent=5 // pred_fallthru
        _
      %p4541 = scmp.le.s32.totalorder 2, %s32
      // Predicated region
      $region121: #{cnet_v5_2_forward.1} parent=5 // pred_check
        %p4542 = pneg %p4541
      $region122: #{cnet_v5_2_forward.1} parent=5 // pred_check_branch
        %4544 = sbr.rel (%p4542) target = $region124
      $region123: #{cnet_v5_2_forward.1} parent=5 // pred_region
        %s4545 = ssub.s32 %s32, 2
        // Predicated region
        $region125: #{cnet_v5_2_forward.1} parent=123 // pred_check
          %p4546 = pneg %p528
        $region126: #{cnet_v5_2_forward.1} parent=123 // pred_check_branch
          %4548 = sbr.rel (%p4546) target = $region128
        $region127: #{cnet_v5_2_forward.1} parent=123 // pred_region
          %p4549 = scmp.lt.s32.totalorder %s38, 1
          %s4550 = scalar_select %p4549, %s38, 1
          %s4551 = scalar_lea.vmem %s22, %s4550
        $region128: #{cnet_v5_2_forward.1} parent=123 // pred_fallthru
          _
      $region124: #{cnet_v5_2_forward.1} parent=5 // pred_fallthru
        _
    $region6: #{cnet_v5_2_forward.1} parent=1 // loop_footer
      %s36 = sadd.s32 1, %s32
    $region7: #{cnet_v5_2_forward.1} parent=1 // loop_footer_branch
      %31 = sbr.rel target = $region3
    $region8: #{cnet_v5_2_forward.1} parent=1 // loop_exit
      _
    %4552 = vsyncpa [#allocation4], 1
    %s4553 = scalar_lea.sflag [#allocation4], 1
    %4554 = vsyncpa %s4553, 1
    %4555 = vsyncpa [#allocation6], 1

</llo_original>
